<compile_context>
chip_gen: v7x
topology: tpu7x:2x2x1
jax: 0.10.0
libtpu: 0.0.40
codegen_flags: <defaults>
</compile_context>

<pallas_src>
import functools

import jax
import jax.numpy as jnp
from jax.experimental import pallas as pl
from jax.experimental.pallas import tpu as pltpu


# ----------------------------- Pallas kernels ------------------------------

def _conv_relu_pool_kernel(p_ref, w_ref, b_ref, o_ref):
    """Fused conv (im2col matmul) + bias + ReLU + 2x2 max-pool.

    p_ref : (4, TM, K) bf16 — the 4 pool-offset patch matrices for this row tile
            (TM = tile of pooled spatial positions, K = cin*kh*kw).
    w_ref : (K, C) bf16,  b_ref : (1, C) f32,  o_ref : (TM, C) bf16.
    """
    tm = o_ref.shape[0]
    k = p_ref.shape[2]
    # Sublane-major collapse (free: TM % 8 == 0) -> ONE MXU matmul for all 4 offsets.
    p = p_ref[...].reshape(4 * tm, k)
    acc = jnp.dot(p, w_ref[...], preferred_element_type=jnp.float32)      # (4*TM, C)
    # 2x2 max-pool = max over the 4 pool-offset slices (sublane-aligned).
    m01 = jnp.maximum(acc[0 * tm:1 * tm], acc[1 * tm:2 * tm])
    m23 = jnp.maximum(acc[2 * tm:3 * tm], acc[3 * tm:4 * tm])
    pooled = jnp.maximum(m01, m23)
    # max_ij(relu(a_ij + b)) == relu(max_ij(a_ij) + b)   (relu and +b are monotone)
    o_ref[...] = jnp.maximum(pooled + b_ref[...], 0.0).astype(o_ref.dtype)


def _mlp_head_kernel(x_ref, w1_ref, b1_ref, w2_ref, b2_ref, o_ref, *, inv_temp):
    """Fused fc1 -> ReLU -> fc2 -> log_softmax(logits * inv_temp)."""
    h = jnp.dot(x_ref[...], w1_ref[...], preferred_element_type=jnp.float32)
    h = jnp.maximum(h + b1_ref[...], 0.0)
    z = jnp.dot(h.astype(w2_ref.dtype), w2_ref[...], preferred_element_type=jnp.float32)
    z = (z + b2_ref[...]) * inv_temp
    m = jnp.max(z, axis=-1, keepdims=True)
    s = z - m
    lse = jnp.log(jnp.sum(jnp.exp(s), axis=-1, keepdims=True))
    o_ref[...] = s - lse


# ------------------------- pallas_call wrappers -----------------------------

_VMEM_LIMIT = 32 * 1024 * 1024   # explicit scoped-VMEM budget (v5e default is 16 MiB)


def _round_up(x, m):
    return ((x + m - 1) // m) * m


def _row_tile(m, target):
    """Row-tile size: multiple of 8 sublanes, capped so the grid has >=2 programs
    whenever m allows (v7x has 2 TensorCores; a "parallel" axis only shards with
    >=2 steps). Ragged last blocks are handled by cdiv + masked writeback."""
    return max(8, min(_round_up(target, 8), _round_up(pl.cdiv(m, 2), 8)))


def conv_relu_pool(patches, w, b, *, tm_target=1024):
    """patches: (4, M, K) bf16 stacked pool-offset im2col matrices."""
    if patches.dtype != jnp.bfloat16:
        patches = patches.astype(jnp.bfloat16)
    _, m, k = patches.shape
    c = w.shape[1]
    tm = _row_tile(m, tm_target)
    cost = pl.CostEstimate(
        flops=int(2 * 4 * m * k * c),
        transcendentals=0,
        bytes_accessed=int(4 * m * k * 2 + k * c * 2 + c * 4 + m * c * 2),
    )
    return pl.pallas_call(
        _conv_relu_pool_kernel,
        grid=(pl.cdiv(m, tm),),
        in_specs=[pl.BlockSpec((4, tm, k), lambda i: (0, i, 0)),
                  pl.BlockSpec((k, c), lambda i: (0, 0)),
                  pl.BlockSpec((1, c), lambda i: (0, 0))],
        out_specs=pl.BlockSpec((tm, c), lambda i: (i, 0)),
        out_shape=jax.ShapeDtypeStruct((m, c), jnp.bfloat16),
        compiler_params=pltpu.CompilerParams(
            dimension_semantics=("parallel",),
            vmem_limit_bytes=_VMEM_LIMIT),
        cost_estimate=cost,
    )(patches, w, b)


def mlp_head(x, w1, b1, w2, b2, temperature, *, tm_target=256):
    if x.dtype != jnp.bfloat16:
        x = x.astype(jnp.bfloat16)
    m, k = x.shape
    hdim = w1.shape[1]
    c = w2.shape[1]
    tm = _row_tile(m, tm_target)
    kern = functools.partial(_mlp_head_kernel, inv_temp=1.0 / float(temperature))
    cost = pl.CostEstimate(
        flops=int(2 * m * k * hdim + 2 * m * hdim * c),
        transcendentals=int(m * (c + 1)),
        bytes_accessed=int(m * k * 2 + k * hdim * 2 + hdim * 4
                           + hdim * c * 2 + c * 4 + m * c * 4),
    )
    return pl.pallas_call(
        kern,
        grid=(pl.cdiv(m, tm),),
        in_specs=[pl.BlockSpec((tm, k), lambda i: (i, 0)),
                  pl.BlockSpec((k, hdim), lambda i: (0, 0)),
                  pl.BlockSpec((1, hdim), lambda i: (0, 0)),
                  pl.BlockSpec((hdim, c), lambda i: (0, 0)),
                  pl.BlockSpec((1, c), lambda i: (0, 0))],
        out_specs=pl.BlockSpec((tm, c), lambda i: (i, 0)),
        out_shape=jax.ShapeDtypeStruct((m, c), jnp.float32),
        compiler_params=pltpu.CompilerParams(
            dimension_semantics=("parallel",),
            vmem_limit_bytes=_VMEM_LIMIT),
        cost_estimate=cost,
    )(x, w1, b1, w2, b2)


# ------------------------------- JAX glue ----------------------------------

def im2col_pooled(x_nhwc, kh, kw, pad):
    """im2col split by 2x2-pool-window offset, stacked into one array.

    Returns (patches, (n, hp, wp)) where patches has shape (4, N*hp*wp, cin*kh*kw)
    and patches[di*2+dj][n*hp*wp + oh*wp + ow] is the im2col row feeding conv output
    position (2*oh+di, 2*ow+dj).  Feature order is (cin, kh, kw), matching
    torch_conv_w.reshape(cout, -1).T.  dtype follows x (bf16 end-to-end).
    """
    x = x_nhwc
    if pad:
        x = jnp.pad(x, ((0, 0), (pad, pad), (pad, pad), (0, 0)))
    n, h, w, c = x.shape
    ho, wo = h - kh + 1, w - kw + 1
    hp, wp = ho // 2, wo // 2
    k = c * kh * kw
    cols = []
    for ci in range(c):
        for i in range(kh):
            for j in range(kw):
                cols.append(x[:, i:i + ho, j:j + wo, ci])
    patches = jnp.stack(cols, axis=-1)                    # (n, ho, wo, c*kh*kw)
    offs = []
    for di in range(2):
        for dj in range(2):
            p = patches[:, di::2, dj::2, :][:, :hp, :wp, :]
            offs.append(p.reshape(n * hp * wp, k))
    return jnp.stack(offs, axis=0), (n, hp, wp)           # (4, M, K)


def init_params(key):
    # Deterministic synthetic parameters, PyTorch-shaped (Conv2d: (Cout,Cin,kh,kw),
    # Linear: (out,in)), PyTorch-style uniform(-1/sqrt(fan_in), 1/sqrt(fan_in)).
    keys = jax.random.split(key, 8)

    def u(k, shape, fan_in):
        bound = 1.0 / jnp.sqrt(jnp.float32(fan_in))
        return jax.random.uniform(k, shape, jnp.float32, -bound, bound)

    return {
        "conv1_w": u(keys[0], (28, 1, 5, 5), 1 * 5 * 5),
        "conv1_b": u(keys[1], (28,), 1 * 5 * 5),
        "conv2_w": u(keys[2], (42, 28, 3, 3), 28 * 3 * 3),
        "conv2_b": u(keys[3], (42,), 28 * 3 * 3),
        "fc1_w": u(keys[4], (512, 42 * 6 * 6), 42 * 6 * 6),
        "fc1_b": u(keys[5], (512,), 42 * 6 * 6),
        "fc2_w": u(keys[6], (10, 512), 512),
        "fc2_b": u(keys[7], (10,), 512),
    }


def prepare_params(params):
    """One-time weight relayout (outside the per-step forward): matmul-ready (K, N)
    bf16 weights and (1, N) f32 biases.  fc1_w's input-feature axis is permuted from
    torch (c,h,w) flatten order to NHWC (h,w,c) order so the flatten in the forward
    is a plain reshape (no runtime transpose)."""
    fc1_w = params["fc1_w"].reshape(512, 42, 6, 6)
    fc1_w = jnp.transpose(fc1_w, (0, 2, 3, 1)).reshape(512, 42 * 6 * 6)
    return {
        "conv1_w": params["conv1_w"].reshape(28, -1).T.astype(jnp.bfloat16),   # (25, 28)
        "conv1_b": params["conv1_b"].reshape(1, -1).astype(jnp.float32),
        "conv2_w": params["conv2_w"].reshape(42, -1).T.astype(jnp.bfloat16),   # (252, 42)
        "conv2_b": params["conv2_b"].reshape(1, -1).astype(jnp.float32),
        "fc1_w": fc1_w.T.astype(jnp.bfloat16),                                 # (1512, 512), NHWC rows
        "fc1_b": params["fc1_b"].reshape(1, -1).astype(jnp.float32),
        "fc2_w": params["fc2_w"].T.astype(jnp.bfloat16),                       # (512, 10)
        "fc2_b": params["fc2_b"].reshape(1, -1).astype(jnp.float32),
    }


def net_distillation_forward(prep, x_nchw):
    temperature = 20.0
    n = x_nchw.shape[0]
    # NCHW -> NHWC and cast to bf16 ONCE, before im2col (bf16 end-to-end from here).
    x = jnp.transpose(x_nchw, (0, 2, 3, 1)).astype(jnp.bfloat16)

    # conv1(1->28, 5x5) + ReLU + 2x2 maxpool  (single fused Pallas kernel)
    p1, (_, hp1, wp1) = im2col_pooled(x, 5, 5, 0)                  # (4, N*12*12, 25) bf16
    a1 = conv_relu_pool(p1, prep["conv1_w"], prep["conv1_b"])      # (N*12*12, 28) bf16
    a1 = a1.reshape(n, hp1, wp1, 28)                               # (N, 12, 12, 28) NHWC

    # conv2(28->42, 3x3, pad=1) + ReLU + 2x2 maxpool  (single fused Pallas kernel)
    p2, (_, hp2, wp2) = im2col_pooled(a1, 3, 3, 1)                 # (4, N*6*6, 252) bf16
    a2 = conv_relu_pool(p2, prep["conv2_w"], prep["conv2_b"])      # (N*6*6, 42) bf16
    a2 = a2.reshape(n, hp2, wp2, 42)                               # (N, 6, 6, 42) NHWC

    # flatten: fc1_w was pre-permuted to NHWC feature order, so this is a plain reshape
    flat = a2.reshape(n, hp2 * wp2 * 42)

    # fc1 -> ReLU -> fc2 -> log_softmax(logits / T)  (single fused Pallas kernel)
    return mlp_head(flat, prep["fc1_w"], prep["fc1_b"],
                    prep["fc2_w"], prep["fc2_b"], temperature)     # (N, 10) f32


# ---------------------- pure-JAX f32 reference (torch semantics) -----------

def reference_forward(params, x_nchw):
    x = x_nchw.astype(jnp.float32)
    y = jax.lax.conv_general_dilated(x, params["conv1_w"], (1, 1), "VALID",
                                     dimension_numbers=("NCHW", "OIHW", "NCHW"))
    y = jax.nn.relu(y + params["conv1_b"][None, :, None, None])
    y = jax.lax.reduce_window(y, -jnp.inf, jax.lax.max, (1, 1, 2, 2), (1, 1, 2, 2), "VALID")
    y = jax.lax.conv_general_dilated(y, params["conv2_w"], (1, 1), ((1, 1), (1, 1)),
                                     dimension_numbers=("NCHW", "OIHW", "NCHW"))
    y = jax.nn.relu(y + params["conv2_b"][None, :, None, None])
    y = jax.lax.reduce_window(y, -jnp.inf, jax.lax.max, (1, 1, 2, 2), (1, 1, 2, 2), "VALID")
    y = y.reshape(y.shape[0], -1)                                   # NCHW flatten (42*6*6)
    y = jax.nn.relu(y @ params["fc1_w"].T + params["fc1_b"])
    z = y @ params["fc2_w"].T + params["fc2_b"]
    return jax.nn.log_softmax(z / 20.0, axis=-1)


if __name__ == "__main__":
    key = jax.random.PRNGKey(0)
    pkey, xkey = jax.random.split(key)
    params = init_params(pkey)
    prep = prepare_params(params)   # one-time transpose/permute/cast, outside the forward
    # MNIST-like NCHW input implied by the module (1 input channel, 28x28 -> 42*6*6 flatten)
    x = jax.random.normal(xkey, (2, 1, 28, 28), jnp.float32)

    fwd = jax.jit(net_distillation_forward)
    out = fwd(prep, x)
    jax.block_until_ready(out)

    assert out.shape == (2, 10)
    assert bool(jnp.all(jnp.isfinite(out)))
    # log_softmax rows must exponentiate-sum to 1
    assert bool(jnp.allclose(jnp.sum(jnp.exp(out), axis=-1), 1.0, atol=1e-5))
    # bf16 end-to-end vs f32 torch-semantics reference (distillation-grade tolerance)
    ref = reference_forward(params, x)
    assert bool(jnp.max(jnp.abs(out - ref)) < 5e-2)
    print("KERNEL_OK")
</pallas_src>

<mosaic_0001>
module attributes {stable_mosaic.version = 11 : i64} {
  func.func @_conv_relu_pool_kernel(%arg0: i32, %arg1: memref<4x144x25xbf16, #tpu.memory_space<vmem>>, %arg2: memref<25x28xbf16, #tpu.memory_space<vmem>>, %arg3: memref<1x28xf32, #tpu.memory_space<vmem>>, %arg4: memref<144x28xbf16, #tpu.memory_space<vmem>>) attributes {dimension_semantics = [#tpu.dimension_semantics<parallel>], iteration_bounds = array<i64: 2>, scalar_prefetch = 0 : i64, scratch_operands = 0 : i64, tpu.core_type = #tpu.core_type<tc>, window_params = [{transform_indices = @transform_0, window_bounds = array<i64: 4, 144, 25>}, {pipeline_mode = #tpu.pipeline_mode<synchronous>, transform_indices = @transform_1, window_bounds = array<i64: 25, 28>}, {pipeline_mode = #tpu.pipeline_mode<synchronous>, transform_indices = @transform_2, window_bounds = array<i64: 1, 28>}, {transform_indices = @transform_3, window_bounds = array<i64: 144, 28>}]} {
    %c0 = arith.constant 0 : index
    %c0_0 = arith.constant 0 : index
    %c0_1 = arith.constant 0 : index
    %0 = vector.load %arg1[%c0, %c0_0, %c0_1] : memref<4x144x25xbf16, #tpu.memory_space<vmem>>, vector<4x144x25xbf16>
    %1 = vector.shape_cast %0 : vector<4x144x25xbf16> to vector<576x25xbf16>
    %c0_2 = arith.constant 0 : index
    %c0_3 = arith.constant 0 : index
    %2 = vector.load %arg2[%c0_2, %c0_3] : memref<25x28xbf16, #tpu.memory_space<vmem>>, vector<25x28xbf16>
    %cst = arith.constant dense<0.000000e+00> : vector<576x28xf32>
    %3 = tpu.matmul %1, %2, %cst {dimension_numbers = #tpu.dot_dimension_numbers<[1], [0], [0], [1], [0, 0, 1, 1], [], []>} : vector<576x25xbf16>, vector<25x28xbf16>, vector<576x28xf32> -> vector<576x28xf32>
    %4 = vector.extract_strided_slice %3 {offsets = [0, 0], sizes = [144, 28], strides = [1, 1]} : vector<576x28xf32> to vector<144x28xf32>
    %5 = vector.extract_strided_slice %3 {offsets = [144, 0], sizes = [144, 28], strides = [1, 1]} : vector<576x28xf32> to vector<144x28xf32>
    %6 = arith.maximumf %4, %5 : vector<144x28xf32>
    %7 = vector.extract_strided_slice %3 {offsets = [288, 0], sizes = [144, 28], strides = [1, 1]} : vector<576x28xf32> to vector<144x28xf32>
    %8 = vector.extract_strided_slice %3 {offsets = [432, 0], sizes = [144, 28], strides = [1, 1]} : vector<576x28xf32> to vector<144x28xf32>
    %9 = arith.maximumf %7, %8 : vector<144x28xf32>
    %10 = arith.maximumf %6, %9 : vector<144x28xf32>
    %c0_4 = arith.constant 0 : index
    %c0_5 = arith.constant 0 : index
    %11 = vector.load %arg3[%c0_4, %c0_5] : memref<1x28xf32, #tpu.memory_space<vmem>>, vector<1x28xf32>
    %12 = vector.broadcast %11 : vector<1x28xf32> to vector<144x28xf32>
    %13 = arith.addf %10, %12 : vector<144x28xf32>
    %cst_6 = arith.constant 0.000000e+00 : f32
    %14 = vector.broadcast %cst_6 : f32 to vector<144x28xf32>
    %15 = arith.maximumf %13, %14 : vector<144x28xf32>
    %16 = arith.truncf %15 : vector<144x28xf32> to vector<144x28xbf16>
    %c0_7 = arith.constant 0 : index
    %c0_8 = arith.constant 0 : index
    %17 = vector.load %arg4[%c0_7, %c0_8] : memref<144x28xbf16, #tpu.memory_space<vmem>>, vector<144x28xbf16>
    tpu.vector_store %arg4[%c0_7, %c0_8], %16 {strides = array<i32>} : memref<144x28xbf16, #tpu.memory_space<vmem>>, vector<144x28xbf16>,
    return
  }
  func.func @transform_0(%arg0: i32) -> (i32, i32, i32) {
    %c0_i32 = arith.constant 0 : i32
    %c0_i32_0 = arith.constant 0 : i32
    %c0_i32_1 = arith.constant 0 : i32
    return %c0_i32, %arg0, %c0_i32_0 : i32, i32, i32
  }
  func.func @transform_1(%arg0: i32) -> (i32, i32) {
    %c0_i32 = arith.constant 0 : i32
    %c0_i32_0 = arith.constant 0 : i32
    %c0_i32_1 = arith.constant 0 : i32
    return %c0_i32, %c0_i32_0 : i32, i32
  }
  func.func @transform_2(%arg0: i32) -> (i32, i32) {
    %c0_i32 = arith.constant 0 : i32
    %c0_i32_0 = arith.constant 0 : i32
    %c0_i32_1 = arith.constant 0 : i32
    return %c0_i32, %c0_i32_0 : i32, i32
  }
  func.func @transform_3(%arg0: i32) -> (i32, i32) {
    %c0_i32 = arith.constant 0 : i32
    %c0_i32_0 = arith.constant 0 : i32
    return %arg0, %c0_i32 : i32, i32
  }
}

module attributes {stable_mosaic.version = 11 : i64} {
  func.func @_conv_relu_pool_kernel(%arg0: i32, %arg1: memref<4x40x252xbf16, #tpu.memory_space<vmem>>, %arg2: memref<252x42xbf16, #tpu.memory_space<vmem>>, %arg3: memref<1x42xf32, #tpu.memory_space<vmem>>, %arg4: memref<40x42xbf16, #tpu.memory_space<vmem>>) attributes {dimension_semantics = [#tpu.dimension_semantics<parallel>], iteration_bounds = array<i64: 2>, scalar_prefetch = 0 : i64, scratch_operands = 0 : i64, tpu.core_type = #tpu.core_type<tc>, window_params = [{transform_indices = @transform_0, window_bounds = array<i64: 4, 40, 252>}, {pipeline_mode = #tpu.pipeline_mode<synchronous>, transform_indices = @transform_1, window_bounds = array<i64: 252, 42>}, {pipeline_mode = #tpu.pipeline_mode<synchronous>, transform_indices = @transform_2, window_bounds = array<i64: 1, 42>}, {transform_indices = @transform_3, window_bounds = array<i64: 40, 42>}]} {
    %c0 = arith.constant 0 : index
    %c0_0 = arith.constant 0 : index
    %c0_1 = arith.constant 0 : index
    %0 = vector.load %arg1[%c0, %c0_0, %c0_1] : memref<4x40x252xbf16, #tpu.memory_space<vmem>>, vector<4x40x252xbf16>
    %1 = vector.shape_cast %0 : vector<4x40x252xbf16> to vector<160x252xbf16>
    %c0_2 = arith.constant 0 : index
    %c0_3 = arith.constant 0 : index
    %2 = vector.load %arg2[%c0_2, %c0_3] : memref<252x42xbf16, #tpu.memory_space<vmem>>, vector<252x42xbf16>
    %cst = arith.constant dense<0.000000e+00> : vector<160x42xf32>
    %3 = tpu.matmul %1, %2, %cst {dimension_numbers = #tpu.dot_dimension_numbers<[1], [0], [0], [1], [0, 0, 1, 1], [], []>} : vector<160x252xbf16>, vector<252x42xbf16>, vector<160x42xf32> -> vector<160x42xf32>
    %4 = vector.extract_strided_slice %3 {offsets = [0, 0], sizes = [40, 42], strides = [1, 1]} : vector<160x42xf32> to vector<40x42xf32>
    %5 = vector.extract_strided_slice %3 {offsets = [40, 0], sizes = [40, 42], strides = [1, 1]} : vector<160x42xf32> to vector<40x42xf32>
    %6 = arith.maximumf %4, %5 : vector<40x42xf32>
    %7 = vector.extract_strided_slice %3 {offsets = [80, 0], sizes = [40, 42], strides = [1, 1]} : vector<160x42xf32> to vector<40x42xf32>
    %8 = vector.extract_strided_slice %3 {offsets = [120, 0], sizes = [40, 42], strides = [1, 1]} : vector<160x42xf32> to vector<40x42xf32>
    %9 = arith.maximumf %7, %8 : vector<40x42xf32>
    %10 = arith.maximumf %6, %9 : vector<40x42xf32>
    %c0_4 = arith.constant 0 : index
    %c0_5 = arith.constant 0 : index
    %11 = vector.load %arg3[%c0_4, %c0_5] : memref<1x42xf32, #tpu.memory_space<vmem>>, vector<1x42xf32>
    %12 = vector.broadcast %11 : vector<1x42xf32> to vector<40x42xf32>
    %13 = arith.addf %10, %12 : vector<40x42xf32>
    %cst_6 = arith.constant 0.000000e+00 : f32
    %14 = vector.broadcast %cst_6 : f32 to vector<40x42xf32>
    %15 = arith.maximumf %13, %14 : vector<40x42xf32>
    %16 = arith.truncf %15 : vector<40x42xf32> to vector<40x42xbf16>
    %c0_7 = arith.constant 0 : index
    %c0_8 = arith.constant 0 : index
    %17 = vector.load %arg4[%c0_7, %c0_8] : memref<40x42xbf16, #tpu.memory_space<vmem>>, vector<40x42xbf16>
    tpu.vector_store %arg4[%c0_7, %c0_8], %16 {strides = array<i32>} : memref<40x42xbf16, #tpu.memory_space<vmem>>, vector<40x42xbf16>,
    return
  }
  func.func @transform_0(%arg0: i32) -> (i32, i32, i32) {
    %c0_i32 = arith.constant 0 : i32
    %c0_i32_0 = arith.constant 0 : i32
    %c0_i32_1 = arith.constant 0 : i32
    return %c0_i32, %arg0, %c0_i32_0 : i32, i32, i32
  }
  func.func @transform_1(%arg0: i32) -> (i32, i32) {
    %c0_i32 = arith.constant 0 : i32
    %c0_i32_0 = arith.constant 0 : i32
    %c0_i32_1 = arith.constant 0 : i32
    return %c0_i32, %c0_i32_0 : i32, i32
  }
  func.func @transform_2(%arg0: i32) -> (i32, i32) {
    %c0_i32 = arith.constant 0 : i32
    %c0_i32_0 = arith.constant 0 : i32
    %c0_i32_1 = arith.constant 0 : i32
    return %c0_i32, %c0_i32_0 : i32, i32
  }
  func.func @transform_3(%arg0: i32) -> (i32, i32) {
    %c0_i32 = arith.constant 0 : i32
    %c0_i32_0 = arith.constant 0 : i32
    return %arg0, %c0_i32 : i32, i32
  }
}

module attributes {stable_mosaic.version = 11 : i64} {
  func.func @_mlp_head_kernel(%arg0: i32, %arg1: memref<8x1512xbf16, #tpu.memory_space<vmem>>, %arg2: memref<1512x512xbf16, #tpu.memory_space<vmem>>, %arg3: memref<1x512xf32, #tpu.memory_space<vmem>>, %arg4: memref<512x10xbf16, #tpu.memory_space<vmem>>, %arg5: memref<1x10xf32, #tpu.memory_space<vmem>>, %arg6: memref<8x10xf32, #tpu.memory_space<vmem>>) attributes {dimension_semantics = [#tpu.dimension_semantics<parallel>], iteration_bounds = array<i64: 1>, scalar_prefetch = 0 : i64, scratch_operands = 0 : i64, tpu.core_type = #tpu.core_type<tc>, window_params = [{transform_indices = @transform_0, window_bounds = array<i64: 8, 1512>}, {pipeline_mode = #tpu.pipeline_mode<synchronous>, transform_indices = @transform_1, window_bounds = array<i64: 1512, 512>}, {pipeline_mode = #tpu.pipeline_mode<synchronous>, transform_indices = @transform_2, window_bounds = array<i64: 1, 512>}, {pipeline_mode = #tpu.pipeline_mode<synchronous>, transform_indices = @transform_3, window_bounds = array<i64: 512, 10>}, {pipeline_mode = #tpu.pipeline_mode<synchronous>, transform_indices = @transform_4, window_bounds = array<i64: 1, 10>}, {transform_indices = @transform_5, window_bounds = array<i64: 8, 10>}]} {
    %c0 = arith.constant 0 : index
    %c0_0 = arith.constant 0 : index
    %0 = vector.load %arg1[%c0, %c0_0] : memref<8x1512xbf16, #tpu.memory_space<vmem>>, vector<8x1512xbf16>
    %c0_1 = arith.constant 0 : index
    %c0_2 = arith.constant 0 : index
    %1 = vector.load %arg2[%c0_1, %c0_2] : memref<1512x512xbf16, #tpu.memory_space<vmem>>, vector<1512x512xbf16>
    %cst = arith.constant dense<0.000000e+00> : vector<8x512xf32>
    %2 = tpu.matmul %0, %1, %cst {dimension_numbers = #tpu.dot_dimension_numbers<[1], [0], [0], [1], [0, 0, 1, 1], [], []>} : vector<8x1512xbf16>, vector<1512x512xbf16>, vector<8x512xf32> -> vector<8x512xf32>
    %c0_3 = arith.constant 0 : index
    %c0_4 = arith.constant 0 : index
    %3 = vector.load %arg3[%c0_3, %c0_4] : memref<1x512xf32, #tpu.memory_space<vmem>>, vector<1x512xf32>
    %4 = vector.broadcast %3 : vector<1x512xf32> to vector<8x512xf32>
    %5 = arith.addf %2, %4 : vector<8x512xf32>
    %cst_5 = arith.constant 0.000000e+00 : f32
    %6 = vector.broadcast %cst_5 : f32 to vector<8x512xf32>
    %7 = arith.maximumf %5, %6 : vector<8x512xf32>
    %8 = arith.truncf %7 : vector<8x512xf32> to vector<8x512xbf16>
    %c0_6 = arith.constant 0 : index
    %c0_7 = arith.constant 0 : index
    %9 = vector.load %arg4[%c0_6, %c0_7] : memref<512x10xbf16, #tpu.memory_space<vmem>>, vector<512x10xbf16>
    %cst_8 = arith.constant dense<0.000000e+00> : vector<8x10xf32>
    %10 = tpu.matmul %8, %9, %cst_8 {dimension_numbers = #tpu.dot_dimension_numbers<[1], [0], [0], [1], [0, 0, 1, 1], [], []>} : vector<8x512xbf16>, vector<512x10xbf16>, vector<8x10xf32> -> vector<8x10xf32>
    %c0_9 = arith.constant 0 : index
    %c0_10 = arith.constant 0 : index
    %11 = vector.load %arg5[%c0_9, %c0_10] : memref<1x10xf32, #tpu.memory_space<vmem>>, vector<1x10xf32>
    %12 = vector.broadcast %11 : vector<1x10xf32> to vector<8x10xf32>
    %13 = arith.addf %10, %12 : vector<8x10xf32>
    %cst_11 = arith.constant 5.000000e-02 : f32
    %14 = vector.broadcast %cst_11 : f32 to vector<8x10xf32>
    %15 = arith.mulf %13, %14 : vector<8x10xf32>
    %cst_12 = arith.constant dense<0xFF800000> : vector<8xf32>
    %16 = vector.multi_reduction <maximumf>, %15, %cst_12 [1] : vector<8x10xf32> to vector<8xf32>
    %17 = vector.shape_cast %16 : vector<8xf32> to vector<8x1xf32>
    %18 = vector.broadcast %17 : vector<8x1xf32> to vector<8x10xf32>
    %19 = arith.subf %15, %18 : vector<8x10xf32>
    %20 = math.exp %19 : vector<8x10xf32>
    %cst_13 = arith.constant dense<0.000000e+00> : vector<8xf32>
    %21 = vector.multi_reduction <add>, %20, %cst_13 [1] : vector<8x10xf32> to vector<8xf32>
    %22 = vector.shape_cast %21 : vector<8xf32> to vector<8x1xf32>
    %23 = math.log %22 : vector<8x1xf32>
    %24 = vector.broadcast %23 : vector<8x1xf32> to vector<8x10xf32>
    %25 = arith.subf %19, %24 : vector<8x10xf32>
    %c0_14 = arith.constant 0 : index
    %c0_15 = arith.constant 0 : index
    %26 = vector.load %arg6[%c0_14, %c0_15] : memref<8x10xf32, #tpu.memory_space<vmem>>, vector<8x10xf32>
    tpu.vector_store %arg6[%c0_14, %c0_15], %25 {strides = array<i32>} : memref<8x10xf32, #tpu.memory_space<vmem>>, vector<8x10xf32>,
    return
  }
  func.func @transform_0(%arg0: i32) -> (i32, i32) {
    %c0_i32 = arith.constant 0 : i32
    %c0_i32_0 = arith.constant 0 : i32
    return %arg0, %c0_i32 : i32, i32
  }
  func.func @transform_1(%arg0: i32) -> (i32, i32) {
    %c0_i32 = arith.constant 0 : i32
    %c0_i32_0 = arith.constant 0 : i32
    %c0_i32_1 = arith.constant 0 : i32
    return %c0_i32, %c0_i32_0 : i32, i32
  }
  func.func @transform_2(%arg0: i32) -> (i32, i32) {
    %c0_i32 = arith.constant 0 : i32
    %c0_i32_0 = arith.constant 0 : i32
    %c0_i32_1 = arith.constant 0 : i32
    return %c0_i32, %c0_i32_0 : i32, i32
  }
  func.func @transform_3(%arg0: i32) -> (i32, i32) {
    %c0_i32 = arith.constant 0 : i32
    %c0_i32_0 = arith.constant 0 : i32
    %c0_i32_1 = arith.constant 0 : i32
    return %c0_i32, %c0_i32_0 : i32, i32
  }
  func.func @transform_4(%arg0: i32) -> (i32, i32) {
    %c0_i32 = arith.constant 0 : i32
    %c0_i32_0 = arith.constant 0 : i32
    %c0_i32_1 = arith.constant 0 : i32
    return %c0_i32, %c0_i32_0 : i32, i32
  }
  func.func @transform_5(%arg0: i32) -> (i32, i32) {
    %c0_i32 = arith.constant 0 : i32
    %c0_i32_0 = arith.constant 0 : i32
    return %arg0, %c0_i32 : i32, i32
  }
}

</mosaic_0001>

<llo_original>
// kernel: net_distillation_forward.3
$region0: #{net_distillation_forward.3}
  #allocation0 [shape = 'u32[]', space=smem, size = 0x4, offset = 0x4, fixed_abs, tag = 'smem constant byte address 0x4 - core index']
  #allocation1 [shape = 'u32[144,128]{1,0:T(1,128)}', space=vmem, size = 0x12000, scoped, tag = 'internal scratch']
  %s0 = inlined_call_operand.vmem [shape: bf16[4,288,25], index: 0, kind: input, shape index: {}]
  %s1 = inlined_call_operand.vmem [shape: bf16[25,28], index: 1, kind: input, shape index: {}]
  %s2 = inlined_call_operand.vmem [shape: f32[1,28], index: 2, kind: input, shape index: {}]
  %s3 = inlined_call_operand.vmem [shape: bf16[288,28], index: 3, kind: output, shape index: {}]
  %s4 = sld [smem:[#allocation0]]
  $region86: #{net_distillation_forward.3} parent=0
    _
  %s6 = ssub.s32 1, %s4
  %s7 = scalar_select 0, %s6, %s4
  $region1: #{net_distillation_forward.3} parent=0
    #allocation2 [shape = 'u8[294912]{0}', space=vmem, size = 0x48000, scoped, tag = 'input window, operand 0']
    loop: start=0, step=1, limit=4
    $region2: #{net_distillation_forward.3} parent=1 // loop_pre_header
      _
    $region3: #{net_distillation_forward.3} parent=1 // loop_header
      %s9 = sphi 0, %s13
      %p10 = scmp.ge.s32.totalorder %s9, 4
      %s19 = sphi 0, %s21
      %s22 = sphi 0, %s19
      %s23 = sphi 0, %s22
      %s39 = sphi 0, %s23
      %s43 = sphi 0, %s43
      %s45 = sphi 0, %s43
      %s46 = sphi 0, %s45
      %s60 = sphi 0, %s46
      %s64 = sphi 0, %s64
      %s66 = sphi 0, %s64
      %s67 = sphi 0, %s66
      %s81 = sphi 0, %s67
      %s87 = sphi 0, %s89
      %s90 = sphi 0, %s87
      %s91 = sphi 0, %s90
      %s107 = sphi 0, %s91
    $region4: #{net_distillation_forward.3} parent=1 // loop_header_branch
      %12 = sbr.rel (%p10) target = $region8
    $region5: #{net_distillation_forward.3} parent=1 // loop_body
      %s14 = ssub.s32 %s9, 1
      %s15 = ssub.s32 %s9, 2
      %s16 = sadd.s32 %s9, 1
      %s17 = ssub.s32 %s9, %s16
      %p18 = scmp.eq.s32.totalorder %s17, 0
      %s20 = sadd.s32 %s19, 1
      %s21 = scalar_select %p18, %s19, %s20
      %p24 = pneg %p18
      %p25 = scmp.eq.s32.totalorder %s9, 1
      %p26 = por %p24, %p25
      %p27 = scmp.ne.s32.totalorder %s19, %s22
      %p28 = scmp.eq.s32.totalorder %s9, 0
      %p29 = por %p27, %p28
      %p30 = scmp.ne.s32.totalorder %s19, %s22
      %p31 = scmp.eq.s32.totalorder %s14, 1
      %p32 = por %p30, %p31
      %p33 = scmp.ne.s32.totalorder %s22, %s23
      %p34 = scmp.eq.s32.totalorder %s14, 0
      %p35 = por %p33, %p34
      %p36 = scmp.ne.s32.totalorder %s22, %s23
      %p37 = scmp.eq.s32.totalorder %s15, 1
      %p38 = por %p36, %p37
      %p40 = scmp.ne.s32.totalorder %s23, %s39
      %p41 = scmp.eq.s32.totalorder %s15, 0
      %p42 = por %p40, %p41
      %s44 = sadd.s32 %s43, 1
      %p47 = scmp.eq.s32.totalorder %s9, 1
      %p48 = scmp.ne.s32.totalorder %s43, %s45
      %p49 = scmp.eq.s32.totalorder %s9, 0
      %p50 = por %p48, %p49
      %p51 = scmp.ne.s32.totalorder %s43, %s45
      %p52 = scmp.eq.s32.totalorder %s14, 1
      %p53 = por %p51, %p52
      %p54 = scmp.ne.s32.totalorder %s45, %s46
      %p55 = scmp.eq.s32.totalorder %s14, 0
      %p56 = por %p54, %p55
      %p57 = scmp.ne.s32.totalorder %s45, %s46
      %p58 = scmp.eq.s32.totalorder %s15, 1
      %p59 = por %p57, %p58
      %p61 = scmp.ne.s32.totalorder %s46, %s60
      %p62 = scmp.eq.s32.totalorder %s15, 0
      %p63 = por %p61, %p62
      %s65 = sadd.s32 %s64, 1
      %p68 = scmp.eq.s32.totalorder %s9, 1
      %p69 = scmp.ne.s32.totalorder %s64, %s66
      %p70 = scmp.eq.s32.totalorder %s9, 0
      %p71 = por %p69, %p70
      %p72 = scmp.ne.s32.totalorder %s64, %s66
      %p73 = scmp.eq.s32.totalorder %s14, 1
      %p74 = por %p72, %p73
      %p75 = scmp.ne.s32.totalorder %s66, %s67
      %p76 = scmp.eq.s32.totalorder %s14, 0
      %p77 = por %p75, %p76
      %p78 = scmp.ne.s32.totalorder %s66, %s67
      %p79 = scmp.eq.s32.totalorder %s15, 1
      %p80 = por %p78, %p79
      %p82 = scmp.ne.s32.totalorder %s67, %s81
      %p83 = scmp.eq.s32.totalorder %s15, 0
      %p84 = por %p82, %p83
      %s85 = ssub.s32 %s9, %s16
      %p86 = scmp.eq.s32.totalorder %s85, 0
      %s88 = sadd.s32 %s87, 1
      %s89 = scalar_select %p86, %s87, %s88
      %p92 = pneg %p86
      %p93 = scmp.eq.s32.totalorder %s9, 1
      %p94 = por %p92, %p93
      %p95 = scmp.ne.s32.totalorder %s87, %s90
      %p96 = scmp.eq.s32.totalorder %s9, 0
      %p97 = por %p95, %p96
      %p98 = scmp.ne.s32.totalorder %s87, %s90
      %p99 = scmp.eq.s32.totalorder %s14, 1
      %p100 = por %p98, %p99
      %p101 = scmp.ne.s32.totalorder %s90, %s91
      %p102 = scmp.eq.s32.totalorder %s14, 0
      %p103 = por %p101, %p102
      %p104 = scmp.ne.s32.totalorder %s90, %s91
      %p105 = scmp.eq.s32.totalorder %s15, 1
      %p106 = por %p104, %p105
      %p108 = scmp.ne.s32.totalorder %s91, %s107
      %p109 = scmp.eq.s32.totalorder %s15, 0
      %p110 = por %p108, %p109
      %p111 = scmp.le.s32.totalorder 1, %s9
      %p112 = scmp.lt.s32.totalorder %s9, 3
      %p113 = pnand %p111, %p112
      %p114 = pneg %p113
      // Predicated region
      $region9: #{net_distillation_forward.3} parent=5 // pred_check
        _
      $region10: #{net_distillation_forward.3} parent=5 // pred_check_branch
        %116 = sbr.rel (%p113) target = $region12
      $region11: #{net_distillation_forward.3} parent=5 // pred_region
        %s117 = ssub.s32 %s9, 1
        // Predicated region
        $region13: #{net_distillation_forward.3} parent=11 // pred_check
          %p118 = pneg %p56
        $region14: #{net_distillation_forward.3} parent=11 // pred_check_branch
          %120 = sbr.rel (%p118) target = $region16
        $region15: #{net_distillation_forward.3} parent=11 // pred_region
          _
        $region16: #{net_distillation_forward.3} parent=11 // pred_fallthru
          _
        // Predicated region
        $region17: #{net_distillation_forward.3} parent=11 // pred_check
          %p121 = pneg %p77
        $region18: #{net_distillation_forward.3} parent=11 // pred_check_branch
          %123 = sbr.rel (%p121) target = $region20
        $region19: #{net_distillation_forward.3} parent=11 // pred_region
          _
        $region20: #{net_distillation_forward.3} parent=11 // pred_fallthru
          _
      $region12: #{net_distillation_forward.3} parent=5 // pred_fallthru
        _
      %p124 = scmp.lt.s32.totalorder %s9, 2
      // Predicated region
      $region21: #{net_distillation_forward.3} parent=5 // pred_check
        %p125 = pneg %p124
      $region22: #{net_distillation_forward.3} parent=5 // pred_check_branch
        %127 = sbr.rel (%p125) target = $region24
      $region23: #{net_distillation_forward.3} parent=5 // pred_region
        // Predicated region
        $region25: #{net_distillation_forward.3} parent=23 // pred_check
          %p128 = pneg %p29
        $region26: #{net_distillation_forward.3} parent=23 // pred_check_branch
          %130 = sbr.rel (%p128) target = $region28
        $region27: #{net_distillation_forward.3} parent=23 // pred_region
          %s131 = sand.u32 %s19, 1
          %s132 = sand.u32 %s19, 1
          %s133 = smul.addr %s132, 288
          %s134 = scalar_lea.vmem [#allocation2], %s133
          %s135 = smul.u32 18, %s9
          %s136 = smul.addr %s135, 4
          %s137 = scalar_lea.vmem %s0, %s136
          // Predicated region
          $region29: #{net_distillation_forward.3} parent=27 // pred_check
            _
          $region30: #{net_distillation_forward.3} parent=27 // pred_check_branch
            %139 = sbr.rel (0) target = $region32
          $region31: #{net_distillation_forward.3} parent=27 // pred_region
            // Predicated region
            $region33: #{net_distillation_forward.3} parent=31 // pred_check
              _
            $region34: #{net_distillation_forward.3} parent=31 // pred_check_branch
              %141 = sbr.rel target = $region36
            $region35: #{net_distillation_forward.3} parent=31 // pred_region
              // Predicated region
              $region48: #{net_distillation_forward.3} parent=35 // pred_check
                _
              $region49: #{net_distillation_forward.3} parent=35 // pred_check_branch
                %298 = sbr.rel (0) target = $region51
              $region50: #{net_distillation_forward.3} parent=35 // pred_region
                loop: start=0, step=1, limit=1
                $region52: #{net_distillation_forward.3} parent=50 // loop_pre_header
                  _
                $region53: #{net_distillation_forward.3} parent=50 // loop_header
                  %s300 = sphi 0, %s304
                  %p301 = scmp.ge.s32.totalorder %s300, 1
                  %s305 = sphi %s137, %s137
                  %s306 = sphi %s134, %s134
                $region54: #{net_distillation_forward.3} parent=50 // loop_header_branch
                  %303 = sbr.rel (%p301) target = $region58
                $region55: #{net_distillation_forward.3} parent=50 // loop_body
                  _
                $region56: #{net_distillation_forward.3} parent=50 // loop_footer
                  %s304 = sadd.s32 1, %s300
                $region57: #{net_distillation_forward.3} parent=50 // loop_footer_branch
                  %299 = sbr.rel target = $region53
                $region58: #{net_distillation_forward.3} parent=50 // loop_exit
                  _
                loop: start=0, step=1, limit=1
                $region59: #{net_distillation_forward.3} parent=50 // loop_pre_header
                  _
                $region60: #{net_distillation_forward.3} parent=50 // loop_header
                  %s309 = sphi 0, %s313
                  %p310 = scmp.ge.s32.totalorder %s309, 1
                  %s314 = sphi %s137, %s137
                  %s315 = sphi %s134, %s134
                $region61: #{net_distillation_forward.3} parent=50 // loop_header_branch
                  %312 = sbr.rel (%p310) target = $region65
                $region62: #{net_distillation_forward.3} parent=50 // loop_body
                  %v316 = vld [vmem:[%s314] sm:$0xf]
                  %317 = vst [vmem:[%s315] sm:$0xf] %v316
                  %v318 = vld [vmem:[%s314 + $0x4] sm:$0xf]
                  %319 = vst [vmem:[%s315 + $0x4] sm:$0xf] %v318
                  %v320 = vld [vmem:[%s314 + $0x8] sm:$0xf]
                  %321 = vst [vmem:[%s315 + $0x8] sm:$0xf] %v320
                  %v322 = vld [vmem:[%s314 + $0xc] sm:$0xf]
                  %323 = vst [vmem:[%s315 + $0xc] sm:$0xf] %v322
                  %v324 = vld [vmem:[%s314 + $0x10] sm:$0xf]
                  %325 = vst [vmem:[%s315 + $0x10] sm:$0xf] %v324
                  %v326 = vld [vmem:[%s314 + $0x14] sm:$0xf]
                  %327 = vst [vmem:[%s315 + $0x14] sm:$0xf] %v326
                  %v328 = vld [vmem:[%s314 + $0x18] sm:$0xf]
                  %329 = vst [vmem:[%s315 + $0x18] sm:$0xf] %v328
                  %v330 = vld [vmem:[%s314 + $0x1c] sm:$0xf]
                  %331 = vst [vmem:[%s315 + $0x1c] sm:$0xf] %v330
                  %v332 = vld [vmem:[%s314 + $0x20] sm:$0xf]
                  %333 = vst [vmem:[%s315 + $0x20] sm:$0xf] %v332
                  %v334 = vld [vmem:[%s314 + $0x24] sm:$0xf]
                  %335 = vst [vmem:[%s315 + $0x24] sm:$0xf] %v334
                  %v336 = vld [vmem:[%s314 + $0x28] sm:$0xf]
                  %337 = vst [vmem:[%s315 + $0x28] sm:$0xf] %v336
                  %v338 = vld [vmem:[%s314 + $0x2c] sm:$0xf]
                  %339 = vst [vmem:[%s315 + $0x2c] sm:$0xf] %v338
                  %v340 = vld [vmem:[%s314 + $0x30] sm:$0xf]
                  %341 = vst [vmem:[%s315 + $0x30] sm:$0xf] %v340
                  %v342 = vld [vmem:[%s314 + $0x34] sm:$0xf]
                  %343 = vst [vmem:[%s315 + $0x34] sm:$0xf] %v342
                  %v344 = vld [vmem:[%s314 + $0x38] sm:$0xf]
                  %345 = vst [vmem:[%s315 + $0x38] sm:$0xf] %v344
                  %v346 = vld [vmem:[%s314 + $0x3c] sm:$0xf]
                  %347 = vst [vmem:[%s315 + $0x3c] sm:$0xf] %v346
                  %v348 = vld [vmem:[%s314 + $0x40] sm:$0xf]
                  %349 = vst [vmem:[%s315 + $0x40] sm:$0xf] %v348
                  %v350 = vld [vmem:[%s314 + $0x44] sm:$0xf]
                  %351 = vst [vmem:[%s315 + $0x44] sm:$0xf] %v350
                  %v352 = vld [vmem:[%s314 + $0x90] sm:$0xf]
                  %353 = vst [vmem:[%s315 + $0x48] sm:$0xf] %v352
                  %v354 = vld [vmem:[%s314 + $0x94] sm:$0xf]
                  %355 = vst [vmem:[%s315 + $0x4c] sm:$0xf] %v354
                  %v356 = vld [vmem:[%s314 + $0x98] sm:$0xf]
                  %357 = vst [vmem:[%s315 + $0x50] sm:$0xf] %v356
                  %v358 = vld [vmem:[%s314 + $0x9c] sm:$0xf]
                  %359 = vst [vmem:[%s315 + $0x54] sm:$0xf] %v358
                  %v360 = vld [vmem:[%s314 + $0xa0] sm:$0xf]
                  %361 = vst [vmem:[%s315 + $0x58] sm:$0xf] %v360
                  %v362 = vld [vmem:[%s314 + $0xa4] sm:$0xf]
                  %363 = vst [vmem:[%s315 + $0x5c] sm:$0xf] %v362
                  %v364 = vld [vmem:[%s314 + $0xa8] sm:$0xf]
                  %365 = vst [vmem:[%s315 + $0x60] sm:$0xf] %v364
                  %v366 = vld [vmem:[%s314 + $0xac] sm:$0xf]
                  %367 = vst [vmem:[%s315 + $0x64] sm:$0xf] %v366
                  %v368 = vld [vmem:[%s314 + $0xb0] sm:$0xf]
                  %369 = vst [vmem:[%s315 + $0x68] sm:$0xf] %v368
                  %v370 = vld [vmem:[%s314 + $0xb4] sm:$0xf]
                  %371 = vst [vmem:[%s315 + $0x6c] sm:$0xf] %v370
                  %v372 = vld [vmem:[%s314 + $0xb8] sm:$0xf]
                  %373 = vst [vmem:[%s315 + $0x70] sm:$0xf] %v372
                  %v374 = vld [vmem:[%s314 + $0xbc] sm:$0xf]
                  %375 = vst [vmem:[%s315 + $0x74] sm:$0xf] %v374
                  %v376 = vld [vmem:[%s314 + $0xc0] sm:$0xf]
                  %377 = vst [vmem:[%s315 + $0x78] sm:$0xf] %v376
                  %v378 = vld [vmem:[%s314 + $0xc4] sm:$0xf]
                  %379 = vst [vmem:[%s315 + $0x7c] sm:$0xf] %v378
                  %v380 = vld [vmem:[%s314 + $0xc8] sm:$0xf]
                  %381 = vst [vmem:[%s315 + $0x80] sm:$0xf] %v380
                  %v382 = vld [vmem:[%s314 + $0xcc] sm:$0xf]
                  %383 = vst [vmem:[%s315 + $0x84] sm:$0xf] %v382
                  %v384 = vld [vmem:[%s314 + $0xd0] sm:$0xf]
                  %385 = vst [vmem:[%s315 + $0x88] sm:$0xf] %v384
                  %v386 = vld [vmem:[%s314 + $0xd4] sm:$0xf]
                  %387 = vst [vmem:[%s315 + $0x8c] sm:$0xf] %v386
                  %v388 = vld [vmem:[%s314 + $0x120] sm:$0xf]
                  %389 = vst [vmem:[%s315 + $0x90] sm:$0xf] %v388
                  %v390 = vld [vmem:[%s314 + $0x124] sm:$0xf]
                  %391 = vst [vmem:[%s315 + $0x94] sm:$0xf] %v390
                  %v392 = vld [vmem:[%s314 + $0x128] sm:$0xf]
                  %393 = vst [vmem:[%s315 + $0x98] sm:$0xf] %v392
                  %v394 = vld [vmem:[%s314 + $0x12c] sm:$0xf]
                  %395 = vst [vmem:[%s315 + $0x9c] sm:$0xf] %v394
                  %v396 = vld [vmem:[%s314 + $0x130] sm:$0xf]
                  %397 = vst [vmem:[%s315 + $0xa0] sm:$0xf] %v396
                  %v398 = vld [vmem:[%s314 + $0x134] sm:$0xf]
                  %399 = vst [vmem:[%s315 + $0xa4] sm:$0xf] %v398
                  %v400 = vld [vmem:[%s314 + $0x138] sm:$0xf]
                  %401 = vst [vmem:[%s315 + $0xa8] sm:$0xf] %v400
                  %v402 = vld [vmem:[%s314 + $0x13c] sm:$0xf]
                  %403 = vst [vmem:[%s315 + $0xac] sm:$0xf] %v402
                  %v404 = vld [vmem:[%s314 + $0x140] sm:$0xf]
                  %405 = vst [vmem:[%s315 + $0xb0] sm:$0xf] %v404
                  %v406 = vld [vmem:[%s314 + $0x144] sm:$0xf]
                  %407 = vst [vmem:[%s315 + $0xb4] sm:$0xf] %v406
                  %v408 = vld [vmem:[%s314 + $0x148] sm:$0xf]
                  %409 = vst [vmem:[%s315 + $0xb8] sm:$0xf] %v408
                  %v410 = vld [vmem:[%s314 + $0x14c] sm:$0xf]
                  %411 = vst [vmem:[%s315 + $0xbc] sm:$0xf] %v410
                  %v412 = vld [vmem:[%s314 + $0x150] sm:$0xf]
                  %413 = vst [vmem:[%s315 + $0xc0] sm:$0xf] %v412
                  %v414 = vld [vmem:[%s314 + $0x154] sm:$0xf]
                  %415 = vst [vmem:[%s315 + $0xc4] sm:$0xf] %v414
                  %v416 = vld [vmem:[%s314 + $0x158] sm:$0xf]
                  %417 = vst [vmem:[%s315 + $0xc8] sm:$0xf] %v416
                  %v418 = vld [vmem:[%s314 + $0x15c] sm:$0xf]
                  %419 = vst [vmem:[%s315 + $0xcc] sm:$0xf] %v418
                  %v420 = vld [vmem:[%s314 + $0x160] sm:$0xf]
                  %421 = vst [vmem:[%s315 + $0xd0] sm:$0xf] %v420
                  %v422 = vld [vmem:[%s314 + $0x164] sm:$0xf]
                  %423 = vst [vmem:[%s315 + $0xd4] sm:$0xf] %v422
                  %v424 = vld [vmem:[%s314 + $0x1b0] sm:$0xf]
                  %425 = vst [vmem:[%s315 + $0xd8] sm:$0xf] %v424
                  %v426 = vld [vmem:[%s314 + $0x1b4] sm:$0xf]
                  %427 = vst [vmem:[%s315 + $0xdc] sm:$0xf] %v426
                  %v428 = vld [vmem:[%s314 + $0x1b8] sm:$0xf]
                  %429 = vst [vmem:[%s315 + $0xe0] sm:$0xf] %v428
                  %v430 = vld [vmem:[%s314 + $0x1bc] sm:$0xf]
                  %431 = vst [vmem:[%s315 + $0xe4] sm:$0xf] %v430
                  %v432 = vld [vmem:[%s314 + $0x1c0] sm:$0xf]
                  %433 = vst [vmem:[%s315 + $0xe8] sm:$0xf] %v432
                  %v434 = vld [vmem:[%s314 + $0x1c4] sm:$0xf]
                  %435 = vst [vmem:[%s315 + $0xec] sm:$0xf] %v434
                  %v436 = vld [vmem:[%s314 + $0x1c8] sm:$0xf]
                  %437 = vst [vmem:[%s315 + $0xf0] sm:$0xf] %v436
                  %v438 = vld [vmem:[%s314 + $0x1cc] sm:$0xf]
                  %439 = vst [vmem:[%s315 + $0xf4] sm:$0xf] %v438
                  %v440 = vld [vmem:[%s314 + $0x1d0] sm:$0xf]
                  %441 = vst [vmem:[%s315 + $0xf8] sm:$0xf] %v440
                  %v442 = vld [vmem:[%s314 + $0x1d4] sm:$0xf]
                  %443 = vst [vmem:[%s315 + $0xfc] sm:$0xf] %v442
                  %v444 = vld [vmem:[%s314 + $0x1d8] sm:$0xf]
                  %445 = vst [vmem:[%s315 + $0x100] sm:$0xf] %v444
                  %v446 = vld [vmem:[%s314 + $0x1dc] sm:$0xf]
                  %447 = vst [vmem:[%s315 + $0x104] sm:$0xf] %v446
                  %v448 = vld [vmem:[%s314 + $0x1e0] sm:$0xf]
                  %449 = vst [vmem:[%s315 + $0x108] sm:$0xf] %v448
                  %v450 = vld [vmem:[%s314 + $0x1e4] sm:$0xf]
                  %451 = vst [vmem:[%s315 + $0x10c] sm:$0xf] %v450
                  %v452 = vld [vmem:[%s314 + $0x1e8] sm:$0xf]
                  %453 = vst [vmem:[%s315 + $0x110] sm:$0xf] %v452
                  %v454 = vld [vmem:[%s314 + $0x1ec] sm:$0xf]
                  %455 = vst [vmem:[%s315 + $0x114] sm:$0xf] %v454
                  %v456 = vld [vmem:[%s314 + $0x1f0] sm:$0xf]
                  %457 = vst [vmem:[%s315 + $0x118] sm:$0xf] %v456
                  %v458 = vld [vmem:[%s314 + $0x1f4] sm:$0xf]
                  %459 = vst [vmem:[%s315 + $0x11c] sm:$0xf] %v458
                $region63: #{net_distillation_forward.3} parent=50 // loop_footer
                  %s313 = sadd.s32 1, %s309
                $region64: #{net_distillation_forward.3} parent=50 // loop_footer_branch
                  %308 = sbr.rel target = $region60
                $region65: #{net_distillation_forward.3} parent=50 // loop_exit
                  _
              $region51: #{net_distillation_forward.3} parent=35 // pred_fallthru
                _
            $region36: #{net_distillation_forward.3} parent=31 // pred_fallthru
              _
            // Predicated region
            $region37: #{net_distillation_forward.3} parent=31 // pred_check
              _
            $region38: #{net_distillation_forward.3} parent=31 // pred_check_branch
              %143 = sbr.rel (0) target = $region40
            $region39: #{net_distillation_forward.3} parent=31 // pred_region
              loop: start=0, step=1, limit=1
              $region41: #{net_distillation_forward.3} parent=39 // loop_pre_header
                _
              $region42: #{net_distillation_forward.3} parent=39 // loop_header
                %s146 = sphi 0, %s150
                %p147 = scmp.ge.s32.totalorder %s146, 1
                %s151 = sphi %s137, %s137
                %s152 = sphi %s134, %s134
              $region43: #{net_distillation_forward.3} parent=39 // loop_header_branch
                %149 = sbr.rel (%p147) target = $region47
              $region44: #{net_distillation_forward.3} parent=39 // loop_body
                %v153 = vld [vmem:[%s151] sm:$0xf]
                %154 = vst [vmem:[%s152] sm:$0xf] %v153
                %v155 = vld [vmem:[%s151 + $0x4] sm:$0xf]
                %156 = vst [vmem:[%s152 + $0x4] sm:$0xf] %v155
                %v157 = vld [vmem:[%s151 + $0x8] sm:$0xf]
                %158 = vst [vmem:[%s152 + $0x8] sm:$0xf] %v157
                %v159 = vld [vmem:[%s151 + $0xc] sm:$0xf]
                %160 = vst [vmem:[%s152 + $0xc] sm:$0xf] %v159
                %v161 = vld [vmem:[%s151 + $0x10] sm:$0xf]
                %162 = vst [vmem:[%s152 + $0x10] sm:$0xf] %v161
                %v163 = vld [vmem:[%s151 + $0x14] sm:$0xf]
                %164 = vst [vmem:[%s152 + $0x14] sm:$0xf] %v163
                %v165 = vld [vmem:[%s151 + $0x18] sm:$0xf]
                %166 = vst [vmem:[%s152 + $0x18] sm:$0xf] %v165
                %v167 = vld [vmem:[%s151 + $0x1c] sm:$0xf]
                %168 = vst [vmem:[%s152 + $0x1c] sm:$0xf] %v167
                %v169 = vld [vmem:[%s151 + $0x20] sm:$0xf]
                %170 = vst [vmem:[%s152 + $0x20] sm:$0xf] %v169
                %v171 = vld [vmem:[%s151 + $0x24] sm:$0xf]
                %172 = vst [vmem:[%s152 + $0x24] sm:$0xf] %v171
                %v173 = vld [vmem:[%s151 + $0x28] sm:$0xf]
                %174 = vst [vmem:[%s152 + $0x28] sm:$0xf] %v173
                %v175 = vld [vmem:[%s151 + $0x2c] sm:$0xf]
                %176 = vst [vmem:[%s152 + $0x2c] sm:$0xf] %v175
                %v177 = vld [vmem:[%s151 + $0x30] sm:$0xf]
                %178 = vst [vmem:[%s152 + $0x30] sm:$0xf] %v177
                %v179 = vld [vmem:[%s151 + $0x34] sm:$0xf]
                %180 = vst [vmem:[%s152 + $0x34] sm:$0xf] %v179
                %v181 = vld [vmem:[%s151 + $0x38] sm:$0xf]
                %182 = vst [vmem:[%s152 + $0x38] sm:$0xf] %v181
                %v183 = vld [vmem:[%s151 + $0x3c] sm:$0xf]
                %184 = vst [vmem:[%s152 + $0x3c] sm:$0xf] %v183
                %v185 = vld [vmem:[%s151 + $0x40] sm:$0xf]
                %186 = vst [vmem:[%s152 + $0x40] sm:$0xf] %v185
                %v187 = vld [vmem:[%s151 + $0x44] sm:$0xf]
                %188 = vst [vmem:[%s152 + $0x44] sm:$0xf] %v187
                %v189 = vld [vmem:[%s151 + $0x90] sm:$0xf]
                %190 = vst [vmem:[%s152 + $0x48] sm:$0xf] %v189
                %v191 = vld [vmem:[%s151 + $0x94] sm:$0xf]
                %192 = vst [vmem:[%s152 + $0x4c] sm:$0xf] %v191
                %v193 = vld [vmem:[%s151 + $0x98] sm:$0xf]
                %194 = vst [vmem:[%s152 + $0x50] sm:$0xf] %v193
                %v195 = vld [vmem:[%s151 + $0x9c] sm:$0xf]
                %196 = vst [vmem:[%s152 + $0x54] sm:$0xf] %v195
                %v197 = vld [vmem:[%s151 + $0xa0] sm:$0xf]
                %198 = vst [vmem:[%s152 + $0x58] sm:$0xf] %v197
                %v199 = vld [vmem:[%s151 + $0xa4] sm:$0xf]
                %200 = vst [vmem:[%s152 + $0x5c] sm:$0xf] %v199
                %v201 = vld [vmem:[%s151 + $0xa8] sm:$0xf]
                %202 = vst [vmem:[%s152 + $0x60] sm:$0xf] %v201
                %v203 = vld [vmem:[%s151 + $0xac] sm:$0xf]
                %204 = vst [vmem:[%s152 + $0x64] sm:$0xf] %v203
                %v205 = vld [vmem:[%s151 + $0xb0] sm:$0xf]
                %206 = vst [vmem:[%s152 + $0x68] sm:$0xf] %v205
                %v207 = vld [vmem:[%s151 + $0xb4] sm:$0xf]
                %208 = vst [vmem:[%s152 + $0x6c] sm:$0xf] %v207
                %v209 = vld [vmem:[%s151 + $0xb8] sm:$0xf]
                %210 = vst [vmem:[%s152 + $0x70] sm:$0xf] %v209
                %v211 = vld [vmem:[%s151 + $0xbc] sm:$0xf]
                %212 = vst [vmem:[%s152 + $0x74] sm:$0xf] %v211
                %v213 = vld [vmem:[%s151 + $0xc0] sm:$0xf]
                %214 = vst [vmem:[%s152 + $0x78] sm:$0xf] %v213
                %v215 = vld [vmem:[%s151 + $0xc4] sm:$0xf]
                %216 = vst [vmem:[%s152 + $0x7c] sm:$0xf] %v215
                %v217 = vld [vmem:[%s151 + $0xc8] sm:$0xf]
                %218 = vst [vmem:[%s152 + $0x80] sm:$0xf] %v217
                %v219 = vld [vmem:[%s151 + $0xcc] sm:$0xf]
                %220 = vst [vmem:[%s152 + $0x84] sm:$0xf] %v219
                %v221 = vld [vmem:[%s151 + $0xd0] sm:$0xf]
                %222 = vst [vmem:[%s152 + $0x88] sm:$0xf] %v221
                %v223 = vld [vmem:[%s151 + $0xd4] sm:$0xf]
                %224 = vst [vmem:[%s152 + $0x8c] sm:$0xf] %v223
                %v225 = vld [vmem:[%s151 + $0x120] sm:$0xf]
                %226 = vst [vmem:[%s152 + $0x90] sm:$0xf] %v225
                %v227 = vld [vmem:[%s151 + $0x124] sm:$0xf]
                %228 = vst [vmem:[%s152 + $0x94] sm:$0xf] %v227
                %v229 = vld [vmem:[%s151 + $0x128] sm:$0xf]
                %230 = vst [vmem:[%s152 + $0x98] sm:$0xf] %v229
                %v231 = vld [vmem:[%s151 + $0x12c] sm:$0xf]
                %232 = vst [vmem:[%s152 + $0x9c] sm:$0xf] %v231
                %v233 = vld [vmem:[%s151 + $0x130] sm:$0xf]
                %234 = vst [vmem:[%s152 + $0xa0] sm:$0xf] %v233
                %v235 = vld [vmem:[%s151 + $0x134] sm:$0xf]
                %236 = vst [vmem:[%s152 + $0xa4] sm:$0xf] %v235
                %v237 = vld [vmem:[%s151 + $0x138] sm:$0xf]
                %238 = vst [vmem:[%s152 + $0xa8] sm:$0xf] %v237
                %v239 = vld [vmem:[%s151 + $0x13c] sm:$0xf]
                %240 = vst [vmem:[%s152 + $0xac] sm:$0xf] %v239
                %v241 = vld [vmem:[%s151 + $0x140] sm:$0xf]
                %242 = vst [vmem:[%s152 + $0xb0] sm:$0xf] %v241
                %v243 = vld [vmem:[%s151 + $0x144] sm:$0xf]
                %244 = vst [vmem:[%s152 + $0xb4] sm:$0xf] %v243
                %v245 = vld [vmem:[%s151 + $0x148] sm:$0xf]
                %246 = vst [vmem:[%s152 + $0xb8] sm:$0xf] %v245
                %v247 = vld [vmem:[%s151 + $0x14c] sm:$0xf]
                %248 = vst [vmem:[%s152 + $0xbc] sm:$0xf] %v247
                %v249 = vld [vmem:[%s151 + $0x150] sm:$0xf]
                %250 = vst [vmem:[%s152 + $0xc0] sm:$0xf] %v249
                %v251 = vld [vmem:[%s151 + $0x154] sm:$0xf]
                %252 = vst [vmem:[%s152 + $0xc4] sm:$0xf] %v251
                %v253 = vld [vmem:[%s151 + $0x158] sm:$0xf]
                %254 = vst [vmem:[%s152 + $0xc8] sm:$0xf] %v253
                %v255 = vld [vmem:[%s151 + $0x15c] sm:$0xf]
                %256 = vst [vmem:[%s152 + $0xcc] sm:$0xf] %v255
                %v257 = vld [vmem:[%s151 + $0x160] sm:$0xf]
                %258 = vst [vmem:[%s152 + $0xd0] sm:$0xf] %v257
                %v259 = vld [vmem:[%s151 + $0x164] sm:$0xf]
                %260 = vst [vmem:[%s152 + $0xd4] sm:$0xf] %v259
                %v261 = vld [vmem:[%s151 + $0x1b0] sm:$0xf]
                %262 = vst [vmem:[%s152 + $0xd8] sm:$0xf] %v261
                %v263 = vld [vmem:[%s151 + $0x1b4] sm:$0xf]
                %264 = vst [vmem:[%s152 + $0xdc] sm:$0xf] %v263
                %v265 = vld [vmem:[%s151 + $0x1b8] sm:$0xf]
                %266 = vst [vmem:[%s152 + $0xe0] sm:$0xf] %v265
                %v267 = vld [vmem:[%s151 + $0x1bc] sm:$0xf]
                %268 = vst [vmem:[%s152 + $0xe4] sm:$0xf] %v267
                %v269 = vld [vmem:[%s151 + $0x1c0] sm:$0xf]
                %270 = vst [vmem:[%s152 + $0xe8] sm:$0xf] %v269
                %v271 = vld [vmem:[%s151 + $0x1c4] sm:$0xf]
                %272 = vst [vmem:[%s152 + $0xec] sm:$0xf] %v271
                %v273 = vld [vmem:[%s151 + $0x1c8] sm:$0xf]
                %274 = vst [vmem:[%s152 + $0xf0] sm:$0xf] %v273
                %v275 = vld [vmem:[%s151 + $0x1cc] sm:$0xf]
                %276 = vst [vmem:[%s152 + $0xf4] sm:$0xf] %v275
                %v277 = vld [vmem:[%s151 + $0x1d0] sm:$0xf]
                %278 = vst [vmem:[%s152 + $0xf8] sm:$0xf] %v277
                %v279 = vld [vmem:[%s151 + $0x1d4] sm:$0xf]
                %280 = vst [vmem:[%s152 + $0xfc] sm:$0xf] %v279
                %v281 = vld [vmem:[%s151 + $0x1d8] sm:$0xf]
                %282 = vst [vmem:[%s152 + $0x100] sm:$0xf] %v281
                %v283 = vld [vmem:[%s151 + $0x1dc] sm:$0xf]
                %284 = vst [vmem:[%s152 + $0x104] sm:$0xf] %v283
                %v285 = vld [vmem:[%s151 + $0x1e0] sm:$0xf]
                %286 = vst [vmem:[%s152 + $0x108] sm:$0xf] %v285
                %v287 = vld [vmem:[%s151 + $0x1e4] sm:$0xf]
                %288 = vst [vmem:[%s152 + $0x10c] sm:$0xf] %v287
                %v289 = vld [vmem:[%s151 + $0x1e8] sm:$0xf]
                %290 = vst [vmem:[%s152 + $0x110] sm:$0xf] %v289
                %v291 = vld [vmem:[%s151 + $0x1ec] sm:$0xf]
                %292 = vst [vmem:[%s152 + $0x114] sm:$0xf] %v291
                %v293 = vld [vmem:[%s151 + $0x1f0] sm:$0xf]
                %294 = vst [vmem:[%s152 + $0x118] sm:$0xf] %v293
                %v295 = vld [vmem:[%s151 + $0x1f4] sm:$0xf]
                %296 = vst [vmem:[%s152 + $0x11c] sm:$0xf] %v295
              $region45: #{net_distillation_forward.3} parent=39 // loop_footer
                %s150 = sadd.s32 1, %s146
              $region46: #{net_distillation_forward.3} parent=39 // loop_footer_branch
                %145 = sbr.rel target = $region42
              $region47: #{net_distillation_forward.3} parent=39 // loop_exit
                _
            $region40: #{net_distillation_forward.3} parent=31 // pred_fallthru
              _
          $region32: #{net_distillation_forward.3} parent=27 // pred_fallthru
            _
          %460 = vnop
        $region28: #{net_distillation_forward.3} parent=23 // pred_fallthru
          _
      $region24: #{net_distillation_forward.3} parent=5 // pred_fallthru
        _
      %p461 = scmp.le.s32.totalorder 1, %s9
      %p462 = scmp.lt.s32.totalorder %s9, 3
      %p463 = pnand %p461, %p462
      %p464 = pneg %p463
      // Predicated region
      $region66: #{net_distillation_forward.3} parent=5 // pred_check
        _
      $region67: #{net_distillation_forward.3} parent=5 // pred_check_branch
        %466 = sbr.rel (%p463) target = $region69
      $region68: #{net_distillation_forward.3} parent=5 // pred_region
        %s467 = ssub.s32 %s9, 1
        %s468 = sand.u32 %s22, 1
        %s469 = sand.u32 %s22, 1
        %s470 = smul.addr %s469, 288
        %s471 = scalar_lea.vmem [#allocation2], %s470
        // Predicated region
        $region70: #{net_distillation_forward.3} parent=68 // pred_check
          %p472 = pneg %p35
        $region71: #{net_distillation_forward.3} parent=68 // pred_check_branch
          %474 = sbr.rel (%p472) target = $region73
        $region72: #{net_distillation_forward.3} parent=68 // pred_region
          _
        $region73: #{net_distillation_forward.3} parent=68 // pred_fallthru
          _
        %s475 = sand.u32 %s22, 1
        %s476 = sand.u32 %s22, 1
        %s477 = smul.addr %s476, 288
        %s478 = scalar_lea.vmem [#allocation2], %s477
        %p479 = pneg %p35
        %p480 = pneg %p32
        %p481 = pneg %p56
        %p482 = pneg %p53
        %p483 = pneg %p77
        %p484 = pneg %p74
        %p485 = pneg %p103
        %p486 = pneg %p100
        %s487 = smul.u32 18, %s14
        %p488 = scmp.lt.s32.totalorder %s487, 35
        %s489 = scalar_select %p488, %s487, 35
        %s490 = smul.addr %s489, 4
        %s491 = scalar_lea.vmem %s3, %s490
        %s492 = smul.u32 18, %s14
        %s493 = smul.u32 18, %s14
        %p494 = scmp.lt.s32.totalorder %s493, 35
        %s495 = scalar_select %p494, %s493, 35
        %s496 = smul.addr %s495, 4
        %s497 = scalar_lea.vmem %s3, %s496
        %s498 = smul.u32 18, %s14
        %v500 = vld [vmem:[%s471] sm:$0xf]
        %v501 = vld [vmem:[%s471 + $0x4] sm:$0xf]
        %v502 = vld [vmem:[%s471 + $0x8] sm:$0xf]
        %v503 = vld [vmem:[%s471 + $0xc] sm:$0xf]
        %v504 = vld [vmem:[%s471 + $0x10] sm:$0xf]
        %v505 = vld [vmem:[%s471 + $0x14] sm:$0xf]
        %v506 = vld [vmem:[%s471 + $0x18] sm:$0xf]
        %v507 = vld [vmem:[%s471 + $0x1c] sm:$0xf]
        %v508 = vld [vmem:[%s471 + $0x20] sm:$0xf]
        %v509 = vld [vmem:[%s471 + $0x24] sm:$0xf]
        %v510 = vld [vmem:[%s471 + $0x28] sm:$0xf]
        %v511 = vld [vmem:[%s471 + $0x2c] sm:$0xf]
        %v512 = vld [vmem:[%s471 + $0x30] sm:$0xf]
        %v513 = vld [vmem:[%s471 + $0x34] sm:$0xf]
        %v514 = vld [vmem:[%s471 + $0x38] sm:$0xf]
        %v515 = vld [vmem:[%s471 + $0x3c] sm:$0xf]
        %v516 = vld [vmem:[%s471 + $0x40] sm:$0xf]
        %v517 = vld [vmem:[%s471 + $0x44] sm:$0xf]
        %v518 = vld [vmem:[%s471 + $0x48] sm:$0xf]
        %v519 = vld [vmem:[%s471 + $0x4c] sm:$0xf]
        %v520 = vld [vmem:[%s471 + $0x50] sm:$0xf]
        %v521 = vld [vmem:[%s471 + $0x54] sm:$0xf]
        %v522 = vld [vmem:[%s471 + $0x58] sm:$0xf]
        %v523 = vld [vmem:[%s471 + $0x5c] sm:$0xf]
        %v524 = vld [vmem:[%s471 + $0x60] sm:$0xf]
        %v525 = vld [vmem:[%s471 + $0x64] sm:$0xf]
        %v526 = vld [vmem:[%s471 + $0x68] sm:$0xf]
        %v527 = vld [vmem:[%s471 + $0x6c] sm:$0xf]
        %v528 = vld [vmem:[%s471 + $0x70] sm:$0xf]
        %v529 = vld [vmem:[%s471 + $0x74] sm:$0xf]
        %v530 = vld [vmem:[%s471 + $0x78] sm:$0xf]
        %v531 = vld [vmem:[%s471 + $0x7c] sm:$0xf]
        %v532 = vld [vmem:[%s471 + $0x80] sm:$0xf]
        %v533 = vld [vmem:[%s471 + $0x84] sm:$0xf]
        %v534 = vld [vmem:[%s471 + $0x88] sm:$0xf]
        %v535 = vld [vmem:[%s471 + $0x8c] sm:$0xf]
        %v536 = vld [vmem:[%s471 + $0x90] sm:$0xf]
        %v537 = vld [vmem:[%s471 + $0x94] sm:$0xf]
        %v538 = vld [vmem:[%s471 + $0x98] sm:$0xf]
        %v539 = vld [vmem:[%s471 + $0x9c] sm:$0xf]
        %v540 = vld [vmem:[%s471 + $0xa0] sm:$0xf]
        %v541 = vld [vmem:[%s471 + $0xa4] sm:$0xf]
        %v542 = vld [vmem:[%s471 + $0xa8] sm:$0xf]
        %v543 = vld [vmem:[%s471 + $0xac] sm:$0xf]
        %v544 = vld [vmem:[%s471 + $0xb0] sm:$0xf]
        %v545 = vld [vmem:[%s471 + $0xb4] sm:$0xf]
        %v546 = vld [vmem:[%s471 + $0xb8] sm:$0xf]
        %v547 = vld [vmem:[%s471 + $0xbc] sm:$0xf]
        %v548 = vld [vmem:[%s471 + $0xc0] sm:$0xf]
        %v549 = vld [vmem:[%s471 + $0xc4] sm:$0xf]
        %v550 = vld [vmem:[%s471 + $0xc8] sm:$0xf]
        %v551 = vld [vmem:[%s471 + $0xcc] sm:$0xf]
        %v552 = vld [vmem:[%s471 + $0xd0] sm:$0xf]
        %v553 = vld [vmem:[%s471 + $0xd4] sm:$0xf]
        %v554 = vld [vmem:[%s471 + $0xd8] sm:$0xf]
        %v555 = vld [vmem:[%s471 + $0xdc] sm:$0xf]
        %v556 = vld [vmem:[%s471 + $0xe0] sm:$0xf]
        %v557 = vld [vmem:[%s471 + $0xe4] sm:$0xf]
        %v558 = vld [vmem:[%s471 + $0xe8] sm:$0xf]
        %v559 = vld [vmem:[%s471 + $0xec] sm:$0xf]
        %v560 = vld [vmem:[%s471 + $0xf0] sm:$0xf]
        %v561 = vld [vmem:[%s471 + $0xf4] sm:$0xf]
        %v562 = vld [vmem:[%s471 + $0xf8] sm:$0xf]
        %v563 = vld [vmem:[%s471 + $0xfc] sm:$0xf]
        %v564 = vld [vmem:[%s471 + $0x100] sm:$0xf]
        %v565 = vld [vmem:[%s471 + $0x104] sm:$0xf]
        %v566 = vld [vmem:[%s471 + $0x108] sm:$0xf]
        %v567 = vld [vmem:[%s471 + $0x10c] sm:$0xf]
        %v568 = vld [vmem:[%s471 + $0x110] sm:$0xf]
        %v569 = vld [vmem:[%s471 + $0x114] sm:$0xf]
        %v570 = vld [vmem:[%s471 + $0x118] sm:$0xf]
        %v571 = vld [vmem:[%s471 + $0x11c] sm:$0xf]
        %v572 = vld [vmem:[%s1] sm:$0xf]
        %v573 = vld [vmem:[%s1 + $0x4] sm:$0xf]
        %v574 = vld [vmem:[%s1 + $0x8] sm:$0xf]
        %v575 = vld [vmem:[%s1 + $0xc] sm:$0x1]
        %v648 = vunpack.c.l.b16 %v500
        %v649 = vunpack.c.l.b16 %v501
        %v650 = vunpack.c.l.b16 %v502
        %v651 = vunpack.c.l.b16 %v503
        %v652 = vunpack.c.l.b16 %v504
        %v653 = vunpack.c.l.b16 %v505
        %v654 = vunpack.c.l.b16 %v506
        %v655 = vunpack.c.l.b16 %v507
        %v656 = vunpack.c.l.b16 %v508
        %v657 = vunpack.c.l.b16 %v509
        %v658 = vunpack.c.l.b16 %v510
        %v659 = vunpack.c.l.b16 %v511
        %v660 = vunpack.c.l.b16 %v512
        %v661 = vunpack.c.l.b16 %v513
        %v662 = vunpack.c.l.b16 %v514
        %v663 = vunpack.c.l.b16 %v515
        %v664 = vunpack.c.l.b16 %v516
        %v665 = vunpack.c.l.b16 %v517
        %v666 = vunpack.c.l.b16 %v518
        %v667 = vunpack.c.l.b16 %v519
        %v668 = vunpack.c.l.b16 %v520
        %v669 = vunpack.c.l.b16 %v521
        %v670 = vunpack.c.l.b16 %v522
        %v671 = vunpack.c.l.b16 %v523
        %v672 = vunpack.c.l.b16 %v524
        %v673 = vunpack.c.l.b16 %v525
        %v674 = vunpack.c.l.b16 %v526
        %v675 = vunpack.c.l.b16 %v527
        %v676 = vunpack.c.l.b16 %v528
        %v677 = vunpack.c.l.b16 %v529
        %v678 = vunpack.c.l.b16 %v530
        %v679 = vunpack.c.l.b16 %v531
        %v680 = vunpack.c.l.b16 %v532
        %v681 = vunpack.c.l.b16 %v533
        %v682 = vunpack.c.l.b16 %v534
        %v683 = vunpack.c.l.b16 %v535
        %v684 = vunpack.c.l.b16 %v536
        %v685 = vunpack.c.l.b16 %v537
        %v686 = vunpack.c.l.b16 %v538
        %v687 = vunpack.c.l.b16 %v539
        %v688 = vunpack.c.l.b16 %v540
        %v689 = vunpack.c.l.b16 %v541
        %v690 = vunpack.c.l.b16 %v542
        %v691 = vunpack.c.l.b16 %v543
        %v692 = vunpack.c.l.b16 %v544
        %v693 = vunpack.c.l.b16 %v545
        %v694 = vunpack.c.l.b16 %v546
        %v695 = vunpack.c.l.b16 %v547
        %v696 = vunpack.c.l.b16 %v548
        %v697 = vunpack.c.l.b16 %v549
        %v698 = vunpack.c.l.b16 %v550
        %v699 = vunpack.c.l.b16 %v551
        %v700 = vunpack.c.l.b16 %v552
        %v701 = vunpack.c.l.b16 %v553
        %v702 = vunpack.c.l.b16 %v554
        %v703 = vunpack.c.l.b16 %v555
        %v704 = vunpack.c.l.b16 %v556
        %v705 = vunpack.c.l.b16 %v557
        %v706 = vunpack.c.l.b16 %v558
        %v707 = vunpack.c.l.b16 %v559
        %v708 = vunpack.c.l.b16 %v560
        %v709 = vunpack.c.l.b16 %v561
        %v710 = vunpack.c.l.b16 %v562
        %v711 = vunpack.c.l.b16 %v563
        %v712 = vunpack.c.l.b16 %v564
        %v713 = vunpack.c.l.b16 %v565
        %v714 = vunpack.c.l.b16 %v566
        %v715 = vunpack.c.l.b16 %v567
        %v716 = vunpack.c.l.b16 %v568
        %v717 = vunpack.c.l.b16 %v569
        %v718 = vunpack.c.l.b16 %v570
        %v719 = vunpack.c.l.b16 %v571
        %v720 = vpack.c.b16 %v649, %v648
        %v721 = vpack.c.b16 %v651, %v650
        %v722 = vpack.c.b16 %v653, %v652
        %v723 = vpack.c.b16 %v655, %v654
        %v724 = vpack.c.b16 %v657, %v656
        %v725 = vpack.c.b16 %v659, %v658
        %v726 = vpack.c.b16 %v661, %v660
        %v727 = vpack.c.b16 %v663, %v662
        %v728 = vpack.c.b16 %v665, %v664
        %v729 = vpack.c.b16 %v667, %v666
        %v730 = vpack.c.b16 %v669, %v668
        %v731 = vpack.c.b16 %v671, %v670
        %v732 = vpack.c.b16 %v673, %v672
        %v733 = vpack.c.b16 %v675, %v674
        %v734 = vpack.c.b16 %v677, %v676
        %v735 = vpack.c.b16 %v679, %v678
        %v736 = vpack.c.b16 %v681, %v680
        %v737 = vpack.c.b16 %v683, %v682
        %v738 = vpack.c.b16 %v685, %v684
        %v739 = vpack.c.b16 %v687, %v686
        %v740 = vpack.c.b16 %v689, %v688
        %v741 = vpack.c.b16 %v691, %v690
        %v742 = vpack.c.b16 %v693, %v692
        %v743 = vpack.c.b16 %v695, %v694
        %v744 = vpack.c.b16 %v697, %v696
        %v745 = vpack.c.b16 %v699, %v698
        %v746 = vpack.c.b16 %v701, %v700
        %v747 = vpack.c.b16 %v703, %v702
        %v748 = vpack.c.b16 %v705, %v704
        %v749 = vpack.c.b16 %v707, %v706
        %v750 = vpack.c.b16 %v709, %v708
        %v751 = vpack.c.b16 %v711, %v710
        %v752 = vpack.c.b16 %v713, %v712
        %v753 = vpack.c.b16 %v715, %v714
        %v754 = vpack.c.b16 %v717, %v716
        %v755 = vpack.c.b16 %v719, %v718
        %v760 = vunpack.c.l.b16 %v572
        %v761 = vunpack.c.l.b16 %v573
        %v762 = vunpack.c.l.b16 %v574
        %v763 = vunpack.c.l.b16 %v575
        %v764 = vpack.c.b16 %v761, %v760
        %v765 = vpack.c.b16 %v763, %v762
        %vm767 = vcmask 203776
        %v769 = vsel %vm767, %v720, 0
        %v772 = vsel %vm767, %v721, 0
        %v775 = vsel %vm767, %v722, 0
        %v778 = vsel %vm767, %v723, 0
        %v781 = vsel %vm767, %v724, 0
        %v784 = vsel %vm767, %v725, 0
        %v787 = vsel %vm767, %v726, 0
        %v790 = vsel %vm767, %v727, 0
        %v793 = vsel %vm767, %v728, 0
        %v796 = vsel %vm767, %v729, 0
        %v799 = vsel %vm767, %v730, 0
        %v802 = vsel %vm767, %v731, 0
        %v805 = vsel %vm767, %v732, 0
        %v808 = vsel %vm767, %v733, 0
        %v811 = vsel %vm767, %v734, 0
        %v814 = vsel %vm767, %v735, 0
        %v817 = vsel %vm767, %v736, 0
        %v820 = vsel %vm767, %v737, 0
        %v823 = vsel %vm767, %v738, 0
        %v826 = vsel %vm767, %v739, 0
        %v829 = vsel %vm767, %v740, 0
        %v832 = vsel %vm767, %v741, 0
        %v835 = vsel %vm767, %v742, 0
        %v838 = vsel %vm767, %v743, 0
        %v841 = vsel %vm767, %v744, 0
        %v844 = vsel %vm767, %v745, 0
        %v847 = vsel %vm767, %v746, 0
        %v850 = vsel %vm767, %v747, 0
        %v853 = vsel %vm767, %v748, 0
        %v856 = vsel %vm767, %v749, 0
        %v859 = vsel %vm767, %v750, 0
        %v862 = vsel %vm767, %v751, 0
        %v865 = vsel %vm767, %v752, 0
        %v868 = vsel %vm767, %v753, 0
        %v871 = vsel %vm767, %v754, 0
        %v874 = vsel %vm767, %v755, 0
        %vm876 = vcmask 1043456
        %vm877 = vcmask 1044480
        %v878 = vsel %vm876, 4294967295, 65535
        %v879 = vsel %vm877, %v878, 0
        %v881 = vand.u32 %v765, %v879
        %883 = vmatprep.subr.bf16.mxu0 0
        %884 = vmatpush1.bf16.msra.mxu0 %v764
        %885 = vmatprep.subr.bf16.mxu0 0
        %886 = vmatpush1.bf16.msra.mxu0 %v881
        %887 = vmatprep.subr.bf16.mxu0 0
        %888 = vmatpush1.bf16.msra.mxu0 0
        %889 = vmatprep.subr.bf16.mxu0 0
        %890 = vmatpush1.bf16.msra.mxu0 0
        %891 = vmatprep.subr.bf16.mxu0 0
        %892 = vmatpush1.bf16.msra.mxu0 0
        %893 = vmatprep.subr.bf16.mxu0 0
        %894 = vmatpush1.bf16.msra.mxu0 0
        %895 = vmatprep.subr.bf16.mxu0 0
        %896 = vmatpush1.bf16.msra.mxu0 0
        %897 = vmatprep.subr.bf16.mxu0 0
        %898 = vmatpush1.bf16.msra.mxu0 0
        %899 = vmatprep.subr.bf16.mxu0 0
        %900 = vmatpush1.bf16.msra.mxu0 0
        %901 = vmatprep.subr.bf16.mxu0 0
        %902 = vmatpush1.bf16.msra.mxu0 0
        %903 = vmatprep.subr.bf16.mxu0 0
        %904 = vmatpush1.bf16.msra.mxu0 0
        %905 = vmatprep.subr.bf16.mxu0 0
        %906 = vmatpush1.bf16.msra.mxu0 0
        %907 = vmatprep.subr.bf16.mxu0 0
        %908 = vmatpush1.bf16.msra.mxu0 0
        %909 = vmatprep.subr.bf16.mxu0 0
        %910 = vmatpush1.bf16.msra.mxu0 0
        %911 = vmatprep.subr.bf16.mxu0 0
        %912 = vmatpush1.bf16.msra.mxu0 0
        %913 = vmatprep.subr.bf16.mxu0 0
        %914 = vmatpush1.bf16.msra.mxu0 0
        %915 = vmatprep.mubr.bf16.mxu0 0
        %916 = vmatmul.mubr.bf16.gmra.mrb[0].mxu0 %v769
        %v917 = vpop.f32.mrb[0].mxu0
        %v918 = vadd.f32 0.0, %v917
        %v919 = vpop.f32.mrb[0].mxu0
        %v920 = vpop.f32.mrb[0].mxu0
        %v921 = vadd.f32 0.0, %v920
        %v922 = vpop.f32.mrb[0].mxu0
        %923 = vmatprep.mubr.bf16.mxu0 0
        %924 = vmatmul.mubr.bf16.gmra.mrb[0].mxu0 %v772
        %v925 = vpop.f32.mrb[0].mxu0
        %v926 = vadd.f32 0.0, %v925
        %v927 = vpop.f32.mrb[0].mxu0
        %v928 = vpop.f32.mrb[0].mxu0
        %v929 = vadd.f32 0.0, %v928
        %v930 = vpop.f32.mrb[0].mxu0
        %931 = vmatprep.mubr.bf16.mxu0 0
        %932 = vmatmul.mubr.bf16.gmra.mrb[0].mxu0 %v775
        %v933 = vpop.f32.mrb[0].mxu0
        %v934 = vadd.f32 0.0, %v933
        %v935 = vpop.f32.mrb[0].mxu0
        %v936 = vpop.f32.mrb[0].mxu0
        %v937 = vadd.f32 0.0, %v936
        %v938 = vpop.f32.mrb[0].mxu0
        %939 = vmatprep.mubr.bf16.mxu0 0
        %940 = vmatmul.mubr.bf16.gmra.mrb[0].mxu0 %v778
        %v941 = vpop.f32.mrb[0].mxu0
        %v942 = vadd.f32 0.0, %v941
        %v943 = vpop.f32.mrb[0].mxu0
        %v944 = vpop.f32.mrb[0].mxu0
        %v945 = vadd.f32 0.0, %v944
        %v946 = vpop.f32.mrb[0].mxu0
        %947 = vmatprep.mubr.bf16.mxu0 0
        %948 = vmatmul.mubr.bf16.gmra.mrb[0].mxu0 %v781
        %v949 = vpop.f32.mrb[0].mxu0
        %v950 = vadd.f32 0.0, %v949
        %v951 = vpop.f32.mrb[0].mxu0
        %v952 = vpop.f32.mrb[0].mxu0
        %v953 = vadd.f32 0.0, %v952
        %v954 = vpop.f32.mrb[0].mxu0
        %955 = vmatprep.mubr.bf16.mxu0 0
        %956 = vmatmul.mubr.bf16.gmra.mrb[0].mxu0 %v784
        %v957 = vpop.f32.mrb[0].mxu0
        %v958 = vadd.f32 0.0, %v957
        %v959 = vpop.f32.mrb[0].mxu0
        %v960 = vpop.f32.mrb[0].mxu0
        %v961 = vadd.f32 0.0, %v960
        %v962 = vpop.f32.mrb[0].mxu0
        %963 = vmatprep.mubr.bf16.mxu0 0
        %964 = vmatmul.mubr.bf16.gmra.mrb[0].mxu0 %v787
        %v965 = vpop.f32.mrb[0].mxu0
        %v966 = vadd.f32 0.0, %v965
        %v967 = vpop.f32.mrb[0].mxu0
        %v968 = vpop.f32.mrb[0].mxu0
        %v969 = vadd.f32 0.0, %v968
        %v970 = vpop.f32.mrb[0].mxu0
        %971 = vmatprep.mubr.bf16.mxu0 0
        %972 = vmatmul.mubr.bf16.gmra.mrb[0].mxu0 %v790
        %v973 = vpop.f32.mrb[0].mxu0
        %v974 = vadd.f32 0.0, %v973
        %v975 = vpop.f32.mrb[0].mxu0
        %v976 = vpop.f32.mrb[0].mxu0
        %v977 = vadd.f32 0.0, %v976
        %v978 = vpop.f32.mrb[0].mxu0
        %979 = vmatprep.mubr.bf16.mxu0 0
        %980 = vmatmul.mubr.bf16.gmra.mrb[0].mxu0 %v793
        %v981 = vpop.f32.mrb[0].mxu0
        %v982 = vadd.f32 0.0, %v981
        %v983 = vpop.f32.mrb[0].mxu0
        %v984 = vpop.f32.mrb[0].mxu0
        %v985 = vadd.f32 0.0, %v984
        %v986 = vpop.f32.mrb[0].mxu0
        %987 = vmatprep.mubr.bf16.mxu0 0
        %988 = vmatmul.mubr.bf16.gmra.mrb[0].mxu0 %v796
        %v989 = vpop.f32.mrb[0].mxu0
        %v990 = vadd.f32 0.0, %v989
        %v991 = vpop.f32.mrb[0].mxu0
        %v992 = vpop.f32.mrb[0].mxu0
        %v993 = vadd.f32 0.0, %v992
        %v994 = vpop.f32.mrb[0].mxu0
        %995 = vmatprep.mubr.bf16.mxu0 0
        %996 = vmatmul.mubr.bf16.gmra.mrb[0].mxu0 %v799
        %v997 = vpop.f32.mrb[0].mxu0
        %v998 = vadd.f32 0.0, %v997
        %v999 = vpop.f32.mrb[0].mxu0
        %v1000 = vpop.f32.mrb[0].mxu0
        %v1001 = vadd.f32 0.0, %v1000
        %v1002 = vpop.f32.mrb[0].mxu0
        %1003 = vmatprep.mubr.bf16.mxu0 0
        %1004 = vmatmul.mubr.bf16.gmra.mrb[0].mxu0 %v802
        %v1005 = vpop.f32.mrb[0].mxu0
        %v1006 = vadd.f32 0.0, %v1005
        %v1007 = vpop.f32.mrb[0].mxu0
        %v1008 = vpop.f32.mrb[0].mxu0
        %v1009 = vadd.f32 0.0, %v1008
        %v1010 = vpop.f32.mrb[0].mxu0
        %1011 = vmatprep.mubr.bf16.mxu0 0
        %1012 = vmatmul.mubr.bf16.gmra.mrb[0].mxu0 %v805
        %v1013 = vpop.f32.mrb[0].mxu0
        %v1014 = vadd.f32 0.0, %v1013
        %v1015 = vpop.f32.mrb[0].mxu0
        %v1016 = vpop.f32.mrb[0].mxu0
        %v1017 = vadd.f32 0.0, %v1016
        %v1018 = vpop.f32.mrb[0].mxu0
        %1019 = vmatprep.mubr.bf16.mxu0 0
        %1020 = vmatmul.mubr.bf16.gmra.mrb[0].mxu0 %v808
        %v1021 = vpop.f32.mrb[0].mxu0
        %v1022 = vadd.f32 0.0, %v1021
        %v1023 = vpop.f32.mrb[0].mxu0
        %v1024 = vpop.f32.mrb[0].mxu0
        %v1025 = vadd.f32 0.0, %v1024
        %v1026 = vpop.f32.mrb[0].mxu0
        %1027 = vmatprep.mubr.bf16.mxu0 0
        %1028 = vmatmul.mubr.bf16.gmra.mrb[0].mxu0 %v811
        %v1029 = vpop.f32.mrb[0].mxu0
        %v1030 = vadd.f32 0.0, %v1029
        %v1031 = vpop.f32.mrb[0].mxu0
        %v1032 = vpop.f32.mrb[0].mxu0
        %v1033 = vadd.f32 0.0, %v1032
        %v1034 = vpop.f32.mrb[0].mxu0
        %1035 = vmatprep.mubr.bf16.mxu0 0
        %1036 = vmatmul.mubr.bf16.gmra.mrb[0].mxu0 %v814
        %v1037 = vpop.f32.mrb[0].mxu0
        %v1038 = vadd.f32 0.0, %v1037
        %v1039 = vpop.f32.mrb[0].mxu0
        %v1040 = vpop.f32.mrb[0].mxu0
        %v1041 = vadd.f32 0.0, %v1040
        %v1042 = vpop.f32.mrb[0].mxu0
        %1043 = vmatprep.mubr.bf16.mxu0 0
        %1044 = vmatmul.mubr.bf16.gmra.mrb[0].mxu0 %v817
        %v1045 = vpop.f32.mrb[0].mxu0
        %v1046 = vadd.f32 0.0, %v1045
        %v1047 = vpop.f32.mrb[0].mxu0
        %v1048 = vpop.f32.mrb[0].mxu0
        %v1049 = vadd.f32 0.0, %v1048
        %v1050 = vpop.f32.mrb[0].mxu0
        %1051 = vmatprep.mubr.bf16.mxu0 0
        %1052 = vmatmul.mubr.bf16.gmra.mrb[0].mxu0 %v820
        %v1053 = vpop.f32.mrb[0].mxu0
        %v1054 = vadd.f32 0.0, %v1053
        %v1055 = vpop.f32.mrb[0].mxu0
        %v1056 = vpop.f32.mrb[0].mxu0
        %v1057 = vadd.f32 0.0, %v1056
        %v1058 = vpop.f32.mrb[0].mxu0
        %1059 = vmatprep.mubr.bf16.mxu0 0
        %1060 = vmatmul.mubr.bf16.gmra.mrb[0].mxu0 %v823
        %v1061 = vpop.f32.mrb[0].mxu0
        %v1062 = vadd.f32 0.0, %v1061
        %v1063 = vpop.f32.mrb[0].mxu0
        %v1064 = vpop.f32.mrb[0].mxu0
        %v1065 = vadd.f32 0.0, %v1064
        %v1066 = vpop.f32.mrb[0].mxu0
        %1067 = vmatprep.mubr.bf16.mxu0 0
        %1068 = vmatmul.mubr.bf16.gmra.mrb[0].mxu0 %v826
        %v1069 = vpop.f32.mrb[0].mxu0
        %v1070 = vadd.f32 0.0, %v1069
        %v1071 = vpop.f32.mrb[0].mxu0
        %v1072 = vpop.f32.mrb[0].mxu0
        %v1073 = vadd.f32 0.0, %v1072
        %v1074 = vpop.f32.mrb[0].mxu0
        %1075 = vmatprep.mubr.bf16.mxu0 0
        %1076 = vmatmul.mubr.bf16.gmra.mrb[0].mxu0 %v829
        %v1077 = vpop.f32.mrb[0].mxu0
        %v1078 = vadd.f32 0.0, %v1077
        %v1079 = vpop.f32.mrb[0].mxu0
        %v1080 = vpop.f32.mrb[0].mxu0
        %v1081 = vadd.f32 0.0, %v1080
        %v1082 = vpop.f32.mrb[0].mxu0
        %1083 = vmatprep.mubr.bf16.mxu0 0
        %1084 = vmatmul.mubr.bf16.gmra.mrb[0].mxu0 %v832
        %v1085 = vpop.f32.mrb[0].mxu0
        %v1086 = vadd.f32 0.0, %v1085
        %v1087 = vpop.f32.mrb[0].mxu0
        %v1088 = vpop.f32.mrb[0].mxu0
        %v1089 = vadd.f32 0.0, %v1088
        %v1090 = vpop.f32.mrb[0].mxu0
        %1091 = vmatprep.mubr.bf16.mxu0 0
        %1092 = vmatmul.mubr.bf16.gmra.mrb[0].mxu0 %v835
        %v1093 = vpop.f32.mrb[0].mxu0
        %v1094 = vadd.f32 0.0, %v1093
        %v1095 = vpop.f32.mrb[0].mxu0
        %v1096 = vpop.f32.mrb[0].mxu0
        %v1097 = vadd.f32 0.0, %v1096
        %v1098 = vpop.f32.mrb[0].mxu0
        %1099 = vmatprep.mubr.bf16.mxu0 0
        %1100 = vmatmul.mubr.bf16.gmra.mrb[0].mxu0 %v838
        %v1101 = vpop.f32.mrb[0].mxu0
        %v1102 = vadd.f32 0.0, %v1101
        %v1103 = vpop.f32.mrb[0].mxu0
        %v1104 = vpop.f32.mrb[0].mxu0
        %v1105 = vadd.f32 0.0, %v1104
        %v1106 = vpop.f32.mrb[0].mxu0
        %1107 = vmatprep.mubr.bf16.mxu0 0
        %1108 = vmatmul.mubr.bf16.gmra.mrb[0].mxu0 %v841
        %v1109 = vpop.f32.mrb[0].mxu0
        %v1110 = vadd.f32 0.0, %v1109
        %v1111 = vpop.f32.mrb[0].mxu0
        %v1112 = vpop.f32.mrb[0].mxu0
        %v1113 = vadd.f32 0.0, %v1112
        %v1114 = vpop.f32.mrb[0].mxu0
        %1115 = vmatprep.mubr.bf16.mxu0 0
        %1116 = vmatmul.mubr.bf16.gmra.mrb[0].mxu0 %v844
        %v1117 = vpop.f32.mrb[0].mxu0
        %v1118 = vadd.f32 0.0, %v1117
        %v1119 = vpop.f32.mrb[0].mxu0
        %v1120 = vpop.f32.mrb[0].mxu0
        %v1121 = vadd.f32 0.0, %v1120
        %v1122 = vpop.f32.mrb[0].mxu0
        %1123 = vmatprep.mubr.bf16.mxu0 0
        %1124 = vmatmul.mubr.bf16.gmra.mrb[0].mxu0 %v847
        %v1125 = vpop.f32.mrb[0].mxu0
        %v1126 = vadd.f32 0.0, %v1125
        %v1127 = vpop.f32.mrb[0].mxu0
        %v1128 = vpop.f32.mrb[0].mxu0
        %v1129 = vadd.f32 0.0, %v1128
        %v1130 = vpop.f32.mrb[0].mxu0
        %1131 = vmatprep.mubr.bf16.mxu0 0
        %1132 = vmatmul.mubr.bf16.gmra.mrb[0].mxu0 %v850
        %v1133 = vpop.f32.mrb[0].mxu0
        %v1134 = vadd.f32 0.0, %v1133
        %v1135 = vpop.f32.mrb[0].mxu0
        %v1136 = vpop.f32.mrb[0].mxu0
        %v1137 = vadd.f32 0.0, %v1136
        %v1138 = vpop.f32.mrb[0].mxu0
        %1139 = vmatprep.mubr.bf16.mxu0 0
        %1140 = vmatmul.mubr.bf16.gmra.mrb[0].mxu0 %v853
        %v1141 = vpop.f32.mrb[0].mxu0
        %v1142 = vadd.f32 0.0, %v1141
        %v1143 = vpop.f32.mrb[0].mxu0
        %v1144 = vpop.f32.mrb[0].mxu0
        %v1145 = vadd.f32 0.0, %v1144
        %v1146 = vpop.f32.mrb[0].mxu0
        %1147 = vmatprep.mubr.bf16.mxu0 0
        %1148 = vmatmul.mubr.bf16.gmra.mrb[0].mxu0 %v856
        %v1149 = vpop.f32.mrb[0].mxu0
        %v1150 = vadd.f32 0.0, %v1149
        %v1151 = vpop.f32.mrb[0].mxu0
        %v1152 = vpop.f32.mrb[0].mxu0
        %v1153 = vadd.f32 0.0, %v1152
        %v1154 = vpop.f32.mrb[0].mxu0
        %1155 = vmatprep.mubr.bf16.mxu0 0
        %1156 = vmatmul.mubr.bf16.gmra.mrb[0].mxu0 %v859
        %v1157 = vpop.f32.mrb[0].mxu0
        %v1158 = vadd.f32 0.0, %v1157
        %v1159 = vpop.f32.mrb[0].mxu0
        %v1160 = vpop.f32.mrb[0].mxu0
        %v1161 = vadd.f32 0.0, %v1160
        %v1162 = vpop.f32.mrb[0].mxu0
        %1163 = vmatprep.mubr.bf16.mxu0 0
        %1164 = vmatmul.mubr.bf16.gmra.mrb[0].mxu0 %v862
        %v1165 = vpop.f32.mrb[0].mxu0
        %v1166 = vadd.f32 0.0, %v1165
        %v1167 = vpop.f32.mrb[0].mxu0
        %v1168 = vpop.f32.mrb[0].mxu0
        %v1169 = vadd.f32 0.0, %v1168
        %v1170 = vpop.f32.mrb[0].mxu0
        %1171 = vmatprep.mubr.bf16.mxu0 0
        %1172 = vmatmul.mubr.bf16.gmra.mrb[0].mxu0 %v865
        %v1173 = vpop.f32.mrb[0].mxu0
        %v1174 = vadd.f32 0.0, %v1173
        %v1175 = vpop.f32.mrb[0].mxu0
        %v1176 = vpop.f32.mrb[0].mxu0
        %v1177 = vadd.f32 0.0, %v1176
        %v1178 = vpop.f32.mrb[0].mxu0
        %1179 = vmatprep.mubr.bf16.mxu0 0
        %1180 = vmatmul.mubr.bf16.gmra.mrb[0].mxu0 %v868
        %v1181 = vpop.f32.mrb[0].mxu0
        %v1182 = vadd.f32 0.0, %v1181
        %v1183 = vpop.f32.mrb[0].mxu0
        %v1184 = vpop.f32.mrb[0].mxu0
        %v1185 = vadd.f32 0.0, %v1184
        %v1186 = vpop.f32.mrb[0].mxu0
        %1187 = vmatprep.mubr.bf16.mxu0 0
        %1188 = vmatmul.mubr.bf16.gmra.mrb[0].mxu0 %v871
        %v1189 = vpop.f32.mrb[0].mxu0
        %v1190 = vadd.f32 0.0, %v1189
        %v1191 = vpop.f32.mrb[0].mxu0
        %v1192 = vpop.f32.mrb[0].mxu0
        %v1193 = vadd.f32 0.0, %v1192
        %v1194 = vpop.f32.mrb[0].mxu0
        %1195 = vmatprep.mubr.bf16.mxu0 0
        %1196 = vmatmul.mubr.bf16.gmra.mrb[0].mxu0 %v874
        %v1197 = vpop.f32.mrb[0].mxu0
        %v1198 = vadd.f32 0.0, %v1197
        %v1199 = vpop.f32.mrb[0].mxu0
        %v1200 = vpop.f32.mrb[0].mxu0
        %v1201 = vadd.f32 0.0, %v1200
        %v1202 = vpop.f32.mrb[0].mxu0
        %1203 = vdwg.mxu0
        %v1204 = vmax.f32 %v918, %v990
        %v1205 = vmax.f32 %v921, %v993
        %v1206 = vmax.f32 %v926, %v998
        %v1207 = vmax.f32 %v929, %v1001
        %v1208 = vmax.f32 %v934, %v1006
        %v1209 = vmax.f32 %v937, %v1009
        %v1210 = vmax.f32 %v942, %v1014
        %v1211 = vmax.f32 %v945, %v1017
        %v1212 = vmax.f32 %v950, %v1022
        %v1213 = vmax.f32 %v953, %v1025
        %v1214 = vmax.f32 %v958, %v1030
        %v1215 = vmax.f32 %v961, %v1033
        %v1216 = vmax.f32 %v966, %v1038
        %v1217 = vmax.f32 %v969, %v1041
        %v1218 = vmax.f32 %v974, %v1046
        %v1219 = vmax.f32 %v977, %v1049
        %v1220 = vmax.f32 %v982, %v1054
        %v1221 = vmax.f32 %v985, %v1057
        %v1222 = vmax.f32 %v1062, %v1134
        %v1223 = vmax.f32 %v1065, %v1137
        %v1224 = vmax.f32 %v1070, %v1142
        %v1225 = vmax.f32 %v1073, %v1145
        %v1226 = vmax.f32 %v1078, %v1150
        %v1227 = vmax.f32 %v1081, %v1153
        %v1228 = vmax.f32 %v1086, %v1158
        %v1229 = vmax.f32 %v1089, %v1161
        %v1230 = vmax.f32 %v1094, %v1166
        %v1231 = vmax.f32 %v1097, %v1169
        %v1232 = vmax.f32 %v1102, %v1174
        %v1233 = vmax.f32 %v1105, %v1177
        %v1234 = vmax.f32 %v1110, %v1182
        %v1235 = vmax.f32 %v1113, %v1185
        %v1236 = vmax.f32 %v1118, %v1190
        %v1237 = vmax.f32 %v1121, %v1193
        %v1238 = vmax.f32 %v1126, %v1198
        %v1239 = vmax.f32 %v1129, %v1201
        %v1240 = vmax.f32 %v1204, %v1222
        %v1241 = vmax.f32 %v1205, %v1223
        %v1242 = vmax.f32 %v1206, %v1224
        %v1243 = vmax.f32 %v1207, %v1225
        %v1244 = vmax.f32 %v1208, %v1226
        %v1245 = vmax.f32 %v1209, %v1227
        %v1246 = vmax.f32 %v1210, %v1228
        %v1247 = vmax.f32 %v1211, %v1229
        %v1248 = vmax.f32 %v1212, %v1230
        %v1249 = vmax.f32 %v1213, %v1231
        %v1250 = vmax.f32 %v1214, %v1232
        %v1251 = vmax.f32 %v1215, %v1233
        %v1252 = vmax.f32 %v1216, %v1234
        %v1253 = vmax.f32 %v1217, %v1235
        %v1254 = vmax.f32 %v1218, %v1236
        %v1255 = vmax.f32 %v1219, %v1237
        %v1256 = vmax.f32 %v1220, %v1238
        %v1257 = vmax.f32 %v1221, %v1239
        %v1258 = vld [vmem:[%s2] sm:$0x1]
        %v1260 = vlaneseq
        %v1261 = vshrl.u32 %v1260, 7
        %v1262 = vsub.s32 0, %v1261
        %v1263 = vrot.slane %v1258, %v1262
        %v1265 = vadd.f32 %v1240, %v1263
        %v1266 = vadd.f32 %v1241, %v1263
        %v1267 = vadd.f32 %v1242, %v1263
        %v1268 = vadd.f32 %v1243, %v1263
        %v1269 = vadd.f32 %v1244, %v1263
        %v1270 = vadd.f32 %v1245, %v1263
        %v1271 = vadd.f32 %v1246, %v1263
        %v1272 = vadd.f32 %v1247, %v1263
        %v1273 = vadd.f32 %v1248, %v1263
        %v1274 = vadd.f32 %v1249, %v1263
        %v1275 = vadd.f32 %v1250, %v1263
        %v1276 = vadd.f32 %v1251, %v1263
        %v1277 = vadd.f32 %v1252, %v1263
        %v1278 = vadd.f32 %v1253, %v1263
        %v1279 = vadd.f32 %v1254, %v1263
        %v1280 = vadd.f32 %v1255, %v1263
        %v1281 = vadd.f32 %v1256, %v1263
        %v1282 = vadd.f32 %v1257, %v1263
        %v1283 = vmax.f32 %v1265, 0.0
        %v1284 = vmax.f32 %v1266, 0.0
        %v1285 = vmax.f32 %v1267, 0.0
        %v1286 = vmax.f32 %v1268, 0.0
        %v1287 = vmax.f32 %v1269, 0.0
        %v1288 = vmax.f32 %v1270, 0.0
        %v1289 = vmax.f32 %v1271, 0.0
        %v1290 = vmax.f32 %v1272, 0.0
        %v1291 = vmax.f32 %v1273, 0.0
        %v1292 = vmax.f32 %v1274, 0.0
        %v1293 = vmax.f32 %v1275, 0.0
        %v1294 = vmax.f32 %v1276, 0.0
        %v1295 = vmax.f32 %v1277, 0.0
        %v1296 = vmax.f32 %v1278, 0.0
        %v1297 = vmax.f32 %v1279, 0.0
        %v1298 = vmax.f32 %v1280, 0.0
        %v1299 = vmax.f32 %v1281, 0.0
        %v1300 = vmax.f32 %v1282, 0.0
        %v1301 = vpack.c.bf16 %v1284, %v1283
        %v1302 = vpack.c.bf16 %v1286, %v1285
        %v1303 = vpack.c.bf16 %v1288, %v1287
        %v1304 = vpack.c.bf16 %v1290, %v1289
        %v1305 = vpack.c.bf16 %v1292, %v1291
        %v1306 = vpack.c.bf16 %v1294, %v1293
        %v1307 = vpack.c.bf16 %v1296, %v1295
        %v1308 = vpack.c.bf16 %v1298, %v1297
        %v1309 = vpack.c.bf16 %v1300, %v1299
        %v1319 = vunpack.c.l.b16 %v1301
        %v1320 = vunpack.c.h.b16 %v1301
        %v1321 = vunpack.c.l.b16 %v1302
        %v1322 = vunpack.c.h.b16 %v1302
        %v1323 = vunpack.c.l.b16 %v1303
        %v1324 = vunpack.c.h.b16 %v1303
        %v1325 = vunpack.c.l.b16 %v1304
        %v1326 = vunpack.c.h.b16 %v1304
        %v1327 = vunpack.c.l.b16 %v1305
        %v1328 = vunpack.c.h.b16 %v1305
        %v1329 = vunpack.c.l.b16 %v1306
        %v1330 = vunpack.c.h.b16 %v1306
        %v1331 = vunpack.c.l.b16 %v1307
        %v1332 = vunpack.c.h.b16 %v1307
        %v1333 = vunpack.c.l.b16 %v1308
        %v1334 = vunpack.c.h.b16 %v1308
        %v1335 = vunpack.c.l.b16 %v1309
        %v1336 = vunpack.c.h.b16 %v1309
        %v1337 = vpack.c.b16 %v1319, %v1319
        %v1338 = vpack.c.b16 %v1320, %v1320
        %v1339 = vpack.c.b16 %v1321, %v1321
        %v1340 = vpack.c.b16 %v1322, %v1322
        %v1341 = vpack.c.b16 %v1323, %v1323
        %v1342 = vpack.c.b16 %v1324, %v1324
        %v1343 = vpack.c.b16 %v1325, %v1325
        %v1344 = vpack.c.b16 %v1326, %v1326
        %v1345 = vpack.c.b16 %v1327, %v1327
        %v1346 = vpack.c.b16 %v1328, %v1328
        %v1347 = vpack.c.b16 %v1329, %v1329
        %v1348 = vpack.c.b16 %v1330, %v1330
        %v1349 = vpack.c.b16 %v1331, %v1331
        %v1350 = vpack.c.b16 %v1332, %v1332
        %v1351 = vpack.c.b16 %v1333, %v1333
        %v1352 = vpack.c.b16 %v1334, %v1334
        %v1353 = vpack.c.b16 %v1335, %v1335
        %v1354 = vpack.c.b16 %v1336, %v1336
        %vm1373 = vcmask 224256
        %1374 = vst.msk [vmem:[%s497] sm:$0xf] %vm1373, %v1337
        %1375 = vst.msk [vmem:[%s497 + $0x4] sm:$0xf] %vm1373, %v1338
        %1376 = vst.msk [vmem:[%s497 + $0x8] sm:$0xf] %vm1373, %v1339
        %1377 = vst.msk [vmem:[%s497 + $0xc] sm:$0xf] %vm1373, %v1340
        %1378 = vst.msk [vmem:[%s497 + $0x10] sm:$0xf] %vm1373, %v1341
        %1379 = vst.msk [vmem:[%s497 + $0x14] sm:$0xf] %vm1373, %v1342
        %1380 = vst.msk [vmem:[%s497 + $0x18] sm:$0xf] %vm1373, %v1343
        %1381 = vst.msk [vmem:[%s497 + $0x1c] sm:$0xf] %vm1373, %v1344
        %1382 = vst.msk [vmem:[%s497 + $0x20] sm:$0xf] %vm1373, %v1345
        %1383 = vst.msk [vmem:[%s497 + $0x24] sm:$0xf] %vm1373, %v1346
        %1384 = vst.msk [vmem:[%s497 + $0x28] sm:$0xf] %vm1373, %v1347
        %1385 = vst.msk [vmem:[%s497 + $0x2c] sm:$0xf] %vm1373, %v1348
        %1386 = vst.msk [vmem:[%s497 + $0x30] sm:$0xf] %vm1373, %v1349
        %1387 = vst.msk [vmem:[%s497 + $0x34] sm:$0xf] %vm1373, %v1350
        %1388 = vst.msk [vmem:[%s497 + $0x38] sm:$0xf] %vm1373, %v1351
        %1389 = vst.msk [vmem:[%s497 + $0x3c] sm:$0xf] %vm1373, %v1352
        %1390 = vst.msk [vmem:[%s497 + $0x40] sm:$0xf] %vm1373, %v1353
        %1391 = vst.msk [vmem:[%s497 + $0x44] sm:$0xf] %vm1373, %v1354
        %s1392 = smul.u32 18, %s14
        %p1393 = scmp.lt.s32.totalorder %s1392, 35
        %s1394 = scalar_select %p1393, %s1392, 35
        %s1395 = smul.addr %s1394, 4
        %s1396 = scalar_lea.vmem %s3, %s1395
        // Predicated region
        $region74: #{net_distillation_forward.3} parent=68 // pred_check
          %p1397 = pneg %p100
        $region75: #{net_distillation_forward.3} parent=68 // pred_check_branch
          %1399 = sbr.rel (%p1397) target = $region77
        $region76: #{net_distillation_forward.3} parent=68 // pred_region
          %s1400 = smul.u32 18, %s14
        $region77: #{net_distillation_forward.3} parent=68 // pred_fallthru
          _
      $region69: #{net_distillation_forward.3} parent=5 // pred_fallthru
        _
      %p1401 = scmp.le.s32.totalorder 2, %s9
      // Predicated region
      $region78: #{net_distillation_forward.3} parent=5 // pred_check
        %p1402 = pneg %p1401
      $region79: #{net_distillation_forward.3} parent=5 // pred_check_branch
        %1404 = sbr.rel (%p1402) target = $region81
      $region80: #{net_distillation_forward.3} parent=5 // pred_region
        %s1405 = ssub.s32 %s9, 2
        // Predicated region
        $region82: #{net_distillation_forward.3} parent=80 // pred_check
          %p1406 = pneg %p106
        $region83: #{net_distillation_forward.3} parent=80 // pred_check_branch
          %1408 = sbr.rel (%p1406) target = $region85
        $region84: #{net_distillation_forward.3} parent=80 // pred_region
          %s1409 = smul.u32 18, %s15
          %p1410 = scmp.lt.s32.totalorder %s1409, 35
          %s1411 = scalar_select %p1410, %s1409, 35
          %s1412 = smul.addr %s1411, 4
          %s1413 = scalar_lea.vmem %s3, %s1412
        $region85: #{net_distillation_forward.3} parent=80 // pred_fallthru
          _
      $region81: #{net_distillation_forward.3} parent=5 // pred_fallthru
        _
    $region6: #{net_distillation_forward.3} parent=1 // loop_footer
      %s13 = sadd.s32 1, %s9
    $region7: #{net_distillation_forward.3} parent=1 // loop_footer_branch
      %8 = sbr.rel target = $region3
    $region8: #{net_distillation_forward.3} parent=1 // loop_exit
      _

// kernel: net_distillation_forward.4
$region0: #{net_distillation_forward.4}
  #allocation0 [shape = 'u32[]', space=smem, size = 0x4, offset = 0x4, fixed_abs, tag = 'smem constant byte address 0x4 - core index']
  #allocation1 [shape = 'u32[144,128]{1,0:T(1,128)}', space=vmem, size = 0x12000, scoped, tag = 'internal scratch']
  %s0 = inlined_call_operand.vmem [shape: bf16[4,72,252], index: 0, kind: input, shape index: {}]
  %s1 = inlined_call_operand.vmem [shape: bf16[252,42], index: 1, kind: input, shape index: {}]
  %s2 = inlined_call_operand.vmem [shape: f32[1,42], index: 2, kind: input, shape index: {}]
  %s3 = inlined_call_operand.vmem [shape: bf16[72,42], index: 3, kind: output, shape index: {}]
  %s4 = sld [smem:[#allocation0]]
  $region141: #{net_distillation_forward.4} parent=0
    _
  %s6 = ssub.s32 1, %s4
  %s7 = scalar_select 0, %s6, %s4
  $region1: #{net_distillation_forward.4} parent=0
    #allocation2 [shape = 'u8[163840]{0}', space=vmem, size = 0x28000, scoped, tag = 'input window, operand 0']
    #allocation3 [shape = 'u8[20480]{0}', space=vmem, size = 0x5000, scoped, tag = 'output window, operand 0']
    loop: start=0, step=1, limit=4
    $region2: #{net_distillation_forward.4} parent=1 // loop_pre_header
      _
    $region3: #{net_distillation_forward.4} parent=1 // loop_header
      %s9 = sphi 0, %s13
      %p10 = scmp.ge.s32.totalorder %s9, 4
      %s19 = sphi 0, %s21
      %s22 = sphi 0, %s19
      %s23 = sphi 0, %s22
      %s39 = sphi 0, %s23
      %s43 = sphi 0, %s43
      %s45 = sphi 0, %s43
      %s46 = sphi 0, %s45
      %s60 = sphi 0, %s46
      %s64 = sphi 0, %s64
      %s66 = sphi 0, %s64
      %s67 = sphi 0, %s66
      %s81 = sphi 0, %s67
      %s87 = sphi 0, %s89
      %s90 = sphi 0, %s87
      %s91 = sphi 0, %s90
      %s107 = sphi 0, %s91
    $region4: #{net_distillation_forward.4} parent=1 // loop_header_branch
      %12 = sbr.rel (%p10) target = $region8
    $region5: #{net_distillation_forward.4} parent=1 // loop_body
      %s14 = ssub.s32 %s9, 1
      %s15 = ssub.s32 %s9, 2
      %s16 = sadd.s32 %s9, 1
      %s17 = ssub.s32 %s9, %s16
      %p18 = scmp.eq.s32.totalorder %s17, 0
      %s20 = sadd.s32 %s19, 1
      %s21 = scalar_select %p18, %s19, %s20
      %p24 = pneg %p18
      %p25 = scmp.eq.s32.totalorder %s9, 1
      %p26 = por %p24, %p25
      %p27 = scmp.ne.s32.totalorder %s19, %s22
      %p28 = scmp.eq.s32.totalorder %s9, 0
      %p29 = por %p27, %p28
      %p30 = scmp.ne.s32.totalorder %s19, %s22
      %p31 = scmp.eq.s32.totalorder %s14, 1
      %p32 = por %p30, %p31
      %p33 = scmp.ne.s32.totalorder %s22, %s23
      %p34 = scmp.eq.s32.totalorder %s14, 0
      %p35 = por %p33, %p34
      %p36 = scmp.ne.s32.totalorder %s22, %s23
      %p37 = scmp.eq.s32.totalorder %s15, 1
      %p38 = por %p36, %p37
      %p40 = scmp.ne.s32.totalorder %s23, %s39
      %p41 = scmp.eq.s32.totalorder %s15, 0
      %p42 = por %p40, %p41
      %s44 = sadd.s32 %s43, 1
      %p47 = scmp.eq.s32.totalorder %s9, 1
      %p48 = scmp.ne.s32.totalorder %s43, %s45
      %p49 = scmp.eq.s32.totalorder %s9, 0
      %p50 = por %p48, %p49
      %p51 = scmp.ne.s32.totalorder %s43, %s45
      %p52 = scmp.eq.s32.totalorder %s14, 1
      %p53 = por %p51, %p52
      %p54 = scmp.ne.s32.totalorder %s45, %s46
      %p55 = scmp.eq.s32.totalorder %s14, 0
      %p56 = por %p54, %p55
      %p57 = scmp.ne.s32.totalorder %s45, %s46
      %p58 = scmp.eq.s32.totalorder %s15, 1
      %p59 = por %p57, %p58
      %p61 = scmp.ne.s32.totalorder %s46, %s60
      %p62 = scmp.eq.s32.totalorder %s15, 0
      %p63 = por %p61, %p62
      %s65 = sadd.s32 %s64, 1
      %p68 = scmp.eq.s32.totalorder %s9, 1
      %p69 = scmp.ne.s32.totalorder %s64, %s66
      %p70 = scmp.eq.s32.totalorder %s9, 0
      %p71 = por %p69, %p70
      %p72 = scmp.ne.s32.totalorder %s64, %s66
      %p73 = scmp.eq.s32.totalorder %s14, 1
      %p74 = por %p72, %p73
      %p75 = scmp.ne.s32.totalorder %s66, %s67
      %p76 = scmp.eq.s32.totalorder %s14, 0
      %p77 = por %p75, %p76
      %p78 = scmp.ne.s32.totalorder %s66, %s67
      %p79 = scmp.eq.s32.totalorder %s15, 1
      %p80 = por %p78, %p79
      %p82 = scmp.ne.s32.totalorder %s67, %s81
      %p83 = scmp.eq.s32.totalorder %s15, 0
      %p84 = por %p82, %p83
      %s85 = ssub.s32 %s9, %s16
      %p86 = scmp.eq.s32.totalorder %s85, 0
      %s88 = sadd.s32 %s87, 1
      %s89 = scalar_select %p86, %s87, %s88
      %p92 = pneg %p86
      %p93 = scmp.eq.s32.totalorder %s9, 1
      %p94 = por %p92, %p93
      %p95 = scmp.ne.s32.totalorder %s87, %s90
      %p96 = scmp.eq.s32.totalorder %s9, 0
      %p97 = por %p95, %p96
      %p98 = scmp.ne.s32.totalorder %s87, %s90
      %p99 = scmp.eq.s32.totalorder %s14, 1
      %p100 = por %p98, %p99
      %p101 = scmp.ne.s32.totalorder %s90, %s91
      %p102 = scmp.eq.s32.totalorder %s14, 0
      %p103 = por %p101, %p102
      %p104 = scmp.ne.s32.totalorder %s90, %s91
      %p105 = scmp.eq.s32.totalorder %s15, 1
      %p106 = por %p104, %p105
      %p108 = scmp.ne.s32.totalorder %s91, %s107
      %p109 = scmp.eq.s32.totalorder %s15, 0
      %p110 = por %p108, %p109
      %p111 = scmp.le.s32.totalorder 1, %s9
      %p112 = scmp.lt.s32.totalorder %s9, 3
      %p113 = pnand %p111, %p112
      %p114 = pneg %p113
      // Predicated region
      $region9: #{net_distillation_forward.4} parent=5 // pred_check
        _
      $region10: #{net_distillation_forward.4} parent=5 // pred_check_branch
        %116 = sbr.rel (%p113) target = $region12
      $region11: #{net_distillation_forward.4} parent=5 // pred_region
        %s117 = ssub.s32 %s9, 1
        // Predicated region
        $region13: #{net_distillation_forward.4} parent=11 // pred_check
          %p118 = pneg %p56
        $region14: #{net_distillation_forward.4} parent=11 // pred_check_branch
          %120 = sbr.rel (%p118) target = $region16
        $region15: #{net_distillation_forward.4} parent=11 // pred_region
          _
        $region16: #{net_distillation_forward.4} parent=11 // pred_fallthru
          _
        // Predicated region
        $region17: #{net_distillation_forward.4} parent=11 // pred_check
          %p121 = pneg %p77
        $region18: #{net_distillation_forward.4} parent=11 // pred_check_branch
          %123 = sbr.rel (%p121) target = $region20
        $region19: #{net_distillation_forward.4} parent=11 // pred_region
          _
        $region20: #{net_distillation_forward.4} parent=11 // pred_fallthru
          _
      $region12: #{net_distillation_forward.4} parent=5 // pred_fallthru
        _
      %p124 = scmp.lt.s32.totalorder %s9, 2
      // Predicated region
      $region21: #{net_distillation_forward.4} parent=5 // pred_check
        %p125 = pneg %p124
      $region22: #{net_distillation_forward.4} parent=5 // pred_check_branch
        %127 = sbr.rel (%p125) target = $region24
      $region23: #{net_distillation_forward.4} parent=5 // pred_region
        // Predicated region
        $region25: #{net_distillation_forward.4} parent=23 // pred_check
          %p128 = pneg %p29
        $region26: #{net_distillation_forward.4} parent=23 // pred_check_branch
          %130 = sbr.rel (%p128) target = $region28
        $region27: #{net_distillation_forward.4} parent=23 // pred_region
          %s131 = sand.u32 %s19, 1
          %s132 = sand.u32 %s19, 1
          %s133 = smul.addr %s132, 160
          %s134 = scalar_lea.vmem [#allocation2], %s133
          %s135 = smul.u32 5, %s9
          %s136 = ssub.s32 9, %s135
          %p137 = scmp.lt.s32.totalorder %s136, 5
          %s138 = scalar_select %p137, %s136, 5
          %s139 = smul.u32 256, %s138
          %s140 = smul.u32 %s139, 2
          %p141 = scmp.ne.s32.totalorder 0, %s140
          %s142 = smul.addr %s135, 2
          %s143 = smul.addr %s142, 4
          %s144 = scalar_lea.vmem %s0, %s143
          // Predicated region
          $region29: #{net_distillation_forward.4} parent=27 // pred_check
            %p145 = pneg %p141
          $region30: #{net_distillation_forward.4} parent=27 // pred_check_branch
            %147 = sbr.rel (%p145) target = $region32
          $region31: #{net_distillation_forward.4} parent=27 // pred_region
            // Predicated region
            $region33: #{net_distillation_forward.4} parent=31 // pred_check
              _
            $region34: #{net_distillation_forward.4} parent=31 // pred_check_branch
              %149 = sbr.rel (0) target = $region36
            $region35: #{net_distillation_forward.4} parent=31 // pred_region
              // Predicated region
              $region55: #{net_distillation_forward.4} parent=35 // pred_check
                _
              $region56: #{net_distillation_forward.4} parent=35 // pred_check_branch
                %243 = sbr.rel (0) target = $region58
              $region57: #{net_distillation_forward.4} parent=35 // pred_region
                %s244 = sdiv.u32.pop %s138, 5
                %s245 = srem.u32.pop %s138, 5
                // While loop
                $region59: #{net_distillation_forward.4} parent=57 // loop_pre_header
                  _
                $region60: #{net_distillation_forward.4} parent=57 // loop_header
                  %s247 = sphi 0, %s249
                  %p248 = scmp.ge.s32.totalorder %s247, %s244
                  %s252 = sphi 0, %s297
                  %s253 = sphi %s144, %s300
                  %s254 = sphi %s134, %s301
                $region61: #{net_distillation_forward.4} parent=57 // loop_header_branch
                  %251 = sbr.rel (%p248) target = $region65
                $region62: #{net_distillation_forward.4} parent=57 // loop_body
                  %v255 = vld [vmem:[%s253] sm:$0xff]
                  %256 = vst [vmem:[%s254] sm:$0xff] %v255
                  %v257 = vld [vmem:[%s253 + $0x8] sm:$0xff]
                  %258 = vst [vmem:[%s254 + $0x8] sm:$0xff] %v257
                  %v259 = vld [vmem:[%s253 + $0x10] sm:$0xff]
                  %260 = vst [vmem:[%s254 + $0x10] sm:$0xff] %v259
                  %v261 = vld [vmem:[%s253 + $0x18] sm:$0xff]
                  %262 = vst [vmem:[%s254 + $0x18] sm:$0xff] %v261
                  %v263 = vld [vmem:[%s253 + $0x20] sm:$0xff]
                  %264 = vst [vmem:[%s254 + $0x20] sm:$0xff] %v263
                  %v265 = vld [vmem:[%s253 + $0x48] sm:$0xff]
                  %266 = vst [vmem:[%s254 + $0x28] sm:$0xff] %v265
                  %v267 = vld [vmem:[%s253 + $0x50] sm:$0xff]
                  %268 = vst [vmem:[%s254 + $0x30] sm:$0xff] %v267
                  %v269 = vld [vmem:[%s253 + $0x58] sm:$0xff]
                  %270 = vst [vmem:[%s254 + $0x38] sm:$0xff] %v269
                  %v271 = vld [vmem:[%s253 + $0x60] sm:$0xff]
                  %272 = vst [vmem:[%s254 + $0x40] sm:$0xff] %v271
                  %v273 = vld [vmem:[%s253 + $0x68] sm:$0xff]
                  %274 = vst [vmem:[%s254 + $0x48] sm:$0xff] %v273
                  %v275 = vld [vmem:[%s253 + $0x90] sm:$0xff]
                  %276 = vst [vmem:[%s254 + $0x50] sm:$0xff] %v275
                  %v277 = vld [vmem:[%s253 + $0x98] sm:$0xff]
                  %278 = vst [vmem:[%s254 + $0x58] sm:$0xff] %v277
                  %v279 = vld [vmem:[%s253 + $0xa0] sm:$0xff]
                  %280 = vst [vmem:[%s254 + $0x60] sm:$0xff] %v279
                  %v281 = vld [vmem:[%s253 + $0xa8] sm:$0xff]
                  %282 = vst [vmem:[%s254 + $0x68] sm:$0xff] %v281
                  %v283 = vld [vmem:[%s253 + $0xb0] sm:$0xff]
                  %284 = vst [vmem:[%s254 + $0x70] sm:$0xff] %v283
                  %v285 = vld [vmem:[%s253 + $0xd8] sm:$0xff]
                  %286 = vst [vmem:[%s254 + $0x78] sm:$0xff] %v285
                  %v287 = vld [vmem:[%s253 + $0xe0] sm:$0xff]
                  %288 = vst [vmem:[%s254 + $0x80] sm:$0xff] %v287
                  %v289 = vld [vmem:[%s253 + $0xe8] sm:$0xff]
                  %290 = vst [vmem:[%s254 + $0x88] sm:$0xff] %v289
                  %v291 = vld [vmem:[%s253 + $0xf0] sm:$0xff]
                  %292 = vst [vmem:[%s254 + $0x90] sm:$0xff] %v291
                  %v293 = vld [vmem:[%s253 + $0xf8] sm:$0xff]
                  %294 = vst [vmem:[%s254 + $0x98] sm:$0xff] %v293
                  %s295 = sadd.s32 1, %s252
                  %p296 = scmp.ge.s32.totalorder %s295, %s244
                  %s297 = scalar_select %p296, 0, %s295
                  %s298 = smul.u32 %s297, 40
                  %s299 = smul.u32 %s297, 40
                  %s300 = scalar_lea.vmem %s144, %s298
                  %s301 = scalar_lea.vmem %s134, %s299 [#allocation2]
                $region63: #{net_distillation_forward.4} parent=57 // loop_footer
                  %s249 = sadd.s32 %s247, 1
                $region64: #{net_distillation_forward.4} parent=57 // loop_footer_branch
                  %246 = sbr.rel target = $region60
                $region65: #{net_distillation_forward.4} parent=57 // loop_exit
                  _
                %s302 = sdiv.u32.pop %s138, 5
                %s303 = srem.u32.pop %s138, 5
                %s304 = smul.u32 %s302, 5
                %s305 = smul.u32 8, %s304
                %s306 = scalar_lea.vmem %s144, %s305
                %s307 = smul.u32 8, %s304
                %s308 = scalar_lea.vmem %s134, %s307 [#allocation2]
                // While loop
                $region66: #{net_distillation_forward.4} parent=57 // loop_pre_header
                  _
                $region67: #{net_distillation_forward.4} parent=57 // loop_header
                  %s310 = sphi 0, %s312
                  %p311 = scmp.ge.s32.totalorder %s310, %s303
                  %s315 = sphi 0, %s328
                  %s316 = sphi %s306, %s331
                  %s317 = sphi %s308, %s332
                $region68: #{net_distillation_forward.4} parent=57 // loop_header_branch
                  %314 = sbr.rel (%p311) target = $region72
                $region69: #{net_distillation_forward.4} parent=57 // loop_body
                  %v318 = vld [vmem:[%s316] sm:$0xff]
                  %319 = vst [vmem:[%s317] sm:$0xff] %v318
                  %v320 = vld [vmem:[%s316 + $0x48] sm:$0xff]
                  %321 = vst [vmem:[%s317 + $0x28] sm:$0xff] %v320
                  %v322 = vld [vmem:[%s316 + $0x90] sm:$0xff]
                  %323 = vst [vmem:[%s317 + $0x50] sm:$0xff] %v322
                  %v324 = vld [vmem:[%s316 + $0xd8] sm:$0xff]
                  %325 = vst [vmem:[%s317 + $0x78] sm:$0xff] %v324
                  %s326 = sadd.s32 1, %s315
                  %p327 = scmp.ge.s32.totalorder %s326, %s303
                  %s328 = scalar_select %p327, 0, %s326
                  %s329 = smul.u32 %s328, 8
                  %s330 = smul.u32 %s328, 8
                  %s331 = scalar_lea.vmem %s306, %s329
                  %s332 = scalar_lea.vmem %s308, %s330 [#allocation2]
                $region70: #{net_distillation_forward.4} parent=57 // loop_footer
                  %s312 = sadd.s32 %s310, 1
                $region71: #{net_distillation_forward.4} parent=57 // loop_footer_branch
                  %309 = sbr.rel target = $region67
                $region72: #{net_distillation_forward.4} parent=57 // loop_exit
                  _
              $region58: #{net_distillation_forward.4} parent=35 // pred_fallthru
                _
              // Predicated region
              $region73: #{net_distillation_forward.4} parent=35 // pred_check
                _
              $region74: #{net_distillation_forward.4} parent=35 // pred_check_branch
                %334 = sbr.rel target = $region76
              $region75: #{net_distillation_forward.4} parent=35 // pred_region
                _
              $region76: #{net_distillation_forward.4} parent=35 // pred_fallthru
                _
            $region36: #{net_distillation_forward.4} parent=31 // pred_fallthru
              _
            // Predicated region
            $region37: #{net_distillation_forward.4} parent=31 // pred_check
              _
            $region38: #{net_distillation_forward.4} parent=31 // pred_check_branch
              %151 = sbr.rel target = $region40
            $region39: #{net_distillation_forward.4} parent=31 // pred_region
              %s153 = sdiv.u32.pop %s138, 5
              %s154 = srem.u32.pop %s138, 5
              // While loop
              $region41: #{net_distillation_forward.4} parent=39 // loop_pre_header
                _
              $region42: #{net_distillation_forward.4} parent=39 // loop_header
                %s156 = sphi 0, %s158
                %p157 = scmp.ge.s32.totalorder %s156, %s153
                %s161 = sphi 0, %s206
                %s162 = sphi %s144, %s209
                %s163 = sphi %s134, %s210
              $region43: #{net_distillation_forward.4} parent=39 // loop_header_branch
                %160 = sbr.rel (%p157) target = $region47
              $region44: #{net_distillation_forward.4} parent=39 // loop_body
                %v164 = vld [vmem:[%s162] sm:$0xff]
                %165 = vst [vmem:[%s163] sm:$0xff] %v164
                %v166 = vld [vmem:[%s162 + $0x8] sm:$0xff]
                %167 = vst [vmem:[%s163 + $0x8] sm:$0xff] %v166
                %v168 = vld [vmem:[%s162 + $0x10] sm:$0xff]
                %169 = vst [vmem:[%s163 + $0x10] sm:$0xff] %v168
                %v170 = vld [vmem:[%s162 + $0x18] sm:$0xff]
                %171 = vst [vmem:[%s163 + $0x18] sm:$0xff] %v170
                %v172 = vld [vmem:[%s162 + $0x20] sm:$0xff]
                %173 = vst [vmem:[%s163 + $0x20] sm:$0xff] %v172
                %v174 = vld [vmem:[%s162 + $0x48] sm:$0xff]
                %175 = vst [vmem:[%s163 + $0x28] sm:$0xff] %v174
                %v176 = vld [vmem:[%s162 + $0x50] sm:$0xff]
                %177 = vst [vmem:[%s163 + $0x30] sm:$0xff] %v176
                %v178 = vld [vmem:[%s162 + $0x58] sm:$0xff]
                %179 = vst [vmem:[%s163 + $0x38] sm:$0xff] %v178
                %v180 = vld [vmem:[%s162 + $0x60] sm:$0xff]
                %181 = vst [vmem:[%s163 + $0x40] sm:$0xff] %v180
                %v182 = vld [vmem:[%s162 + $0x68] sm:$0xff]
                %183 = vst [vmem:[%s163 + $0x48] sm:$0xff] %v182
                %v184 = vld [vmem:[%s162 + $0x90] sm:$0xff]
                %185 = vst [vmem:[%s163 + $0x50] sm:$0xff] %v184
                %v186 = vld [vmem:[%s162 + $0x98] sm:$0xff]
                %187 = vst [vmem:[%s163 + $0x58] sm:$0xff] %v186
                %v188 = vld [vmem:[%s162 + $0xa0] sm:$0xff]
                %189 = vst [vmem:[%s163 + $0x60] sm:$0xff] %v188
                %v190 = vld [vmem:[%s162 + $0xa8] sm:$0xff]
                %191 = vst [vmem:[%s163 + $0x68] sm:$0xff] %v190
                %v192 = vld [vmem:[%s162 + $0xb0] sm:$0xff]
                %193 = vst [vmem:[%s163 + $0x70] sm:$0xff] %v192
                %v194 = vld [vmem:[%s162 + $0xd8] sm:$0xff]
                %195 = vst [vmem:[%s163 + $0x78] sm:$0xff] %v194
                %v196 = vld [vmem:[%s162 + $0xe0] sm:$0xff]
                %197 = vst [vmem:[%s163 + $0x80] sm:$0xff] %v196
                %v198 = vld [vmem:[%s162 + $0xe8] sm:$0xff]
                %199 = vst [vmem:[%s163 + $0x88] sm:$0xff] %v198
                %v200 = vld [vmem:[%s162 + $0xf0] sm:$0xff]
                %201 = vst [vmem:[%s163 + $0x90] sm:$0xff] %v200
                %v202 = vld [vmem:[%s162 + $0xf8] sm:$0xff]
                %203 = vst [vmem:[%s163 + $0x98] sm:$0xff] %v202
                %s204 = sadd.s32 1, %s161
                %p205 = scmp.ge.s32.totalorder %s204, %s153
                %s206 = scalar_select %p205, 0, %s204
                %s207 = smul.u32 %s206, 40
                %s208 = smul.u32 %s206, 40
                %s209 = scalar_lea.vmem %s144, %s207
                %s210 = scalar_lea.vmem %s134, %s208 [#allocation2]
              $region45: #{net_distillation_forward.4} parent=39 // loop_footer
                %s158 = sadd.s32 %s156, 1
              $region46: #{net_distillation_forward.4} parent=39 // loop_footer_branch
                %155 = sbr.rel target = $region42
              $region47: #{net_distillation_forward.4} parent=39 // loop_exit
                _
              %s211 = sdiv.u32.pop %s138, 5
              %s212 = srem.u32.pop %s138, 5
              %s213 = smul.u32 %s211, 5
              %s214 = smul.u32 8, %s213
              %s215 = scalar_lea.vmem %s144, %s214
              %s216 = smul.u32 8, %s213
              %s217 = scalar_lea.vmem %s134, %s216 [#allocation2]
              // While loop
              $region48: #{net_distillation_forward.4} parent=39 // loop_pre_header
                _
              $region49: #{net_distillation_forward.4} parent=39 // loop_header
                %s219 = sphi 0, %s221
                %p220 = scmp.ge.s32.totalorder %s219, %s212
                %s224 = sphi 0, %s237
                %s225 = sphi %s215, %s240
                %s226 = sphi %s217, %s241
              $region50: #{net_distillation_forward.4} parent=39 // loop_header_branch
                %223 = sbr.rel (%p220) target = $region54
              $region51: #{net_distillation_forward.4} parent=39 // loop_body
                %v227 = vld [vmem:[%s225] sm:$0xff]
                %228 = vst [vmem:[%s226] sm:$0xff] %v227
                %v229 = vld [vmem:[%s225 + $0x48] sm:$0xff]
                %230 = vst [vmem:[%s226 + $0x28] sm:$0xff] %v229
                %v231 = vld [vmem:[%s225 + $0x90] sm:$0xff]
                %232 = vst [vmem:[%s226 + $0x50] sm:$0xff] %v231
                %v233 = vld [vmem:[%s225 + $0xd8] sm:$0xff]
                %234 = vst [vmem:[%s226 + $0x78] sm:$0xff] %v233
                %s235 = sadd.s32 1, %s224
                %p236 = scmp.ge.s32.totalorder %s235, %s212
                %s237 = scalar_select %p236, 0, %s235
                %s238 = smul.u32 %s237, 8
                %s239 = smul.u32 %s237, 8
                %s240 = scalar_lea.vmem %s215, %s238
                %s241 = scalar_lea.vmem %s217, %s239 [#allocation2]
              $region52: #{net_distillation_forward.4} parent=39 // loop_footer
                %s221 = sadd.s32 %s219, 1
              $region53: #{net_distillation_forward.4} parent=39 // loop_footer_branch
                %218 = sbr.rel target = $region49
              $region54: #{net_distillation_forward.4} parent=39 // loop_exit
                _
            $region40: #{net_distillation_forward.4} parent=31 // pred_fallthru
              _
          $region32: #{net_distillation_forward.4} parent=27 // pred_fallthru
            _
          %335 = vnop
        $region28: #{net_distillation_forward.4} parent=23 // pred_fallthru
          _
      $region24: #{net_distillation_forward.4} parent=5 // pred_fallthru
        _
      %p336 = scmp.le.s32.totalorder 1, %s9
      %p337 = scmp.lt.s32.totalorder %s9, 3
      %p338 = pnand %p336, %p337
      %p339 = pneg %p338
      // Predicated region
      $region77: #{net_distillation_forward.4} parent=5 // pred_check
        _
      $region78: #{net_distillation_forward.4} parent=5 // pred_check_branch
        %341 = sbr.rel (%p338) target = $region80
      $region79: #{net_distillation_forward.4} parent=5 // pred_region
        %s342 = ssub.s32 %s9, 1
        %s343 = sand.u32 %s22, 1
        %s344 = sand.u32 %s22, 1
        %s345 = smul.addr %s344, 160
        %s346 = scalar_lea.vmem [#allocation2], %s345
        // Predicated region
        $region81: #{net_distillation_forward.4} parent=79 // pred_check
          %p347 = pneg %p35
        $region82: #{net_distillation_forward.4} parent=79 // pred_check_branch
          %349 = sbr.rel (%p347) target = $region84
        $region83: #{net_distillation_forward.4} parent=79 // pred_region
          _
        $region84: #{net_distillation_forward.4} parent=79 // pred_fallthru
          _
        %s350 = sand.u32 %s22, 1
        %s351 = sand.u32 %s22, 1
        %s352 = smul.addr %s351, 160
        %s353 = scalar_lea.vmem [#allocation2], %s352
        %p354 = pneg %p35
        %p355 = pneg %p32
        %p356 = pneg %p56
        %p357 = pneg %p53
        %p358 = pneg %p77
        %p359 = pneg %p74
        %p360 = pneg %p103
        %p361 = pneg %p100
        %s362 = sand.u32 %s90, 1
        %s363 = sand.u32 %s90, 1
        %s364 = smul.addr %s363, 20
        %s365 = scalar_lea.vmem [#allocation3], %s364
        %s366 = smul.u32 5, %s14
        %s367 = ssub.s32 9, %s366
        %p368 = scmp.lt.s32.totalorder %s367, 5
        %s369 = scalar_select %p368, %s367, 5
        %s370 = smul.u32 256, %s369
        %s371 = smul.u32 %s370, 2
        %s372 = smul.u32 5, %s14
        %s373 = ssub.s32 9, %s372
        %p374 = scmp.lt.s32.totalorder %s373, 5
        %s375 = scalar_select %p374, %s373, 5
        %s376 = smul.u32 64, %s375
        %v378 = vld [vmem:[%s346] sm:$0xff]
        %v379 = vld [vmem:[%s346 + $0x8] sm:$0xff]
        %v380 = vld [vmem:[%s346 + $0x10] sm:$0xff]
        %v381 = vld [vmem:[%s346 + $0x18] sm:$0xff]
        %v382 = vld [vmem:[%s346 + $0x20] sm:$0xff]
        %v383 = vld [vmem:[%s346 + $0x28] sm:$0xff]
        %v384 = vld [vmem:[%s346 + $0x30] sm:$0xff]
        %v385 = vld [vmem:[%s346 + $0x38] sm:$0xff]
        %v386 = vld [vmem:[%s346 + $0x40] sm:$0xff]
        %v387 = vld [vmem:[%s346 + $0x48] sm:$0xff]
        %v388 = vld [vmem:[%s346 + $0x50] sm:$0xff]
        %v389 = vld [vmem:[%s346 + $0x58] sm:$0xff]
        %v390 = vld [vmem:[%s346 + $0x60] sm:$0xff]
        %v391 = vld [vmem:[%s346 + $0x68] sm:$0xff]
        %v392 = vld [vmem:[%s346 + $0x70] sm:$0xff]
        %v393 = vld [vmem:[%s346 + $0x78] sm:$0xff]
        %v394 = vld [vmem:[%s346 + $0x80] sm:$0xff]
        %v395 = vld [vmem:[%s346 + $0x88] sm:$0xff]
        %v396 = vld [vmem:[%s346 + $0x90] sm:$0xff]
        %v397 = vld [vmem:[%s346 + $0x98] sm:$0xff]
        %v398 = vld [vmem:[%s1] sm:$0xf]
        %v399 = vld [vmem:[%s1 + $0x4] sm:$0xf]
        %v400 = vld [vmem:[%s1 + $0x8] sm:$0xf]
        %v401 = vld [vmem:[%s1 + $0xc] sm:$0xf]
        %v402 = vld [vmem:[%s1 + $0x10] sm:$0xf]
        %v403 = vld [vmem:[%s1 + $0x14] sm:$0xf]
        %v404 = vld [vmem:[%s1 + $0x18] sm:$0xf]
        %v405 = vld [vmem:[%s1 + $0x1c] sm:$0xf]
        %v406 = vld [vmem:[%s1 + $0x20] sm:$0xf]
        %v407 = vld [vmem:[%s1 + $0x24] sm:$0xf]
        %v408 = vld [vmem:[%s1 + $0x28] sm:$0xf]
        %v409 = vld [vmem:[%s1 + $0x2c] sm:$0xf]
        %v410 = vld [vmem:[%s1 + $0x30] sm:$0xf]
        %v411 = vld [vmem:[%s1 + $0x34] sm:$0xf]
        %v412 = vld [vmem:[%s1 + $0x38] sm:$0xf]
        %v413 = vld [vmem:[%s1 + $0x3c] sm:$0xf]
        %v414 = vld [vmem:[%s1 + $0x40] sm:$0xf]
        %v415 = vld [vmem:[%s1 + $0x44] sm:$0xf]
        %v416 = vld [vmem:[%s1 + $0x48] sm:$0xf]
        %v417 = vld [vmem:[%s1 + $0x4c] sm:$0xf]
        %v418 = vld [vmem:[%s1 + $0x50] sm:$0xf]
        %v419 = vld [vmem:[%s1 + $0x54] sm:$0xf]
        %v420 = vld [vmem:[%s1 + $0x58] sm:$0xf]
        %v421 = vld [vmem:[%s1 + $0x5c] sm:$0xf]
        %v422 = vld [vmem:[%s1 + $0x60] sm:$0xf]
        %v423 = vld [vmem:[%s1 + $0x64] sm:$0xf]
        %v424 = vld [vmem:[%s1 + $0x68] sm:$0xf]
        %v425 = vld [vmem:[%s1 + $0x6c] sm:$0xf]
        %v426 = vld [vmem:[%s1 + $0x70] sm:$0xf]
        %v427 = vld [vmem:[%s1 + $0x74] sm:$0xf]
        %v428 = vld [vmem:[%s1 + $0x78] sm:$0xf]
        %v429 = vld [vmem:[%s1 + $0x7c] sm:$0x3]
        %v450 = vunpack.c.l.b16 %v378
        %v451 = vunpack.c.h.b16 %v378
        %v452 = vunpack.c.l.b16 %v379
        %v453 = vunpack.c.h.b16 %v379
        %v454 = vunpack.c.l.b16 %v380
        %v455 = vunpack.c.h.b16 %v380
        %v456 = vunpack.c.l.b16 %v381
        %v457 = vunpack.c.h.b16 %v381
        %v458 = vunpack.c.l.b16 %v382
        %v459 = vunpack.c.h.b16 %v382
        %v460 = vunpack.c.l.b16 %v383
        %v461 = vunpack.c.h.b16 %v383
        %v462 = vunpack.c.l.b16 %v384
        %v463 = vunpack.c.h.b16 %v384
        %v464 = vunpack.c.l.b16 %v385
        %v465 = vunpack.c.h.b16 %v385
        %v466 = vunpack.c.l.b16 %v386
        %v467 = vunpack.c.h.b16 %v386
        %v468 = vunpack.c.l.b16 %v387
        %v469 = vunpack.c.h.b16 %v387
        %v470 = vunpack.c.l.b16 %v388
        %v471 = vunpack.c.h.b16 %v388
        %v472 = vunpack.c.l.b16 %v389
        %v473 = vunpack.c.h.b16 %v389
        %v474 = vunpack.c.l.b16 %v390
        %v475 = vunpack.c.h.b16 %v390
        %v476 = vunpack.c.l.b16 %v391
        %v477 = vunpack.c.h.b16 %v391
        %v478 = vunpack.c.l.b16 %v392
        %v479 = vunpack.c.h.b16 %v392
        %v480 = vunpack.c.l.b16 %v393
        %v481 = vunpack.c.h.b16 %v393
        %v482 = vunpack.c.l.b16 %v394
        %v483 = vunpack.c.h.b16 %v394
        %v484 = vunpack.c.l.b16 %v395
        %v485 = vunpack.c.h.b16 %v395
        %v486 = vunpack.c.l.b16 %v396
        %v487 = vunpack.c.h.b16 %v396
        %v488 = vunpack.c.l.b16 %v397
        %v489 = vunpack.c.h.b16 %v397
        %v490 = vpack.c.b16 %v452, %v450
        %v491 = vpack.c.b16 %v453, %v451
        %v492 = vpack.c.b16 %v456, %v454
        %v493 = vpack.c.b16 %v457, %v455
        %v494 = vpack.c.b16 %v460, %v458
        %v495 = vpack.c.b16 %v461, %v459
        %v496 = vpack.c.b16 %v464, %v462
        %v497 = vpack.c.b16 %v465, %v463
        %v498 = vpack.c.b16 %v468, %v466
        %v499 = vpack.c.b16 %v469, %v467
        %v500 = vpack.c.b16 %v472, %v470
        %v501 = vpack.c.b16 %v473, %v471
        %v502 = vpack.c.b16 %v476, %v474
        %v503 = vpack.c.b16 %v477, %v475
        %v504 = vpack.c.b16 %v480, %v478
        %v505 = vpack.c.b16 %v481, %v479
        %v506 = vpack.c.b16 %v484, %v482
        %v507 = vpack.c.b16 %v485, %v483
        %v508 = vpack.c.b16 %v488, %v486
        %v509 = vpack.c.b16 %v489, %v487
        %v552 = vunpack.c.l.b16 %v398
        %v553 = vunpack.c.l.b16 %v399
        %v554 = vunpack.c.l.b16 %v400
        %v555 = vunpack.c.l.b16 %v401
        %v556 = vunpack.c.l.b16 %v402
        %v557 = vunpack.c.l.b16 %v403
        %v558 = vunpack.c.l.b16 %v404
        %v559 = vunpack.c.l.b16 %v405
        %v560 = vunpack.c.l.b16 %v406
        %v561 = vunpack.c.l.b16 %v407
        %v562 = vunpack.c.l.b16 %v408
        %v563 = vunpack.c.l.b16 %v409
        %v564 = vunpack.c.l.b16 %v410
        %v565 = vunpack.c.l.b16 %v411
        %v566 = vunpack.c.l.b16 %v412
        %v567 = vunpack.c.l.b16 %v413
        %v568 = vunpack.c.l.b16 %v414
        %v569 = vunpack.c.l.b16 %v415
        %v570 = vunpack.c.l.b16 %v416
        %v571 = vunpack.c.l.b16 %v417
        %v572 = vunpack.c.l.b16 %v418
        %v573 = vunpack.c.l.b16 %v419
        %v574 = vunpack.c.l.b16 %v420
        %v575 = vunpack.c.l.b16 %v421
        %v576 = vunpack.c.l.b16 %v422
        %v577 = vunpack.c.l.b16 %v423
        %v578 = vunpack.c.l.b16 %v424
        %v579 = vunpack.c.l.b16 %v425
        %v580 = vunpack.c.l.b16 %v426
        %v581 = vunpack.c.l.b16 %v427
        %v582 = vunpack.c.l.b16 %v428
        %v583 = vunpack.c.l.b16 %v429
        %v584 = vpack.c.b16 %v553, %v552
        %v585 = vpack.c.b16 %v555, %v554
        %v586 = vpack.c.b16 %v557, %v556
        %v587 = vpack.c.b16 %v559, %v558
        %v588 = vpack.c.b16 %v561, %v560
        %v589 = vpack.c.b16 %v563, %v562
        %v590 = vpack.c.b16 %v565, %v564
        %v591 = vpack.c.b16 %v567, %v566
        %v592 = vpack.c.b16 %v569, %v568
        %v593 = vpack.c.b16 %v571, %v570
        %v594 = vpack.c.b16 %v573, %v572
        %v595 = vpack.c.b16 %v575, %v574
        %v596 = vpack.c.b16 %v577, %v576
        %v597 = vpack.c.b16 %v579, %v578
        %v598 = vpack.c.b16 %v581, %v580
        %v599 = vpack.c.b16 %v583, %v582
        %vm615 = vcmask 1014784
        %v617 = vsel %vm615, %v491, 0
        %v620 = vsel %vm615, %v493, 0
        %v623 = vsel %vm615, %v495, 0
        %v626 = vsel %vm615, %v497, 0
        %v629 = vsel %vm615, %v499, 0
        %v632 = vsel %vm615, %v501, 0
        %v635 = vsel %vm615, %v503, 0
        %v638 = vsel %vm615, %v505, 0
        %v641 = vsel %vm615, %v507, 0
        %v644 = vsel %vm615, %v509, 0
        %vm646 = vcmask 1045504
        %v648 = vsel %vm646, %v599, 0
        %650 = vmatprep.subr.bf16.mxu0 0
        %651 = vmatpush1.bf16.msra.mxu0 %v584
        %652 = vmatprep.subr.bf16.mxu0 0
        %653 = vmatpush1.bf16.msra.mxu0 %v585
        %654 = vmatprep.subr.bf16.mxu0 0
        %655 = vmatpush1.bf16.msra.mxu0 %v586
        %656 = vmatprep.subr.bf16.mxu0 0
        %657 = vmatpush1.bf16.msra.mxu0 %v587
        %658 = vmatprep.subr.bf16.mxu0 0
        %659 = vmatpush1.bf16.msra.mxu0 %v588
        %660 = vmatprep.subr.bf16.mxu0 0
        %661 = vmatpush1.bf16.msra.mxu0 %v589
        %662 = vmatprep.subr.bf16.mxu0 0
        %663 = vmatpush1.bf16.msra.mxu0 %v590
        %664 = vmatprep.subr.bf16.mxu0 0
        %665 = vmatpush1.bf16.msra.mxu0 %v591
        %666 = vmatprep.subr.bf16.mxu0 0
        %667 = vmatpush1.bf16.msra.mxu0 %v592
        %668 = vmatprep.subr.bf16.mxu0 0
        %669 = vmatpush1.bf16.msra.mxu0 %v593
        %670 = vmatprep.subr.bf16.mxu0 0
        %671 = vmatpush1.bf16.msra.mxu0 %v594
        %672 = vmatprep.subr.bf16.mxu0 0
        %673 = vmatpush1.bf16.msra.mxu0 %v595
        %674 = vmatprep.subr.bf16.mxu0 0
        %675 = vmatpush1.bf16.msra.mxu0 %v596
        %676 = vmatprep.subr.bf16.mxu0 0
        %677 = vmatpush1.bf16.msra.mxu0 %v597
        %678 = vmatprep.subr.bf16.mxu0 0
        %679 = vmatpush1.bf16.msra.mxu0 %v598
        %680 = vmatprep.subr.bf16.mxu0 0
        %681 = vmatpush1.bf16.msra.mxu0 %v648
        %682 = vmatprep.mubr.bf16.mxu0 %v617
        %683 = vmatmul.mubr.bf16.gmra.mrb[0].mxu0 %v490
        %v684 = vpop.f32.mrb[0].mxu0
        %v685 = vadd.f32 0.0, %v684
        %v686 = vpop.f32.mrb[0].mxu0
        %v687 = vpop.f32.mrb[0].mxu0
        %v688 = vadd.f32 0.0, %v687
        %v689 = vpop.f32.mrb[0].mxu0
        %690 = vmatprep.mubr.bf16.mxu0 %v620
        %691 = vmatmul.mubr.bf16.gmra.mrb[0].mxu0 %v492
        %v692 = vpop.f32.mrb[0].mxu0
        %v693 = vadd.f32 0.0, %v692
        %v694 = vpop.f32.mrb[0].mxu0
        %v695 = vpop.f32.mrb[0].mxu0
        %v696 = vadd.f32 0.0, %v695
        %v697 = vpop.f32.mrb[0].mxu0
        %698 = vmatprep.mubr.bf16.mxu0 %v623
        %699 = vmatmul.mubr.bf16.gmra.mrb[0].mxu0 %v494
        %v700 = vpop.f32.mrb[0].mxu0
        %v701 = vadd.f32 0.0, %v700
        %v702 = vpop.f32.mrb[0].mxu0
        %v703 = vpop.f32.mrb[0].mxu0
        %v704 = vadd.f32 0.0, %v703
        %v705 = vpop.f32.mrb[0].mxu0
        %706 = vmatprep.mubr.bf16.mxu0 %v626
        %707 = vmatmul.mubr.bf16.gmra.mrb[0].mxu0 %v496
        %v708 = vpop.f32.mrb[0].mxu0
        %v709 = vadd.f32 0.0, %v708
        %v710 = vpop.f32.mrb[0].mxu0
        %v711 = vpop.f32.mrb[0].mxu0
        %v712 = vadd.f32 0.0, %v711
        %v713 = vpop.f32.mrb[0].mxu0
        %714 = vmatprep.mubr.bf16.mxu0 %v629
        %715 = vmatmul.mubr.bf16.gmra.mrb[0].mxu0 %v498
        %v716 = vpop.f32.mrb[0].mxu0
        %v717 = vadd.f32 0.0, %v716
        %v718 = vpop.f32.mrb[0].mxu0
        %v719 = vpop.f32.mrb[0].mxu0
        %v720 = vadd.f32 0.0, %v719
        %v721 = vpop.f32.mrb[0].mxu0
        %722 = vmatprep.mubr.bf16.mxu0 %v632
        %723 = vmatmul.mubr.bf16.gmra.mrb[0].mxu0 %v500
        %v724 = vpop.f32.mrb[0].mxu0
        %v725 = vadd.f32 0.0, %v724
        %v726 = vpop.f32.mrb[0].mxu0
        %v727 = vpop.f32.mrb[0].mxu0
        %v728 = vadd.f32 0.0, %v727
        %v729 = vpop.f32.mrb[0].mxu0
        %730 = vmatprep.mubr.bf16.mxu0 %v635
        %731 = vmatmul.mubr.bf16.gmra.mrb[0].mxu0 %v502
        %v732 = vpop.f32.mrb[0].mxu0
        %v733 = vadd.f32 0.0, %v732
        %v734 = vpop.f32.mrb[0].mxu0
        %v735 = vpop.f32.mrb[0].mxu0
        %v736 = vadd.f32 0.0, %v735
        %v737 = vpop.f32.mrb[0].mxu0
        %738 = vmatprep.mubr.bf16.mxu0 %v638
        %739 = vmatmul.mubr.bf16.gmra.mrb[0].mxu0 %v504
        %v740 = vpop.f32.mrb[0].mxu0
        %v741 = vadd.f32 0.0, %v740
        %v742 = vpop.f32.mrb[0].mxu0
        %v743 = vpop.f32.mrb[0].mxu0
        %v744 = vadd.f32 0.0, %v743
        %v745 = vpop.f32.mrb[0].mxu0
        %746 = vmatprep.mubr.bf16.mxu0 %v641
        %747 = vmatmul.mubr.bf16.gmra.mrb[0].mxu0 %v506
        %v748 = vpop.f32.mrb[0].mxu0
        %v749 = vadd.f32 0.0, %v748
        %v750 = vpop.f32.mrb[0].mxu0
        %v751 = vpop.f32.mrb[0].mxu0
        %v752 = vadd.f32 0.0, %v751
        %v753 = vpop.f32.mrb[0].mxu0
        %754 = vmatprep.mubr.bf16.mxu0 %v644
        %755 = vmatmul.mubr.bf16.gmra.mrb[0].mxu0 %v508
        %v756 = vpop.f32.mrb[0].mxu0
        %v757 = vadd.f32 0.0, %v756
        %v758 = vpop.f32.mrb[0].mxu0
        %v759 = vpop.f32.mrb[0].mxu0
        %v760 = vadd.f32 0.0, %v759
        %v761 = vpop.f32.mrb[0].mxu0
        %762 = vdwg.mxu0
        %v763 = vmax.f32 %v685, %v704
        %v764 = vmax.f32 %v688, %v709
        %v765 = vmax.f32 %v693, %v712
        %v766 = vmax.f32 %v696, %v717
        %v767 = vmax.f32 %v701, %v720
        %v768 = vmax.f32 %v725, %v744
        %v769 = vmax.f32 %v728, %v749
        %v770 = vmax.f32 %v733, %v752
        %v771 = vmax.f32 %v736, %v757
        %v772 = vmax.f32 %v741, %v760
        %v773 = vmax.f32 %v763, %v768
        %v774 = vmax.f32 %v764, %v769
        %v775 = vmax.f32 %v765, %v770
        %v776 = vmax.f32 %v766, %v771
        %v777 = vmax.f32 %v767, %v772
        %v778 = vld [vmem:[%s2] sm:$0x1]
        %v780 = vlaneseq
        %v781 = vshrl.u32 %v780, 7
        %v782 = vsub.s32 0, %v781
        %v783 = vrot.slane %v778, %v782
        %v785 = vadd.f32 %v773, %v783
        %v786 = vadd.f32 %v774, %v783
        %v787 = vadd.f32 %v775, %v783
        %v788 = vadd.f32 %v776, %v783
        %v789 = vadd.f32 %v777, %v783
        %v790 = vmax.f32 %v785, 0.0
        %v791 = vmax.f32 %v786, 0.0
        %v792 = vmax.f32 %v787, 0.0
        %v793 = vmax.f32 %v788, 0.0
        %v794 = vmax.f32 %v789, 0.0
        %v795 = vpack.c.bf16 %v791, %v790
        %v796 = vpack.c.bf16 %v793, %v792
        %v797 = vpack.c.bf16 %v794, %v794
        %v801 = vunpack.c.l.b16 %v795
        %v802 = vunpack.c.h.b16 %v795
        %v803 = vunpack.c.l.b16 %v796
        %v804 = vunpack.c.h.b16 %v796
        %v805 = vunpack.c.l.b16 %v797
        %v806 = vpack.c.b16 %v801, %v801
        %v807 = vpack.c.b16 %v802, %v802
        %v808 = vpack.c.b16 %v803, %v803
        %v809 = vpack.c.b16 %v804, %v804
        %v810 = vpack.c.b16 %v805, %v805
        %vm816 = vcmask 338944
        %817 = vst.msk [vmem:[%s365] sm:$0xf] %vm816, %v806
        %818 = vst.msk [vmem:[%s365 + $0x4] sm:$0xf] %vm816, %v807
        %819 = vst.msk [vmem:[%s365 + $0x8] sm:$0xf] %vm816, %v808
        %820 = vst.msk [vmem:[%s365 + $0xc] sm:$0xf] %vm816, %v809
        %821 = vst.msk [vmem:[%s365 + $0x10] sm:$0xf] %vm816, %v810
        %s822 = sand.u32 %s90, 1
        %s823 = sand.u32 %s90, 1
        %s824 = smul.addr %s823, 20
        %s825 = scalar_lea.vmem [#allocation3], %s824
        // Predicated region
        $region85: #{net_distillation_forward.4} parent=79 // pred_check
          %p826 = pneg %p100
        $region86: #{net_distillation_forward.4} parent=79 // pred_check_branch
          %828 = sbr.rel (%p826) target = $region88
        $region87: #{net_distillation_forward.4} parent=79 // pred_region
          %s829 = smul.u32 5, %s14
          %s830 = ssub.s32 9, %s829
          %p831 = scmp.lt.s32.totalorder %s830, 5
          %s832 = scalar_select %p831, %s830, 5
          %s833 = smul.u32 64, %s832
          %p834 = scmp.ne.s32.totalorder 0, %s833
          %s835 = smul.addr %s829, 4
          %s836 = scalar_lea.vmem %s3, %s835
          // Predicated region
          $region89: #{net_distillation_forward.4} parent=87 // pred_check
            %p837 = pneg %p834
          $region90: #{net_distillation_forward.4} parent=87 // pred_check_branch
            %839 = sbr.rel (%p837) target = $region92
          $region91: #{net_distillation_forward.4} parent=87 // pred_region
            // Predicated region
            $region93: #{net_distillation_forward.4} parent=91 // pred_check
              _
            $region94: #{net_distillation_forward.4} parent=91 // pred_check_branch
              %841 = sbr.rel target = $region96
            $region95: #{net_distillation_forward.4} parent=91 // pred_region
              // Predicated region
              $region115: #{net_distillation_forward.4} parent=95 // pred_check
                _
              $region116: #{net_distillation_forward.4} parent=95 // pred_check_branch
                %899 = sbr.rel (0) target = $region118
              $region117: #{net_distillation_forward.4} parent=95 // pred_region
                %s901 = sdiv.u32.pop %s832, 5
                %s902 = srem.u32.pop %s832, 5
                // While loop
                $region119: #{net_distillation_forward.4} parent=117 // loop_pre_header
                  _
                $region120: #{net_distillation_forward.4} parent=117 // loop_header
                  %s904 = sphi 0, %s906
                  %p905 = scmp.ge.s32.totalorder %s904, %s901
                  %s909 = sphi 0, %s924
                  %s910 = sphi %s825, %s927
                  %s911 = sphi %s836, %s928
                $region121: #{net_distillation_forward.4} parent=117 // loop_header_branch
                  %908 = sbr.rel (%p905) target = $region125
                $region122: #{net_distillation_forward.4} parent=117 // loop_body
                  %v912 = vld [vmem:[%s910] sm:$0xf]
                  %913 = vst [vmem:[%s911] sm:$0xf] %v912
                  %v914 = vld [vmem:[%s910 + $0x4] sm:$0xf]
                  %915 = vst [vmem:[%s911 + $0x4] sm:$0xf] %v914
                  %v916 = vld [vmem:[%s910 + $0x8] sm:$0xf]
                  %917 = vst [vmem:[%s911 + $0x8] sm:$0xf] %v916
                  %v918 = vld [vmem:[%s910 + $0xc] sm:$0xf]
                  %919 = vst [vmem:[%s911 + $0xc] sm:$0xf] %v918
                  %v920 = vld [vmem:[%s910 + $0x10] sm:$0xf]
                  %921 = vst [vmem:[%s911 + $0x10] sm:$0xf] %v920
                  %s922 = sadd.s32 1, %s909
                  %p923 = scmp.ge.s32.totalorder %s922, %s901
                  %s924 = scalar_select %p923, 0, %s922
                  %s925 = smul.u32 %s924, 20
                  %s926 = smul.u32 %s924, 20
                  %s927 = scalar_lea.vmem %s825, %s925 [#allocation3]
                  %s928 = scalar_lea.vmem %s836, %s926
                $region123: #{net_distillation_forward.4} parent=117 // loop_footer
                  %s906 = sadd.s32 %s904, 1
                $region124: #{net_distillation_forward.4} parent=117 // loop_footer_branch
                  %903 = sbr.rel target = $region120
                $region125: #{net_distillation_forward.4} parent=117 // loop_exit
                  _
                %s929 = sdiv.u32.pop %s832, 5
                %s930 = srem.u32.pop %s832, 5
                %s931 = smul.u32 %s929, 5
                %s932 = smul.u32 4, %s931
                %s933 = scalar_lea.vmem %s825, %s932 [#allocation3]
                %s934 = smul.u32 4, %s931
                %s935 = scalar_lea.vmem %s836, %s934
                // While loop
                $region126: #{net_distillation_forward.4} parent=117 // loop_pre_header
                  _
                $region127: #{net_distillation_forward.4} parent=117 // loop_header
                  %s937 = sphi 0, %s939
                  %p938 = scmp.ge.s32.totalorder %s937, %s930
                  %s942 = sphi 0, %s949
                  %s943 = sphi %s933, %s952
                  %s944 = sphi %s935, %s953
                $region128: #{net_distillation_forward.4} parent=117 // loop_header_branch
                  %941 = sbr.rel (%p938) target = $region132
                $region129: #{net_distillation_forward.4} parent=117 // loop_body
                  %v945 = vld [vmem:[%s943] sm:$0xf]
                  %946 = vst [vmem:[%s944] sm:$0xf] %v945
                  %s947 = sadd.s32 1, %s942
                  %p948 = scmp.ge.s32.totalorder %s947, %s930
                  %s949 = scalar_select %p948, 0, %s947
                  %s950 = smul.u32 %s949, 4
                  %s951 = smul.u32 %s949, 4
                  %s952 = scalar_lea.vmem %s933, %s950 [#allocation3]
                  %s953 = scalar_lea.vmem %s935, %s951
                $region130: #{net_distillation_forward.4} parent=117 // loop_footer
                  %s939 = sadd.s32 %s937, 1
                $region131: #{net_distillation_forward.4} parent=117 // loop_footer_branch
                  %936 = sbr.rel target = $region127
                $region132: #{net_distillation_forward.4} parent=117 // loop_exit
                  _
              $region118: #{net_distillation_forward.4} parent=95 // pred_fallthru
                _
            $region96: #{net_distillation_forward.4} parent=91 // pred_fallthru
              _
            // Predicated region
            $region97: #{net_distillation_forward.4} parent=91 // pred_check
              _
            $region98: #{net_distillation_forward.4} parent=91 // pred_check_branch
              %843 = sbr.rel (0) target = $region100
            $region99: #{net_distillation_forward.4} parent=91 // pred_region
              %s845 = sdiv.u32.pop %s832, 5
              %s846 = srem.u32.pop %s832, 5
              // While loop
              $region101: #{net_distillation_forward.4} parent=99 // loop_pre_header
                _
              $region102: #{net_distillation_forward.4} parent=99 // loop_header
                %s848 = sphi 0, %s850
                %p849 = scmp.ge.s32.totalorder %s848, %s845
                %s853 = sphi 0, %s868
                %s854 = sphi %s825, %s871
                %s855 = sphi %s836, %s872
              $region103: #{net_distillation_forward.4} parent=99 // loop_header_branch
                %852 = sbr.rel (%p849) target = $region107
              $region104: #{net_distillation_forward.4} parent=99 // loop_body
                %v856 = vld [vmem:[%s854] sm:$0xf]
                %857 = vst [vmem:[%s855] sm:$0xf] %v856
                %v858 = vld [vmem:[%s854 + $0x4] sm:$0xf]
                %859 = vst [vmem:[%s855 + $0x4] sm:$0xf] %v858
                %v860 = vld [vmem:[%s854 + $0x8] sm:$0xf]
                %861 = vst [vmem:[%s855 + $0x8] sm:$0xf] %v860
                %v862 = vld [vmem:[%s854 + $0xc] sm:$0xf]
                %863 = vst [vmem:[%s855 + $0xc] sm:$0xf] %v862
                %v864 = vld [vmem:[%s854 + $0x10] sm:$0xf]
                %865 = vst [vmem:[%s855 + $0x10] sm:$0xf] %v864
                %s866 = sadd.s32 1, %s853
                %p867 = scmp.ge.s32.totalorder %s866, %s845
                %s868 = scalar_select %p867, 0, %s866
                %s869 = smul.u32 %s868, 20
                %s870 = smul.u32 %s868, 20
                %s871 = scalar_lea.vmem %s825, %s869 [#allocation3]
                %s872 = scalar_lea.vmem %s836, %s870
              $region105: #{net_distillation_forward.4} parent=99 // loop_footer
                %s850 = sadd.s32 %s848, 1
              $region106: #{net_distillation_forward.4} parent=99 // loop_footer_branch
                %847 = sbr.rel target = $region102
              $region107: #{net_distillation_forward.4} parent=99 // loop_exit
                _
              %s873 = sdiv.u32.pop %s832, 5
              %s874 = srem.u32.pop %s832, 5
              %s875 = smul.u32 %s873, 5
              %s876 = smul.u32 4, %s875
              %s877 = scalar_lea.vmem %s825, %s876 [#allocation3]
              %s878 = smul.u32 4, %s875
              %s879 = scalar_lea.vmem %s836, %s878
              // While loop
              $region108: #{net_distillation_forward.4} parent=99 // loop_pre_header
                _
              $region109: #{net_distillation_forward.4} parent=99 // loop_header
                %s881 = sphi 0, %s883
                %p882 = scmp.ge.s32.totalorder %s881, %s874
                %s886 = sphi 0, %s893
                %s887 = sphi %s877, %s896
                %s888 = sphi %s879, %s897
              $region110: #{net_distillation_forward.4} parent=99 // loop_header_branch
                %885 = sbr.rel (%p882) target = $region114
              $region111: #{net_distillation_forward.4} parent=99 // loop_body
                %v889 = vld [vmem:[%s887] sm:$0xf]
                %890 = vst [vmem:[%s888] sm:$0xf] %v889
                %s891 = sadd.s32 1, %s886
                %p892 = scmp.ge.s32.totalorder %s891, %s874
                %s893 = scalar_select %p892, 0, %s891
                %s894 = smul.u32 %s893, 4
                %s895 = smul.u32 %s893, 4
                %s896 = scalar_lea.vmem %s877, %s894 [#allocation3]
                %s897 = scalar_lea.vmem %s879, %s895
              $region112: #{net_distillation_forward.4} parent=99 // loop_footer
                %s883 = sadd.s32 %s881, 1
              $region113: #{net_distillation_forward.4} parent=99 // loop_footer_branch
                %880 = sbr.rel target = $region109
              $region114: #{net_distillation_forward.4} parent=99 // loop_exit
                _
            $region100: #{net_distillation_forward.4} parent=91 // pred_fallthru
              _
          $region92: #{net_distillation_forward.4} parent=87 // pred_fallthru
            _
          %954 = vnop
        $region88: #{net_distillation_forward.4} parent=79 // pred_fallthru
          _
      $region80: #{net_distillation_forward.4} parent=5 // pred_fallthru
        _
      %p955 = scmp.le.s32.totalorder 2, %s9
      // Predicated region
      $region133: #{net_distillation_forward.4} parent=5 // pred_check
        %p956 = pneg %p955
      $region134: #{net_distillation_forward.4} parent=5 // pred_check_branch
        %958 = sbr.rel (%p956) target = $region136
      $region135: #{net_distillation_forward.4} parent=5 // pred_region
        %s959 = ssub.s32 %s9, 2
        // Predicated region
        $region137: #{net_distillation_forward.4} parent=135 // pred_check
          %p960 = pneg %p106
        $region138: #{net_distillation_forward.4} parent=135 // pred_check_branch
          %962 = sbr.rel (%p960) target = $region140
        $region139: #{net_distillation_forward.4} parent=135 // pred_region
          %s963 = sand.u32 %s91, 1
          %s964 = sand.u32 %s91, 1
          %s965 = smul.addr %s964, 20
          %s966 = scalar_lea.vmem [#allocation3], %s965
        $region140: #{net_distillation_forward.4} parent=135 // pred_fallthru
          _
      $region136: #{net_distillation_forward.4} parent=5 // pred_fallthru
        _
    $region6: #{net_distillation_forward.4} parent=1 // loop_footer
      %s13 = sadd.s32 1, %s9
    $region7: #{net_distillation_forward.4} parent=1 // loop_footer_branch
      %8 = sbr.rel target = $region3
    $region8: #{net_distillation_forward.4} parent=1 // loop_exit
      _

// kernel: net_distillation_forward.5
$region0: #{net_distillation_forward.5}
  #allocation0 [shape = 'u32[]', space=smem, size = 0x4, offset = 0x4, fixed_abs, tag = 'smem constant byte address 0x4 - core index']
  #allocation1 [shape = 'u32[144,128]{1,0:T(1,128)}', space=vmem, size = 0x12000, scoped, tag = 'internal scratch']
  %s0 = inlined_call_operand.vmem [shape: bf16[2,1512], index: 0, kind: input, shape index: {}]
  %s1 = inlined_call_operand.vmem [shape: bf16[1512,512], index: 1, kind: input, shape index: {}]
  %s2 = inlined_call_operand.vmem [shape: f32[1,512], index: 2, kind: input, shape index: {}]
  %s3 = inlined_call_operand.vmem [shape: bf16[512,10], index: 3, kind: input, shape index: {}]
  %s4 = inlined_call_operand.vmem [shape: f32[1,10], index: 4, kind: input, shape index: {}]
  %s5 = inlined_call_operand.hbm [shape: f32[2,10], index: 5, kind: output, shape index: {}]
  %s6 = sld [smem:[#allocation0]]
  $region30: #{net_distillation_forward.5} parent=0
    _
  %s8 = ssub.s32 1, %s6
  %s9 = scalar_select 0, %s8, %s6
  $region1: #{net_distillation_forward.5} parent=0
    #allocation2 [shape = 'u8[4096]{0}', space=vmem, size = 0x1000, scoped, tag = 'output window, operand 0, single buffered']
    #allocation3 [shape = 's32[1]{0}', space=sflag, size = 0x4, scoped, tag = 'scoped memory for net_distillation_forward.5']
    %10 = vsyncpa [#allocation3], 0
    // Predicated region
    $region2: #{net_distillation_forward.5} parent=1 // pred_check
      _
    $region3: #{net_distillation_forward.5} parent=1 // pred_check_branch
      %12 = sbr.rel (0) target = $region5
    $region4: #{net_distillation_forward.5} parent=1 // pred_region
      _
    $region5: #{net_distillation_forward.5} parent=1 // pred_fallthru
      _
    // Predicated region
    $region6: #{net_distillation_forward.5} parent=1 // pred_check
      _
    $region7: #{net_distillation_forward.5} parent=1 // pred_check_branch
      %14 = sbr.rel (0) target = $region9
    $region8: #{net_distillation_forward.5} parent=1 // pred_region
      _
    $region9: #{net_distillation_forward.5} parent=1 // pred_fallthru
      _
    // Predicated region
    $region10: #{net_distillation_forward.5} parent=1 // pred_check
      _
    $region11: #{net_distillation_forward.5} parent=1 // pred_check_branch
      %16 = sbr.rel (0) target = $region13
    $region12: #{net_distillation_forward.5} parent=1 // pred_region
      _
    $region13: #{net_distillation_forward.5} parent=1 // pred_fallthru
      _
    // Predicated region
    $region14: #{net_distillation_forward.5} parent=1 // pred_check
      _
    $region15: #{net_distillation_forward.5} parent=1 // pred_check_branch
      %18 = sbr.rel (0) target = $region17
    $region16: #{net_distillation_forward.5} parent=1 // pred_region
      _
    $region17: #{net_distillation_forward.5} parent=1 // pred_fallthru
      _
    // Predicated region
    $region18: #{net_distillation_forward.5} parent=1 // pred_check
      _
    $region19: #{net_distillation_forward.5} parent=1 // pred_check_branch
      %20 = sbr.rel (0) target = $region21
    $region20: #{net_distillation_forward.5} parent=1 // pred_region
      _
    $region21: #{net_distillation_forward.5} parent=1 // pred_fallthru
      _
    %v22 = vld [vmem:[%s0] sm:$0xff]
    %v23 = vld [vmem:[%s0 + $0x8] sm:$0xf]
    %v24 = vld [vmem:[%s0 + $0xc] sm:$0xff]
    %v25 = vld [vmem:[%s0 + $0x14] sm:$0xf]
    %v26 = vld [vmem:[%s0 + $0x18] sm:$0xff]
    %v27 = vld [vmem:[%s0 + $0x20] sm:$0xf]
    %v28 = vld [vmem:[%s0 + $0x24] sm:$0xff]
    %v29 = vld [vmem:[%s0 + $0x2c] sm:$0xf]
    %v30 = vld [vmem:[%s1] sm:$0xff]
    %v31 = vld [vmem:[%s1 + $0x8] sm:$0xff]
    %v32 = vld [vmem:[%s1 + $0x10] sm:$0xff]
    %v33 = vld [vmem:[%s1 + $0x18] sm:$0xff]
    %v34 = vld [vmem:[%s1 + $0x20] sm:$0xff]
    %v35 = vld [vmem:[%s1 + $0x28] sm:$0xff]
    %v36 = vld [vmem:[%s1 + $0x30] sm:$0xff]
    %v37 = vld [vmem:[%s1 + $0x38] sm:$0xff]
    %v38 = vld [vmem:[%s1 + $0x40] sm:$0xff]
    %v39 = vld [vmem:[%s1 + $0x48] sm:$0xff]
    %v40 = vld [vmem:[%s1 + $0x50] sm:$0xff]
    %v41 = vld [vmem:[%s1 + $0x58] sm:$0xff]
    %v42 = vld [vmem:[%s1 + $0x60] sm:$0xff]
    %v43 = vld [vmem:[%s1 + $0x68] sm:$0xff]
    %v44 = vld [vmem:[%s1 + $0x70] sm:$0xff]
    %v45 = vld [vmem:[%s1 + $0x78] sm:$0xff]
    %v46 = vld [vmem:[%s1 + $0x80] sm:$0xff]
    %v47 = vld [vmem:[%s1 + $0x88] sm:$0xff]
    %v48 = vld [vmem:[%s1 + $0x90] sm:$0xff]
    %v49 = vld [vmem:[%s1 + $0x98] sm:$0xff]
    %v50 = vld [vmem:[%s1 + $0xa0] sm:$0xff]
    %v51 = vld [vmem:[%s1 + $0xa8] sm:$0xff]
    %v52 = vld [vmem:[%s1 + $0xb0] sm:$0xff]
    %v53 = vld [vmem:[%s1 + $0xb8] sm:$0xff]
    %v54 = vld [vmem:[%s1 + $0xc0] sm:$0xff]
    %v55 = vld [vmem:[%s1 + $0xc8] sm:$0xff]
    %v56 = vld [vmem:[%s1 + $0xd0] sm:$0xff]
    %v57 = vld [vmem:[%s1 + $0xd8] sm:$0xff]
    %v58 = vld [vmem:[%s1 + $0xe0] sm:$0xff]
    %v59 = vld [vmem:[%s1 + $0xe8] sm:$0xff]
    %v60 = vld [vmem:[%s1 + $0xf0] sm:$0xff]
    %v61 = vld [vmem:[%s1 + $0xf8] sm:$0xff]
    %v62 = vld [vmem:[%s1 + $0x100] sm:$0xff]
    %v63 = vld [vmem:[%s1 + $0x108] sm:$0xff]
    %v64 = vld [vmem:[%s1 + $0x110] sm:$0xff]
    %v65 = vld [vmem:[%s1 + $0x118] sm:$0xff]
    %v66 = vld [vmem:[%s1 + $0x120] sm:$0xff]
    %v67 = vld [vmem:[%s1 + $0x128] sm:$0xff]
    %v68 = vld [vmem:[%s1 + $0x130] sm:$0xff]
    %v69 = vld [vmem:[%s1 + $0x138] sm:$0xff]
    %v70 = vld [vmem:[%s1 + $0x140] sm:$0xff]
    %v71 = vld [vmem:[%s1 + $0x148] sm:$0xff]
    %v72 = vld [vmem:[%s1 + $0x150] sm:$0xff]
    %v73 = vld [vmem:[%s1 + $0x158] sm:$0xff]
    %v74 = vld [vmem:[%s1 + $0x160] sm:$0xff]
    %v75 = vld [vmem:[%s1 + $0x168] sm:$0xff]
    %v76 = vld [vmem:[%s1 + $0x170] sm:$0xff]
    %v77 = vld [vmem:[%s1 + $0x178] sm:$0xff]
    %v78 = vld [vmem:[%s1 + $0x180] sm:$0xff]
    %v79 = vld [vmem:[%s1 + $0x188] sm:$0xff]
    %v80 = vld [vmem:[%s1 + $0x190] sm:$0xff]
    %v81 = vld [vmem:[%s1 + $0x198] sm:$0xff]
    %v82 = vld [vmem:[%s1 + $0x1a0] sm:$0xff]
    %v83 = vld [vmem:[%s1 + $0x1a8] sm:$0xff]
    %v84 = vld [vmem:[%s1 + $0x1b0] sm:$0xff]
    %v85 = vld [vmem:[%s1 + $0x1b8] sm:$0xff]
    %v86 = vld [vmem:[%s1 + $0x1c0] sm:$0xff]
    %v87 = vld [vmem:[%s1 + $0x1c8] sm:$0xff]
    %v88 = vld [vmem:[%s1 + $0x1d0] sm:$0xff]
    %v89 = vld [vmem:[%s1 + $0x1d8] sm:$0xff]
    %v90 = vld [vmem:[%s1 + $0x1e0] sm:$0xff]
    %v91 = vld [vmem:[%s1 + $0x1e8] sm:$0xff]
    %v92 = vld [vmem:[%s1 + $0x1f0] sm:$0xff]
    %v93 = vld [vmem:[%s1 + $0x1f8] sm:$0xff]
    %v94 = vld [vmem:[%s1 + $0x200] sm:$0xff]
    %v95 = vld [vmem:[%s1 + $0x208] sm:$0xff]
    %v96 = vld [vmem:[%s1 + $0x210] sm:$0xff]
    %v97 = vld [vmem:[%s1 + $0x218] sm:$0xff]
    %v98 = vld [vmem:[%s1 + $0x220] sm:$0xff]
    %v99 = vld [vmem:[%s1 + $0x228] sm:$0xff]
    %v100 = vld [vmem:[%s1 + $0x230] sm:$0xff]
    %v101 = vld [vmem:[%s1 + $0x238] sm:$0xff]
    %v102 = vld [vmem:[%s1 + $0x240] sm:$0xff]
    %v103 = vld [vmem:[%s1 + $0x248] sm:$0xff]
    %v104 = vld [vmem:[%s1 + $0x250] sm:$0xff]
    %v105 = vld [vmem:[%s1 + $0x258] sm:$0xff]
    %v106 = vld [vmem:[%s1 + $0x260] sm:$0xff]
    %v107 = vld [vmem:[%s1 + $0x268] sm:$0xff]
    %v108 = vld [vmem:[%s1 + $0x270] sm:$0xff]
    %v109 = vld [vmem:[%s1 + $0x278] sm:$0xff]
    %v110 = vld [vmem:[%s1 + $0x280] sm:$0xff]
    %v111 = vld [vmem:[%s1 + $0x288] sm:$0xff]
    %v112 = vld [vmem:[%s1 + $0x290] sm:$0xff]
    %v113 = vld [vmem:[%s1 + $0x298] sm:$0xff]
    %v114 = vld [vmem:[%s1 + $0x2a0] sm:$0xff]
    %v115 = vld [vmem:[%s1 + $0x2a8] sm:$0xff]
    %v116 = vld [vmem:[%s1 + $0x2b0] sm:$0xff]
    %v117 = vld [vmem:[%s1 + $0x2b8] sm:$0xff]
    %v118 = vld [vmem:[%s1 + $0x2c0] sm:$0xff]
    %v119 = vld [vmem:[%s1 + $0x2c8] sm:$0xff]
    %v120 = vld [vmem:[%s1 + $0x2d0] sm:$0xff]
    %v121 = vld [vmem:[%s1 + $0x2d8] sm:$0xff]
    %v122 = vld [vmem:[%s1 + $0x2e0] sm:$0xff]
    %v123 = vld [vmem:[%s1 + $0x2e8] sm:$0xff]
    %v124 = vld [vmem:[%s1 + $0x2f0] sm:$0xff]
    %v125 = vld [vmem:[%s1 + $0x2f8] sm:$0xff]
    %v126 = vld [vmem:[%s1 + $0x300] sm:$0xff]
    %v127 = vld [vmem:[%s1 + $0x308] sm:$0xff]
    %v128 = vld [vmem:[%s1 + $0x310] sm:$0xff]
    %v129 = vld [vmem:[%s1 + $0x318] sm:$0xff]
    %v130 = vld [vmem:[%s1 + $0x320] sm:$0xff]
    %v131 = vld [vmem:[%s1 + $0x328] sm:$0xff]
    %v132 = vld [vmem:[%s1 + $0x330] sm:$0xff]
    %v133 = vld [vmem:[%s1 + $0x338] sm:$0xff]
    %v134 = vld [vmem:[%s1 + $0x340] sm:$0xff]
    %v135 = vld [vmem:[%s1 + $0x348] sm:$0xff]
    %v136 = vld [vmem:[%s1 + $0x350] sm:$0xff]
    %v137 = vld [vmem:[%s1 + $0x358] sm:$0xff]
    %v138 = vld [vmem:[%s1 + $0x360] sm:$0xff]
    %v139 = vld [vmem:[%s1 + $0x368] sm:$0xff]
    %v140 = vld [vmem:[%s1 + $0x370] sm:$0xff]
    %v141 = vld [vmem:[%s1 + $0x378] sm:$0xff]
    %v142 = vld [vmem:[%s1 + $0x380] sm:$0xff]
    %v143 = vld [vmem:[%s1 + $0x388] sm:$0xff]
    %v144 = vld [vmem:[%s1 + $0x390] sm:$0xff]
    %v145 = vld [vmem:[%s1 + $0x398] sm:$0xff]
    %v146 = vld [vmem:[%s1 + $0x3a0] sm:$0xff]
    %v147 = vld [vmem:[%s1 + $0x3a8] sm:$0xff]
    %v148 = vld [vmem:[%s1 + $0x3b0] sm:$0xff]
    %v149 = vld [vmem:[%s1 + $0x3b8] sm:$0xff]
    %v150 = vld [vmem:[%s1 + $0x3c0] sm:$0xff]
    %v151 = vld [vmem:[%s1 + $0x3c8] sm:$0xff]
    %v152 = vld [vmem:[%s1 + $0x3d0] sm:$0xff]
    %v153 = vld [vmem:[%s1 + $0x3d8] sm:$0xff]
    %v154 = vld [vmem:[%s1 + $0x3e0] sm:$0xff]
    %v155 = vld [vmem:[%s1 + $0x3e8] sm:$0xff]
    %v156 = vld [vmem:[%s1 + $0x3f0] sm:$0xff]
    %v157 = vld [vmem:[%s1 + $0x3f8] sm:$0xff]
    %v158 = vld [vmem:[%s1 + $0x400] sm:$0xff]
    %v159 = vld [vmem:[%s1 + $0x408] sm:$0xff]
    %v160 = vld [vmem:[%s1 + $0x410] sm:$0xff]
    %v161 = vld [vmem:[%s1 + $0x418] sm:$0xff]
    %v162 = vld [vmem:[%s1 + $0x420] sm:$0xff]
    %v163 = vld [vmem:[%s1 + $0x428] sm:$0xff]
    %v164 = vld [vmem:[%s1 + $0x430] sm:$0xff]
    %v165 = vld [vmem:[%s1 + $0x438] sm:$0xff]
    %v166 = vld [vmem:[%s1 + $0x440] sm:$0xff]
    %v167 = vld [vmem:[%s1 + $0x448] sm:$0xff]
    %v168 = vld [vmem:[%s1 + $0x450] sm:$0xff]
    %v169 = vld [vmem:[%s1 + $0x458] sm:$0xff]
    %v170 = vld [vmem:[%s1 + $0x460] sm:$0xff]
    %v171 = vld [vmem:[%s1 + $0x468] sm:$0xff]
    %v172 = vld [vmem:[%s1 + $0x470] sm:$0xff]
    %v173 = vld [vmem:[%s1 + $0x478] sm:$0xff]
    %v174 = vld [vmem:[%s1 + $0x480] sm:$0xff]
    %v175 = vld [vmem:[%s1 + $0x488] sm:$0xff]
    %v176 = vld [vmem:[%s1 + $0x490] sm:$0xff]
    %v177 = vld [vmem:[%s1 + $0x498] sm:$0xff]
    %v178 = vld [vmem:[%s1 + $0x4a0] sm:$0xff]
    %v179 = vld [vmem:[%s1 + $0x4a8] sm:$0xff]
    %v180 = vld [vmem:[%s1 + $0x4b0] sm:$0xff]
    %v181 = vld [vmem:[%s1 + $0x4b8] sm:$0xff]
    %v182 = vld [vmem:[%s1 + $0x4c0] sm:$0xff]
    %v183 = vld [vmem:[%s1 + $0x4c8] sm:$0xff]
    %v184 = vld [vmem:[%s1 + $0x4d0] sm:$0xff]
    %v185 = vld [vmem:[%s1 + $0x4d8] sm:$0xff]
    %v186 = vld [vmem:[%s1 + $0x4e0] sm:$0xff]
    %v187 = vld [vmem:[%s1 + $0x4e8] sm:$0xff]
    %v188 = vld [vmem:[%s1 + $0x4f0] sm:$0xff]
    %v189 = vld [vmem:[%s1 + $0x4f8] sm:$0xff]
    %v190 = vld [vmem:[%s1 + $0x500] sm:$0xff]
    %v191 = vld [vmem:[%s1 + $0x508] sm:$0xff]
    %v192 = vld [vmem:[%s1 + $0x510] sm:$0xff]
    %v193 = vld [vmem:[%s1 + $0x518] sm:$0xff]
    %v194 = vld [vmem:[%s1 + $0x520] sm:$0xff]
    %v195 = vld [vmem:[%s1 + $0x528] sm:$0xff]
    %v196 = vld [vmem:[%s1 + $0x530] sm:$0xff]
    %v197 = vld [vmem:[%s1 + $0x538] sm:$0xff]
    %v198 = vld [vmem:[%s1 + $0x540] sm:$0xff]
    %v199 = vld [vmem:[%s1 + $0x548] sm:$0xff]
    %v200 = vld [vmem:[%s1 + $0x550] sm:$0xff]
    %v201 = vld [vmem:[%s1 + $0x558] sm:$0xff]
    %v202 = vld [vmem:[%s1 + $0x560] sm:$0xff]
    %v203 = vld [vmem:[%s1 + $0x568] sm:$0xff]
    %v204 = vld [vmem:[%s1 + $0x570] sm:$0xff]
    %v205 = vld [vmem:[%s1 + $0x578] sm:$0xff]
    %v206 = vld [vmem:[%s1 + $0x580] sm:$0xff]
    %v207 = vld [vmem:[%s1 + $0x588] sm:$0xff]
    %v208 = vld [vmem:[%s1 + $0x590] sm:$0xff]
    %v209 = vld [vmem:[%s1 + $0x598] sm:$0xff]
    %v210 = vld [vmem:[%s1 + $0x5a0] sm:$0xff]
    %v211 = vld [vmem:[%s1 + $0x5a8] sm:$0xff]
    %v212 = vld [vmem:[%s1 + $0x5b0] sm:$0xff]
    %v213 = vld [vmem:[%s1 + $0x5b8] sm:$0xff]
    %v214 = vld [vmem:[%s1 + $0x5c0] sm:$0xff]
    %v215 = vld [vmem:[%s1 + $0x5c8] sm:$0xff]
    %v216 = vld [vmem:[%s1 + $0x5d0] sm:$0xff]
    %v217 = vld [vmem:[%s1 + $0x5d8] sm:$0xff]
    %v218 = vld [vmem:[%s1 + $0x5e0] sm:$0xff]
    %v219 = vld [vmem:[%s1 + $0x5e8] sm:$0xff]
    %v220 = vld [vmem:[%s1 + $0x5f0] sm:$0xff]
    %v221 = vld [vmem:[%s1 + $0x5f8] sm:$0xff]
    %v222 = vld [vmem:[%s1 + $0x600] sm:$0xff]
    %v223 = vld [vmem:[%s1 + $0x608] sm:$0xff]
    %v224 = vld [vmem:[%s1 + $0x610] sm:$0xff]
    %v225 = vld [vmem:[%s1 + $0x618] sm:$0xff]
    %v226 = vld [vmem:[%s1 + $0x620] sm:$0xff]
    %v227 = vld [vmem:[%s1 + $0x628] sm:$0xff]
    %v228 = vld [vmem:[%s1 + $0x630] sm:$0xff]
    %v229 = vld [vmem:[%s1 + $0x638] sm:$0xff]
    %v230 = vld [vmem:[%s1 + $0x640] sm:$0xff]
    %v231 = vld [vmem:[%s1 + $0x648] sm:$0xff]
    %v232 = vld [vmem:[%s1 + $0x650] sm:$0xff]
    %v233 = vld [vmem:[%s1 + $0x658] sm:$0xff]
    %v234 = vld [vmem:[%s1 + $0x660] sm:$0xff]
    %v235 = vld [vmem:[%s1 + $0x668] sm:$0xff]
    %v236 = vld [vmem:[%s1 + $0x670] sm:$0xff]
    %v237 = vld [vmem:[%s1 + $0x678] sm:$0xff]
    %v238 = vld [vmem:[%s1 + $0x680] sm:$0xff]
    %v239 = vld [vmem:[%s1 + $0x688] sm:$0xff]
    %v240 = vld [vmem:[%s1 + $0x690] sm:$0xff]
    %v241 = vld [vmem:[%s1 + $0x698] sm:$0xff]
    %v242 = vld [vmem:[%s1 + $0x6a0] sm:$0xff]
    %v243 = vld [vmem:[%s1 + $0x6a8] sm:$0xff]
    %v244 = vld [vmem:[%s1 + $0x6b0] sm:$0xff]
    %v245 = vld [vmem:[%s1 + $0x6b8] sm:$0xff]
    %v246 = vld [vmem:[%s1 + $0x6c0] sm:$0xff]
    %v247 = vld [vmem:[%s1 + $0x6c8] sm:$0xff]
    %v248 = vld [vmem:[%s1 + $0x6d0] sm:$0xff]
    %v249 = vld [vmem:[%s1 + $0x6d8] sm:$0xff]
    %v250 = vld [vmem:[%s1 + $0x6e0] sm:$0xff]
    %v251 = vld [vmem:[%s1 + $0x6e8] sm:$0xff]
    %v252 = vld [vmem:[%s1 + $0x6f0] sm:$0xff]
    %v253 = vld [vmem:[%s1 + $0x6f8] sm:$0xff]
    %v254 = vld [vmem:[%s1 + $0x700] sm:$0xff]
    %v255 = vld [vmem:[%s1 + $0x708] sm:$0xff]
    %v256 = vld [vmem:[%s1 + $0x710] sm:$0xff]
    %v257 = vld [vmem:[%s1 + $0x718] sm:$0xff]
    %v258 = vld [vmem:[%s1 + $0x720] sm:$0xff]
    %v259 = vld [vmem:[%s1 + $0x728] sm:$0xff]
    %v260 = vld [vmem:[%s1 + $0x730] sm:$0xff]
    %v261 = vld [vmem:[%s1 + $0x738] sm:$0xff]
    %v262 = vld [vmem:[%s1 + $0x740] sm:$0xff]
    %v263 = vld [vmem:[%s1 + $0x748] sm:$0xff]
    %v264 = vld [vmem:[%s1 + $0x750] sm:$0xff]
    %v265 = vld [vmem:[%s1 + $0x758] sm:$0xff]
    %v266 = vld [vmem:[%s1 + $0x760] sm:$0xff]
    %v267 = vld [vmem:[%s1 + $0x768] sm:$0xff]
    %v268 = vld [vmem:[%s1 + $0x770] sm:$0xff]
    %v269 = vld [vmem:[%s1 + $0x778] sm:$0xff]
    %v270 = vld [vmem:[%s1 + $0x780] sm:$0xff]
    %v271 = vld [vmem:[%s1 + $0x788] sm:$0xff]
    %v272 = vld [vmem:[%s1 + $0x790] sm:$0xff]
    %v273 = vld [vmem:[%s1 + $0x798] sm:$0xff]
    %v274 = vld [vmem:[%s1 + $0x7a0] sm:$0xff]
    %v275 = vld [vmem:[%s1 + $0x7a8] sm:$0xff]
    %v276 = vld [vmem:[%s1 + $0x7b0] sm:$0xff]
    %v277 = vld [vmem:[%s1 + $0x7b8] sm:$0xff]
    %v278 = vld [vmem:[%s1 + $0x7c0] sm:$0xff]
    %v279 = vld [vmem:[%s1 + $0x7c8] sm:$0xff]
    %v280 = vld [vmem:[%s1 + $0x7d0] sm:$0xff]
    %v281 = vld [vmem:[%s1 + $0x7d8] sm:$0xff]
    %v282 = vld [vmem:[%s1 + $0x7e0] sm:$0xff]
    %v283 = vld [vmem:[%s1 + $0x7e8] sm:$0xff]
    %v284 = vld [vmem:[%s1 + $0x7f0] sm:$0xff]
    %v285 = vld [vmem:[%s1 + $0x7f8] sm:$0xff]
    %v286 = vld [vmem:[%s1 + $0x800] sm:$0xff]
    %v287 = vld [vmem:[%s1 + $0x808] sm:$0xff]
    %v288 = vld [vmem:[%s1 + $0x810] sm:$0xff]
    %v289 = vld [vmem:[%s1 + $0x818] sm:$0xff]
    %v290 = vld [vmem:[%s1 + $0x820] sm:$0xff]
    %v291 = vld [vmem:[%s1 + $0x828] sm:$0xff]
    %v292 = vld [vmem:[%s1 + $0x830] sm:$0xff]
    %v293 = vld [vmem:[%s1 + $0x838] sm:$0xff]
    %v294 = vld [vmem:[%s1 + $0x840] sm:$0xff]
    %v295 = vld [vmem:[%s1 + $0x848] sm:$0xff]
    %v296 = vld [vmem:[%s1 + $0x850] sm:$0xff]
    %v297 = vld [vmem:[%s1 + $0x858] sm:$0xff]
    %v298 = vld [vmem:[%s1 + $0x860] sm:$0xff]
    %v299 = vld [vmem:[%s1 + $0x868] sm:$0xff]
    %v300 = vld [vmem:[%s1 + $0x870] sm:$0xff]
    %v301 = vld [vmem:[%s1 + $0x878] sm:$0xff]
    %v302 = vld [vmem:[%s1 + $0x880] sm:$0xff]
    %v303 = vld [vmem:[%s1 + $0x888] sm:$0xff]
    %v304 = vld [vmem:[%s1 + $0x890] sm:$0xff]
    %v305 = vld [vmem:[%s1 + $0x898] sm:$0xff]
    %v306 = vld [vmem:[%s1 + $0x8a0] sm:$0xff]
    %v307 = vld [vmem:[%s1 + $0x8a8] sm:$0xff]
    %v308 = vld [vmem:[%s1 + $0x8b0] sm:$0xff]
    %v309 = vld [vmem:[%s1 + $0x8b8] sm:$0xff]
    %v310 = vld [vmem:[%s1 + $0x8c0] sm:$0xff]
    %v311 = vld [vmem:[%s1 + $0x8c8] sm:$0xff]
    %v312 = vld [vmem:[%s1 + $0x8d0] sm:$0xff]
    %v313 = vld [vmem:[%s1 + $0x8d8] sm:$0xff]
    %v314 = vld [vmem:[%s1 + $0x8e0] sm:$0xff]
    %v315 = vld [vmem:[%s1 + $0x8e8] sm:$0xff]
    %v316 = vld [vmem:[%s1 + $0x8f0] sm:$0xff]
    %v317 = vld [vmem:[%s1 + $0x8f8] sm:$0xff]
    %v318 = vld [vmem:[%s1 + $0x900] sm:$0xff]
    %v319 = vld [vmem:[%s1 + $0x908] sm:$0xff]
    %v320 = vld [vmem:[%s1 + $0x910] sm:$0xff]
    %v321 = vld [vmem:[%s1 + $0x918] sm:$0xff]
    %v322 = vld [vmem:[%s1 + $0x920] sm:$0xff]
    %v323 = vld [vmem:[%s1 + $0x928] sm:$0xff]
    %v324 = vld [vmem:[%s1 + $0x930] sm:$0xff]
    %v325 = vld [vmem:[%s1 + $0x938] sm:$0xff]
    %v326 = vld [vmem:[%s1 + $0x940] sm:$0xff]
    %v327 = vld [vmem:[%s1 + $0x948] sm:$0xff]
    %v328 = vld [vmem:[%s1 + $0x950] sm:$0xff]
    %v329 = vld [vmem:[%s1 + $0x958] sm:$0xff]
    %v330 = vld [vmem:[%s1 + $0x960] sm:$0xff]
    %v331 = vld [vmem:[%s1 + $0x968] sm:$0xff]
    %v332 = vld [vmem:[%s1 + $0x970] sm:$0xff]
    %v333 = vld [vmem:[%s1 + $0x978] sm:$0xff]
    %v334 = vld [vmem:[%s1 + $0x980] sm:$0xff]
    %v335 = vld [vmem:[%s1 + $0x988] sm:$0xff]
    %v336 = vld [vmem:[%s1 + $0x990] sm:$0xff]
    %v337 = vld [vmem:[%s1 + $0x998] sm:$0xff]
    %v338 = vld [vmem:[%s1 + $0x9a0] sm:$0xff]
    %v339 = vld [vmem:[%s1 + $0x9a8] sm:$0xff]
    %v340 = vld [vmem:[%s1 + $0x9b0] sm:$0xff]
    %v341 = vld [vmem:[%s1 + $0x9b8] sm:$0xff]
    %v342 = vld [vmem:[%s1 + $0x9c0] sm:$0xff]
    %v343 = vld [vmem:[%s1 + $0x9c8] sm:$0xff]
    %v344 = vld [vmem:[%s1 + $0x9d0] sm:$0xff]
    %v345 = vld [vmem:[%s1 + $0x9d8] sm:$0xff]
    %v346 = vld [vmem:[%s1 + $0x9e0] sm:$0xff]
    %v347 = vld [vmem:[%s1 + $0x9e8] sm:$0xff]
    %v348 = vld [vmem:[%s1 + $0x9f0] sm:$0xff]
    %v349 = vld [vmem:[%s1 + $0x9f8] sm:$0xff]
    %v350 = vld [vmem:[%s1 + $0xa00] sm:$0xff]
    %v351 = vld [vmem:[%s1 + $0xa08] sm:$0xff]
    %v352 = vld [vmem:[%s1 + $0xa10] sm:$0xff]
    %v353 = vld [vmem:[%s1 + $0xa18] sm:$0xff]
    %v354 = vld [vmem:[%s1 + $0xa20] sm:$0xff]
    %v355 = vld [vmem:[%s1 + $0xa28] sm:$0xff]
    %v356 = vld [vmem:[%s1 + $0xa30] sm:$0xff]
    %v357 = vld [vmem:[%s1 + $0xa38] sm:$0xff]
    %v358 = vld [vmem:[%s1 + $0xa40] sm:$0xff]
    %v359 = vld [vmem:[%s1 + $0xa48] sm:$0xff]
    %v360 = vld [vmem:[%s1 + $0xa50] sm:$0xff]
    %v361 = vld [vmem:[%s1 + $0xa58] sm:$0xff]
    %v362 = vld [vmem:[%s1 + $0xa60] sm:$0xff]
    %v363 = vld [vmem:[%s1 + $0xa68] sm:$0xff]
    %v364 = vld [vmem:[%s1 + $0xa70] sm:$0xff]
    %v365 = vld [vmem:[%s1 + $0xa78] sm:$0xff]
    %v366 = vld [vmem:[%s1 + $0xa80] sm:$0xff]
    %v367 = vld [vmem:[%s1 + $0xa88] sm:$0xff]
    %v368 = vld [vmem:[%s1 + $0xa90] sm:$0xff]
    %v369 = vld [vmem:[%s1 + $0xa98] sm:$0xff]
    %v370 = vld [vmem:[%s1 + $0xaa0] sm:$0xff]
    %v371 = vld [vmem:[%s1 + $0xaa8] sm:$0xff]
    %v372 = vld [vmem:[%s1 + $0xab0] sm:$0xff]
    %v373 = vld [vmem:[%s1 + $0xab8] sm:$0xff]
    %v374 = vld [vmem:[%s1 + $0xac0] sm:$0xff]
    %v375 = vld [vmem:[%s1 + $0xac8] sm:$0xff]
    %v376 = vld [vmem:[%s1 + $0xad0] sm:$0xff]
    %v377 = vld [vmem:[%s1 + $0xad8] sm:$0xff]
    %v378 = vld [vmem:[%s1 + $0xae0] sm:$0xff]
    %v379 = vld [vmem:[%s1 + $0xae8] sm:$0xff]
    %v380 = vld [vmem:[%s1 + $0xaf0] sm:$0xff]
    %v381 = vld [vmem:[%s1 + $0xaf8] sm:$0xff]
    %v382 = vld [vmem:[%s1 + $0xb00] sm:$0xff]
    %v383 = vld [vmem:[%s1 + $0xb08] sm:$0xff]
    %v384 = vld [vmem:[%s1 + $0xb10] sm:$0xff]
    %v385 = vld [vmem:[%s1 + $0xb18] sm:$0xff]
    %v386 = vld [vmem:[%s1 + $0xb20] sm:$0xff]
    %v387 = vld [vmem:[%s1 + $0xb28] sm:$0xff]
    %v388 = vld [vmem:[%s1 + $0xb30] sm:$0xff]
    %v389 = vld [vmem:[%s1 + $0xb38] sm:$0xff]
    %v390 = vld [vmem:[%s1 + $0xb40] sm:$0xff]
    %v391 = vld [vmem:[%s1 + $0xb48] sm:$0xff]
    %v392 = vld [vmem:[%s1 + $0xb50] sm:$0xff]
    %v393 = vld [vmem:[%s1 + $0xb58] sm:$0xff]
    %v394 = vld [vmem:[%s1 + $0xb60] sm:$0xff]
    %v395 = vld [vmem:[%s1 + $0xb68] sm:$0xff]
    %v396 = vld [vmem:[%s1 + $0xb70] sm:$0xff]
    %v397 = vld [vmem:[%s1 + $0xb78] sm:$0xff]
    %v398 = vld [vmem:[%s1 + $0xb80] sm:$0xff]
    %v399 = vld [vmem:[%s1 + $0xb88] sm:$0xff]
    %v400 = vld [vmem:[%s1 + $0xb90] sm:$0xff]
    %v401 = vld [vmem:[%s1 + $0xb98] sm:$0xff]
    %v402 = vld [vmem:[%s1 + $0xba0] sm:$0xff]
    %v403 = vld [vmem:[%s1 + $0xba8] sm:$0xff]
    %v404 = vld [vmem:[%s1 + $0xbb0] sm:$0xff]
    %v405 = vld [vmem:[%s1 + $0xbb8] sm:$0xff]
    %v406 = vld [vmem:[%s1 + $0xbc0] sm:$0xff]
    %v407 = vld [vmem:[%s1 + $0xbc8] sm:$0xff]
    %v408 = vld [vmem:[%s2] sm:$0xf]
    %v410 = vlaneseq
    %v411 = vshrl.u32 %v410, 7
    %v412 = vsub.s32 0, %v411
    %v413 = vrot.slane %v408, %v412
    %v414 = vlaneseq
    %v415 = vshrl.u32 %v414, 7
    %v416 = vsub.s32 1, %v415
    %v417 = vrot.slane %v408, %v416
    %v418 = vlaneseq
    %v419 = vshrl.u32 %v418, 7
    %v420 = vsub.s32 2, %v419
    %v421 = vrot.slane %v408, %v420
    %v422 = vlaneseq
    %v423 = vshrl.u32 %v422, 7
    %v424 = vsub.s32 3, %v423
    %v425 = vrot.slane %v408, %v424
    %v438 = vcombine.low %v22, %v24
    %v439 = vcombine.high %v22, %v24
    %v440 = vcombine.low %v26, %v28
    %v441 = vcombine.high %v26, %v28
    %v443 = vunpack.c.l.s4 1966171168
    %v444 = vunpack.c.0.s8 %v443
    %v445 = vlaneseq
    %v446 = vshrl.u32 %v445, 7
    %v447 = vsub.s32 %v444, %v446
    %v448 = vrot.slane %v438, %v447
    %v450 = vunpack.c.l.s4 1966171168
    %v451 = vunpack.c.0.s8 %v450
    %v452 = vlaneseq
    %v453 = vshrl.u32 %v452, 7
    %v454 = vsub.s32 %v451, %v453
    %v455 = vrot.slane %v439, %v454
    %v457 = vunpack.c.l.s4 1966171168
    %v458 = vunpack.c.0.s8 %v457
    %v459 = vlaneseq
    %v460 = vshrl.u32 %v459, 7
    %v461 = vsub.s32 %v458, %v460
    %v462 = vrot.slane %v440, %v461
    %v464 = vunpack.c.l.s4 1966171168
    %v465 = vunpack.c.0.s8 %v464
    %v466 = vlaneseq
    %v467 = vshrl.u32 %v466, 7
    %v468 = vsub.s32 %v465, %v467
    %v469 = vrot.slane %v441, %v468
    %v470 = vcombine.low %v448, %v462
    %v471 = vcombine.high %v448, %v462
    %v472 = vcombine.low %v455, %v469
    %v473 = vcombine.high %v455, %v469
    %v475 = vunpack.c.l.s4 1966171168
    %v476 = vunpack.c.0.s8 %v475
    %v477 = vlaneseq
    %v478 = vshrl.u32 %v477, 7
    %v479 = vsub.s32 %v476, %v478
    %v480 = vrot.slane %v470, %v479
    %v482 = vunpack.c.l.s4 1966171168
    %v483 = vunpack.c.0.s8 %v482
    %v484 = vlaneseq
    %v485 = vshrl.u32 %v484, 7
    %v486 = vsub.s32 %v483, %v485
    %v487 = vrot.slane %v472, %v486
    %v489 = vunpack.c.l.s4 1966171168
    %v490 = vunpack.c.0.s8 %v489
    %v491 = vlaneseq
    %v492 = vshrl.u32 %v491, 7
    %v493 = vsub.s32 %v490, %v492
    %v494 = vrot.slane %v471, %v493
    %v496 = vunpack.c.l.s4 1966171168
    %v497 = vunpack.c.0.s8 %v496
    %v498 = vlaneseq
    %v499 = vshrl.u32 %v498, 7
    %v500 = vsub.s32 %v497, %v499
    %v501 = vrot.slane %v473, %v500
    %v502 = vcombine.high %v480, %v480
    %v503 = vcombine.high %v487, %v487
    %v504 = vcombine.high %v494, %v494
    %v505 = vcombine.high %v501, %v501
    %v506 = vcombine.low %v23, %v25
    %v507 = vcombine.low %v27, %v29
    %v509 = vunpack.c.l.s4 1966171168
    %v510 = vunpack.c.0.s8 %v509
    %v511 = vlaneseq
    %v512 = vshrl.u32 %v511, 7
    %v513 = vsub.s32 %v510, %v512
    %v514 = vrot.slane %v506, %v513
    %v516 = vunpack.c.l.s4 1966171168
    %v517 = vunpack.c.0.s8 %v516
    %v518 = vlaneseq
    %v519 = vshrl.u32 %v518, 7
    %v520 = vsub.s32 %v517, %v519
    %v521 = vrot.slane %v507, %v520
    %v522 = vcombine.low %v514, %v521
    %v523 = vcombine.high %v514, %v521
    %v525 = vunpack.c.l.s4 1966171168
    %v526 = vunpack.c.0.s8 %v525
    %v527 = vlaneseq
    %v528 = vshrl.u32 %v527, 7
    %v529 = vsub.s32 %v526, %v528
    %v530 = vrot.slane %v522, %v529
    %v532 = vunpack.c.l.s4 1966171168
    %v533 = vunpack.c.0.s8 %v532
    %v534 = vlaneseq
    %v535 = vshrl.u32 %v534, 7
    %v536 = vsub.s32 %v533, %v535
    %v537 = vrot.slane %v523, %v536
    %v538 = vcombine.high %v530, %v530
    %v539 = vcombine.high %v537, %v537
    %v929 = vunpack.c.l.b16 %v30
    %v930 = vunpack.c.h.b16 %v30
    %v931 = vunpack.c.l.b16 %v31
    %v932 = vunpack.c.h.b16 %v31
    %v933 = vunpack.c.l.b16 %v32
    %v934 = vunpack.c.h.b16 %v32
    %v935 = vunpack.c.l.b16 %v33
    %v936 = vunpack.c.h.b16 %v33
    %v937 = vunpack.c.l.b16 %v34
    %v938 = vunpack.c.h.b16 %v34
    %v939 = vunpack.c.l.b16 %v35
    %v940 = vunpack.c.h.b16 %v35
    %v941 = vunpack.c.l.b16 %v36
    %v942 = vunpack.c.h.b16 %v36
    %v943 = vunpack.c.l.b16 %v37
    %v944 = vunpack.c.h.b16 %v37
    %v945 = vunpack.c.l.b16 %v38
    %v946 = vunpack.c.h.b16 %v38
    %v947 = vunpack.c.l.b16 %v39
    %v948 = vunpack.c.h.b16 %v39
    %v949 = vunpack.c.l.b16 %v40
    %v950 = vunpack.c.h.b16 %v40
    %v951 = vunpack.c.l.b16 %v41
    %v952 = vunpack.c.h.b16 %v41
    %v953 = vunpack.c.l.b16 %v42
    %v954 = vunpack.c.h.b16 %v42
    %v955 = vunpack.c.l.b16 %v43
    %v956 = vunpack.c.h.b16 %v43
    %v957 = vunpack.c.l.b16 %v44
    %v958 = vunpack.c.h.b16 %v44
    %v959 = vunpack.c.l.b16 %v45
    %v960 = vunpack.c.h.b16 %v45
    %v961 = vunpack.c.l.b16 %v46
    %v962 = vunpack.c.h.b16 %v46
    %v963 = vunpack.c.l.b16 %v47
    %v964 = vunpack.c.h.b16 %v47
    %v965 = vunpack.c.l.b16 %v48
    %v966 = vunpack.c.h.b16 %v48
    %v967 = vunpack.c.l.b16 %v49
    %v968 = vunpack.c.h.b16 %v49
    %v969 = vunpack.c.l.b16 %v50
    %v970 = vunpack.c.h.b16 %v50
    %v971 = vunpack.c.l.b16 %v51
    %v972 = vunpack.c.h.b16 %v51
    %v973 = vunpack.c.l.b16 %v52
    %v974 = vunpack.c.h.b16 %v52
    %v975 = vunpack.c.l.b16 %v53
    %v976 = vunpack.c.h.b16 %v53
    %v977 = vunpack.c.l.b16 %v54
    %v978 = vunpack.c.h.b16 %v54
    %v979 = vunpack.c.l.b16 %v55
    %v980 = vunpack.c.h.b16 %v55
    %v981 = vunpack.c.l.b16 %v56
    %v982 = vunpack.c.h.b16 %v56
    %v983 = vunpack.c.l.b16 %v57
    %v984 = vunpack.c.h.b16 %v57
    %v985 = vunpack.c.l.b16 %v58
    %v986 = vunpack.c.h.b16 %v58
    %v987 = vunpack.c.l.b16 %v59
    %v988 = vunpack.c.h.b16 %v59
    %v989 = vunpack.c.l.b16 %v60
    %v990 = vunpack.c.h.b16 %v60
    %v991 = vunpack.c.l.b16 %v61
    %v992 = vunpack.c.h.b16 %v61
    %v993 = vunpack.c.l.b16 %v62
    %v994 = vunpack.c.h.b16 %v62
    %v995 = vunpack.c.l.b16 %v63
    %v996 = vunpack.c.h.b16 %v63
    %v997 = vunpack.c.l.b16 %v64
    %v998 = vunpack.c.h.b16 %v64
    %v999 = vunpack.c.l.b16 %v65
    %v1000 = vunpack.c.h.b16 %v65
    %v1001 = vunpack.c.l.b16 %v66
    %v1002 = vunpack.c.h.b16 %v66
    %v1003 = vunpack.c.l.b16 %v67
    %v1004 = vunpack.c.h.b16 %v67
    %v1005 = vunpack.c.l.b16 %v68
    %v1006 = vunpack.c.h.b16 %v68
    %v1007 = vunpack.c.l.b16 %v69
    %v1008 = vunpack.c.h.b16 %v69
    %v1009 = vunpack.c.l.b16 %v70
    %v1010 = vunpack.c.h.b16 %v70
    %v1011 = vunpack.c.l.b16 %v71
    %v1012 = vunpack.c.h.b16 %v71
    %v1013 = vunpack.c.l.b16 %v72
    %v1014 = vunpack.c.h.b16 %v72
    %v1015 = vunpack.c.l.b16 %v73
    %v1016 = vunpack.c.h.b16 %v73
    %v1017 = vunpack.c.l.b16 %v74
    %v1018 = vunpack.c.h.b16 %v74
    %v1019 = vunpack.c.l.b16 %v75
    %v1020 = vunpack.c.h.b16 %v75
    %v1021 = vunpack.c.l.b16 %v76
    %v1022 = vunpack.c.h.b16 %v76
    %v1023 = vunpack.c.l.b16 %v77
    %v1024 = vunpack.c.h.b16 %v77
    %v1025 = vunpack.c.l.b16 %v78
    %v1026 = vunpack.c.h.b16 %v78
    %v1027 = vunpack.c.l.b16 %v79
    %v1028 = vunpack.c.h.b16 %v79
    %v1029 = vunpack.c.l.b16 %v80
    %v1030 = vunpack.c.h.b16 %v80
    %v1031 = vunpack.c.l.b16 %v81
    %v1032 = vunpack.c.h.b16 %v81
    %v1033 = vunpack.c.l.b16 %v82
    %v1034 = vunpack.c.h.b16 %v82
    %v1035 = vunpack.c.l.b16 %v83
    %v1036 = vunpack.c.h.b16 %v83
    %v1037 = vunpack.c.l.b16 %v84
    %v1038 = vunpack.c.h.b16 %v84
    %v1039 = vunpack.c.l.b16 %v85
    %v1040 = vunpack.c.h.b16 %v85
    %v1041 = vunpack.c.l.b16 %v86
    %v1042 = vunpack.c.h.b16 %v86
    %v1043 = vunpack.c.l.b16 %v87
    %v1044 = vunpack.c.h.b16 %v87
    %v1045 = vunpack.c.l.b16 %v88
    %v1046 = vunpack.c.h.b16 %v88
    %v1047 = vunpack.c.l.b16 %v89
    %v1048 = vunpack.c.h.b16 %v89
    %v1049 = vunpack.c.l.b16 %v90
    %v1050 = vunpack.c.h.b16 %v90
    %v1051 = vunpack.c.l.b16 %v91
    %v1052 = vunpack.c.h.b16 %v91
    %v1053 = vunpack.c.l.b16 %v92
    %v1054 = vunpack.c.h.b16 %v92
    %v1055 = vunpack.c.l.b16 %v93
    %v1056 = vunpack.c.h.b16 %v93
    %v1057 = vunpack.c.l.b16 %v94
    %v1058 = vunpack.c.h.b16 %v94
    %v1059 = vunpack.c.l.b16 %v95
    %v1060 = vunpack.c.h.b16 %v95
    %v1061 = vunpack.c.l.b16 %v96
    %v1062 = vunpack.c.h.b16 %v96
    %v1063 = vunpack.c.l.b16 %v97
    %v1064 = vunpack.c.h.b16 %v97
    %v1065 = vunpack.c.l.b16 %v98
    %v1066 = vunpack.c.h.b16 %v98
    %v1067 = vunpack.c.l.b16 %v99
    %v1068 = vunpack.c.h.b16 %v99
    %v1069 = vunpack.c.l.b16 %v100
    %v1070 = vunpack.c.h.b16 %v100
    %v1071 = vunpack.c.l.b16 %v101
    %v1072 = vunpack.c.h.b16 %v101
    %v1073 = vunpack.c.l.b16 %v102
    %v1074 = vunpack.c.h.b16 %v102
    %v1075 = vunpack.c.l.b16 %v103
    %v1076 = vunpack.c.h.b16 %v103
    %v1077 = vunpack.c.l.b16 %v104
    %v1078 = vunpack.c.h.b16 %v104
    %v1079 = vunpack.c.l.b16 %v105
    %v1080 = vunpack.c.h.b16 %v105
    %v1081 = vunpack.c.l.b16 %v106
    %v1082 = vunpack.c.h.b16 %v106
    %v1083 = vunpack.c.l.b16 %v107
    %v1084 = vunpack.c.h.b16 %v107
    %v1085 = vunpack.c.l.b16 %v108
    %v1086 = vunpack.c.h.b16 %v108
    %v1087 = vunpack.c.l.b16 %v109
    %v1088 = vunpack.c.h.b16 %v109
    %v1089 = vunpack.c.l.b16 %v110
    %v1090 = vunpack.c.h.b16 %v110
    %v1091 = vunpack.c.l.b16 %v111
    %v1092 = vunpack.c.h.b16 %v111
    %v1093 = vunpack.c.l.b16 %v112
    %v1094 = vunpack.c.h.b16 %v112
    %v1095 = vunpack.c.l.b16 %v113
    %v1096 = vunpack.c.h.b16 %v113
    %v1097 = vunpack.c.l.b16 %v114
    %v1098 = vunpack.c.h.b16 %v114
    %v1099 = vunpack.c.l.b16 %v115
    %v1100 = vunpack.c.h.b16 %v115
    %v1101 = vunpack.c.l.b16 %v116
    %v1102 = vunpack.c.h.b16 %v116
    %v1103 = vunpack.c.l.b16 %v117
    %v1104 = vunpack.c.h.b16 %v117
    %v1105 = vunpack.c.l.b16 %v118
    %v1106 = vunpack.c.h.b16 %v118
    %v1107 = vunpack.c.l.b16 %v119
    %v1108 = vunpack.c.h.b16 %v119
    %v1109 = vunpack.c.l.b16 %v120
    %v1110 = vunpack.c.h.b16 %v120
    %v1111 = vunpack.c.l.b16 %v121
    %v1112 = vunpack.c.h.b16 %v121
    %v1113 = vunpack.c.l.b16 %v122
    %v1114 = vunpack.c.h.b16 %v122
    %v1115 = vunpack.c.l.b16 %v123
    %v1116 = vunpack.c.h.b16 %v123
    %v1117 = vunpack.c.l.b16 %v124
    %v1118 = vunpack.c.h.b16 %v124
    %v1119 = vunpack.c.l.b16 %v125
    %v1120 = vunpack.c.h.b16 %v125
    %v1121 = vunpack.c.l.b16 %v126
    %v1122 = vunpack.c.h.b16 %v126
    %v1123 = vunpack.c.l.b16 %v127
    %v1124 = vunpack.c.h.b16 %v127
    %v1125 = vunpack.c.l.b16 %v128
    %v1126 = vunpack.c.h.b16 %v128
    %v1127 = vunpack.c.l.b16 %v129
    %v1128 = vunpack.c.h.b16 %v129
    %v1129 = vunpack.c.l.b16 %v130
    %v1130 = vunpack.c.h.b16 %v130
    %v1131 = vunpack.c.l.b16 %v131
    %v1132 = vunpack.c.h.b16 %v131
    %v1133 = vunpack.c.l.b16 %v132
    %v1134 = vunpack.c.h.b16 %v132
    %v1135 = vunpack.c.l.b16 %v133
    %v1136 = vunpack.c.h.b16 %v133
    %v1137 = vunpack.c.l.b16 %v134
    %v1138 = vunpack.c.h.b16 %v134
    %v1139 = vunpack.c.l.b16 %v135
    %v1140 = vunpack.c.h.b16 %v135
    %v1141 = vunpack.c.l.b16 %v136
    %v1142 = vunpack.c.h.b16 %v136
    %v1143 = vunpack.c.l.b16 %v137
    %v1144 = vunpack.c.h.b16 %v137
    %v1145 = vunpack.c.l.b16 %v138
    %v1146 = vunpack.c.h.b16 %v138
    %v1147 = vunpack.c.l.b16 %v139
    %v1148 = vunpack.c.h.b16 %v139
    %v1149 = vunpack.c.l.b16 %v140
    %v1150 = vunpack.c.h.b16 %v140
    %v1151 = vunpack.c.l.b16 %v141
    %v1152 = vunpack.c.h.b16 %v141
    %v1153 = vunpack.c.l.b16 %v142
    %v1154 = vunpack.c.h.b16 %v142
    %v1155 = vunpack.c.l.b16 %v143
    %v1156 = vunpack.c.h.b16 %v143
    %v1157 = vunpack.c.l.b16 %v144
    %v1158 = vunpack.c.h.b16 %v144
    %v1159 = vunpack.c.l.b16 %v145
    %v1160 = vunpack.c.h.b16 %v145
    %v1161 = vunpack.c.l.b16 %v146
    %v1162 = vunpack.c.h.b16 %v146
    %v1163 = vunpack.c.l.b16 %v147
    %v1164 = vunpack.c.h.b16 %v147
    %v1165 = vunpack.c.l.b16 %v148
    %v1166 = vunpack.c.h.b16 %v148
    %v1167 = vunpack.c.l.b16 %v149
    %v1168 = vunpack.c.h.b16 %v149
    %v1169 = vunpack.c.l.b16 %v150
    %v1170 = vunpack.c.h.b16 %v150
    %v1171 = vunpack.c.l.b16 %v151
    %v1172 = vunpack.c.h.b16 %v151
    %v1173 = vunpack.c.l.b16 %v152
    %v1174 = vunpack.c.h.b16 %v152
    %v1175 = vunpack.c.l.b16 %v153
    %v1176 = vunpack.c.h.b16 %v153
    %v1177 = vunpack.c.l.b16 %v154
    %v1178 = vunpack.c.h.b16 %v154
    %v1179 = vunpack.c.l.b16 %v155
    %v1180 = vunpack.c.h.b16 %v155
    %v1181 = vunpack.c.l.b16 %v156
    %v1182 = vunpack.c.h.b16 %v156
    %v1183 = vunpack.c.l.b16 %v157
    %v1184 = vunpack.c.h.b16 %v157
    %v1185 = vunpack.c.l.b16 %v158
    %v1186 = vunpack.c.h.b16 %v158
    %v1187 = vunpack.c.l.b16 %v159
    %v1188 = vunpack.c.h.b16 %v159
    %v1189 = vunpack.c.l.b16 %v160
    %v1190 = vunpack.c.h.b16 %v160
    %v1191 = vunpack.c.l.b16 %v161
    %v1192 = vunpack.c.h.b16 %v161
    %v1193 = vunpack.c.l.b16 %v162
    %v1194 = vunpack.c.h.b16 %v162
    %v1195 = vunpack.c.l.b16 %v163
    %v1196 = vunpack.c.h.b16 %v163
    %v1197 = vunpack.c.l.b16 %v164
    %v1198 = vunpack.c.h.b16 %v164
    %v1199 = vunpack.c.l.b16 %v165
    %v1200 = vunpack.c.h.b16 %v165
    %v1201 = vunpack.c.l.b16 %v166
    %v1202 = vunpack.c.h.b16 %v166
    %v1203 = vunpack.c.l.b16 %v167
    %v1204 = vunpack.c.h.b16 %v167
    %v1205 = vunpack.c.l.b16 %v168
    %v1206 = vunpack.c.h.b16 %v168
    %v1207 = vunpack.c.l.b16 %v169
    %v1208 = vunpack.c.h.b16 %v169
    %v1209 = vunpack.c.l.b16 %v170
    %v1210 = vunpack.c.h.b16 %v170
    %v1211 = vunpack.c.l.b16 %v171
    %v1212 = vunpack.c.h.b16 %v171
    %v1213 = vunpack.c.l.b16 %v172
    %v1214 = vunpack.c.h.b16 %v172
    %v1215 = vunpack.c.l.b16 %v173
    %v1216 = vunpack.c.h.b16 %v173
    %v1217 = vunpack.c.l.b16 %v174
    %v1218 = vunpack.c.h.b16 %v174
    %v1219 = vunpack.c.l.b16 %v175
    %v1220 = vunpack.c.h.b16 %v175
    %v1221 = vunpack.c.l.b16 %v176
    %v1222 = vunpack.c.h.b16 %v176
    %v1223 = vunpack.c.l.b16 %v177
    %v1224 = vunpack.c.h.b16 %v177
    %v1225 = vunpack.c.l.b16 %v178
    %v1226 = vunpack.c.h.b16 %v178
    %v1227 = vunpack.c.l.b16 %v179
    %v1228 = vunpack.c.h.b16 %v179
    %v1229 = vunpack.c.l.b16 %v180
    %v1230 = vunpack.c.h.b16 %v180
    %v1231 = vunpack.c.l.b16 %v181
    %v1232 = vunpack.c.h.b16 %v181
    %v1233 = vunpack.c.l.b16 %v182
    %v1234 = vunpack.c.h.b16 %v182
    %v1235 = vunpack.c.l.b16 %v183
    %v1236 = vunpack.c.h.b16 %v183
    %v1237 = vunpack.c.l.b16 %v184
    %v1238 = vunpack.c.h.b16 %v184
    %v1239 = vunpack.c.l.b16 %v185
    %v1240 = vunpack.c.h.b16 %v185
    %v1241 = vunpack.c.l.b16 %v186
    %v1242 = vunpack.c.h.b16 %v186
    %v1243 = vunpack.c.l.b16 %v187
    %v1244 = vunpack.c.h.b16 %v187
    %v1245 = vunpack.c.l.b16 %v188
    %v1246 = vunpack.c.h.b16 %v188
    %v1247 = vunpack.c.l.b16 %v189
    %v1248 = vunpack.c.h.b16 %v189
    %v1249 = vunpack.c.l.b16 %v190
    %v1250 = vunpack.c.h.b16 %v190
    %v1251 = vunpack.c.l.b16 %v191
    %v1252 = vunpack.c.h.b16 %v191
    %v1253 = vunpack.c.l.b16 %v192
    %v1254 = vunpack.c.h.b16 %v192
    %v1255 = vunpack.c.l.b16 %v193
    %v1256 = vunpack.c.h.b16 %v193
    %v1257 = vunpack.c.l.b16 %v194
    %v1258 = vunpack.c.h.b16 %v194
    %v1259 = vunpack.c.l.b16 %v195
    %v1260 = vunpack.c.h.b16 %v195
    %v1261 = vunpack.c.l.b16 %v196
    %v1262 = vunpack.c.h.b16 %v196
    %v1263 = vunpack.c.l.b16 %v197
    %v1264 = vunpack.c.h.b16 %v197
    %v1265 = vunpack.c.l.b16 %v198
    %v1266 = vunpack.c.h.b16 %v198
    %v1267 = vunpack.c.l.b16 %v199
    %v1268 = vunpack.c.h.b16 %v199
    %v1269 = vunpack.c.l.b16 %v200
    %v1270 = vunpack.c.h.b16 %v200
    %v1271 = vunpack.c.l.b16 %v201
    %v1272 = vunpack.c.h.b16 %v201
    %v1273 = vunpack.c.l.b16 %v202
    %v1274 = vunpack.c.h.b16 %v202
    %v1275 = vunpack.c.l.b16 %v203
    %v1276 = vunpack.c.h.b16 %v203
    %v1277 = vunpack.c.l.b16 %v204
    %v1278 = vunpack.c.h.b16 %v204
    %v1279 = vunpack.c.l.b16 %v205
    %v1280 = vunpack.c.h.b16 %v205
    %v1281 = vunpack.c.l.b16 %v206
    %v1282 = vunpack.c.h.b16 %v206
    %v1283 = vunpack.c.l.b16 %v207
    %v1284 = vunpack.c.h.b16 %v207
    %v1285 = vunpack.c.l.b16 %v208
    %v1286 = vunpack.c.h.b16 %v208
    %v1287 = vunpack.c.l.b16 %v209
    %v1288 = vunpack.c.h.b16 %v209
    %v1289 = vunpack.c.l.b16 %v210
    %v1290 = vunpack.c.h.b16 %v210
    %v1291 = vunpack.c.l.b16 %v211
    %v1292 = vunpack.c.h.b16 %v211
    %v1293 = vunpack.c.l.b16 %v212
    %v1294 = vunpack.c.h.b16 %v212
    %v1295 = vunpack.c.l.b16 %v213
    %v1296 = vunpack.c.h.b16 %v213
    %v1297 = vunpack.c.l.b16 %v214
    %v1298 = vunpack.c.h.b16 %v214
    %v1299 = vunpack.c.l.b16 %v215
    %v1300 = vunpack.c.h.b16 %v215
    %v1301 = vunpack.c.l.b16 %v216
    %v1302 = vunpack.c.h.b16 %v216
    %v1303 = vunpack.c.l.b16 %v217
    %v1304 = vunpack.c.h.b16 %v217
    %v1305 = vunpack.c.l.b16 %v218
    %v1306 = vunpack.c.h.b16 %v218
    %v1307 = vunpack.c.l.b16 %v219
    %v1308 = vunpack.c.h.b16 %v219
    %v1309 = vunpack.c.l.b16 %v220
    %v1310 = vunpack.c.h.b16 %v220
    %v1311 = vunpack.c.l.b16 %v221
    %v1312 = vunpack.c.h.b16 %v221
    %v1313 = vunpack.c.l.b16 %v222
    %v1314 = vunpack.c.h.b16 %v222
    %v1315 = vunpack.c.l.b16 %v223
    %v1316 = vunpack.c.h.b16 %v223
    %v1317 = vunpack.c.l.b16 %v224
    %v1318 = vunpack.c.h.b16 %v224
    %v1319 = vunpack.c.l.b16 %v225
    %v1320 = vunpack.c.h.b16 %v225
    %v1321 = vunpack.c.l.b16 %v226
    %v1322 = vunpack.c.h.b16 %v226
    %v1323 = vunpack.c.l.b16 %v227
    %v1324 = vunpack.c.h.b16 %v227
    %v1325 = vunpack.c.l.b16 %v228
    %v1326 = vunpack.c.h.b16 %v228
    %v1327 = vunpack.c.l.b16 %v229
    %v1328 = vunpack.c.h.b16 %v229
    %v1329 = vunpack.c.l.b16 %v230
    %v1330 = vunpack.c.h.b16 %v230
    %v1331 = vunpack.c.l.b16 %v231
    %v1332 = vunpack.c.h.b16 %v231
    %v1333 = vunpack.c.l.b16 %v232
    %v1334 = vunpack.c.h.b16 %v232
    %v1335 = vunpack.c.l.b16 %v233
    %v1336 = vunpack.c.h.b16 %v233
    %v1337 = vunpack.c.l.b16 %v234
    %v1338 = vunpack.c.h.b16 %v234
    %v1339 = vunpack.c.l.b16 %v235
    %v1340 = vunpack.c.h.b16 %v235
    %v1341 = vunpack.c.l.b16 %v236
    %v1342 = vunpack.c.h.b16 %v236
    %v1343 = vunpack.c.l.b16 %v237
    %v1344 = vunpack.c.h.b16 %v237
    %v1345 = vunpack.c.l.b16 %v238
    %v1346 = vunpack.c.h.b16 %v238
    %v1347 = vunpack.c.l.b16 %v239
    %v1348 = vunpack.c.h.b16 %v239
    %v1349 = vunpack.c.l.b16 %v240
    %v1350 = vunpack.c.h.b16 %v240
    %v1351 = vunpack.c.l.b16 %v241
    %v1352 = vunpack.c.h.b16 %v241
    %v1353 = vunpack.c.l.b16 %v242
    %v1354 = vunpack.c.h.b16 %v242
    %v1355 = vunpack.c.l.b16 %v243
    %v1356 = vunpack.c.h.b16 %v243
    %v1357 = vunpack.c.l.b16 %v244
    %v1358 = vunpack.c.h.b16 %v244
    %v1359 = vunpack.c.l.b16 %v245
    %v1360 = vunpack.c.h.b16 %v245
    %v1361 = vunpack.c.l.b16 %v246
    %v1362 = vunpack.c.h.b16 %v246
    %v1363 = vunpack.c.l.b16 %v247
    %v1364 = vunpack.c.h.b16 %v247
    %v1365 = vunpack.c.l.b16 %v248
    %v1366 = vunpack.c.h.b16 %v248
    %v1367 = vunpack.c.l.b16 %v249
    %v1368 = vunpack.c.h.b16 %v249
    %v1369 = vunpack.c.l.b16 %v250
    %v1370 = vunpack.c.h.b16 %v250
    %v1371 = vunpack.c.l.b16 %v251
    %v1372 = vunpack.c.h.b16 %v251
    %v1373 = vunpack.c.l.b16 %v252
    %v1374 = vunpack.c.h.b16 %v252
    %v1375 = vunpack.c.l.b16 %v253
    %v1376 = vunpack.c.h.b16 %v253
    %v1377 = vunpack.c.l.b16 %v254
    %v1378 = vunpack.c.h.b16 %v254
    %v1379 = vunpack.c.l.b16 %v255
    %v1380 = vunpack.c.h.b16 %v255
    %v1381 = vunpack.c.l.b16 %v256
    %v1382 = vunpack.c.h.b16 %v256
    %v1383 = vunpack.c.l.b16 %v257
    %v1384 = vunpack.c.h.b16 %v257
    %v1385 = vunpack.c.l.b16 %v258
    %v1386 = vunpack.c.h.b16 %v258
    %v1387 = vunpack.c.l.b16 %v259
    %v1388 = vunpack.c.h.b16 %v259
    %v1389 = vunpack.c.l.b16 %v260
    %v1390 = vunpack.c.h.b16 %v260
    %v1391 = vunpack.c.l.b16 %v261
    %v1392 = vunpack.c.h.b16 %v261
    %v1393 = vunpack.c.l.b16 %v262
    %v1394 = vunpack.c.h.b16 %v262
    %v1395 = vunpack.c.l.b16 %v263
    %v1396 = vunpack.c.h.b16 %v263
    %v1397 = vunpack.c.l.b16 %v264
    %v1398 = vunpack.c.h.b16 %v264
    %v1399 = vunpack.c.l.b16 %v265
    %v1400 = vunpack.c.h.b16 %v265
    %v1401 = vunpack.c.l.b16 %v266
    %v1402 = vunpack.c.h.b16 %v266
    %v1403 = vunpack.c.l.b16 %v267
    %v1404 = vunpack.c.h.b16 %v267
    %v1405 = vunpack.c.l.b16 %v268
    %v1406 = vunpack.c.h.b16 %v268
    %v1407 = vunpack.c.l.b16 %v269
    %v1408 = vunpack.c.h.b16 %v269
    %v1409 = vunpack.c.l.b16 %v270
    %v1410 = vunpack.c.h.b16 %v270
    %v1411 = vunpack.c.l.b16 %v271
    %v1412 = vunpack.c.h.b16 %v271
    %v1413 = vunpack.c.l.b16 %v272
    %v1414 = vunpack.c.h.b16 %v272
    %v1415 = vunpack.c.l.b16 %v273
    %v1416 = vunpack.c.h.b16 %v273
    %v1417 = vunpack.c.l.b16 %v274
    %v1418 = vunpack.c.h.b16 %v274
    %v1419 = vunpack.c.l.b16 %v275
    %v1420 = vunpack.c.h.b16 %v275
    %v1421 = vunpack.c.l.b16 %v276
    %v1422 = vunpack.c.h.b16 %v276
    %v1423 = vunpack.c.l.b16 %v277
    %v1424 = vunpack.c.h.b16 %v277
    %v1425 = vunpack.c.l.b16 %v278
    %v1426 = vunpack.c.h.b16 %v278
    %v1427 = vunpack.c.l.b16 %v279
    %v1428 = vunpack.c.h.b16 %v279
    %v1429 = vunpack.c.l.b16 %v280
    %v1430 = vunpack.c.h.b16 %v280
    %v1431 = vunpack.c.l.b16 %v281
    %v1432 = vunpack.c.h.b16 %v281
    %v1433 = vunpack.c.l.b16 %v282
    %v1434 = vunpack.c.h.b16 %v282
    %v1435 = vunpack.c.l.b16 %v283
    %v1436 = vunpack.c.h.b16 %v283
    %v1437 = vunpack.c.l.b16 %v284
    %v1438 = vunpack.c.h.b16 %v284
    %v1439 = vunpack.c.l.b16 %v285
    %v1440 = vunpack.c.h.b16 %v285
    %v1441 = vunpack.c.l.b16 %v286
    %v1442 = vunpack.c.h.b16 %v286
    %v1443 = vunpack.c.l.b16 %v287
    %v1444 = vunpack.c.h.b16 %v287
    %v1445 = vunpack.c.l.b16 %v288
    %v1446 = vunpack.c.h.b16 %v288
    %v1447 = vunpack.c.l.b16 %v289
    %v1448 = vunpack.c.h.b16 %v289
    %v1449 = vunpack.c.l.b16 %v290
    %v1450 = vunpack.c.h.b16 %v290
    %v1451 = vunpack.c.l.b16 %v291
    %v1452 = vunpack.c.h.b16 %v291
    %v1453 = vunpack.c.l.b16 %v292
    %v1454 = vunpack.c.h.b16 %v292
    %v1455 = vunpack.c.l.b16 %v293
    %v1456 = vunpack.c.h.b16 %v293
    %v1457 = vunpack.c.l.b16 %v294
    %v1458 = vunpack.c.h.b16 %v294
    %v1459 = vunpack.c.l.b16 %v295
    %v1460 = vunpack.c.h.b16 %v295
    %v1461 = vunpack.c.l.b16 %v296
    %v1462 = vunpack.c.h.b16 %v296
    %v1463 = vunpack.c.l.b16 %v297
    %v1464 = vunpack.c.h.b16 %v297
    %v1465 = vunpack.c.l.b16 %v298
    %v1466 = vunpack.c.h.b16 %v298
    %v1467 = vunpack.c.l.b16 %v299
    %v1468 = vunpack.c.h.b16 %v299
    %v1469 = vunpack.c.l.b16 %v300
    %v1470 = vunpack.c.h.b16 %v300
    %v1471 = vunpack.c.l.b16 %v301
    %v1472 = vunpack.c.h.b16 %v301
    %v1473 = vunpack.c.l.b16 %v302
    %v1474 = vunpack.c.h.b16 %v302
    %v1475 = vunpack.c.l.b16 %v303
    %v1476 = vunpack.c.h.b16 %v303
    %v1477 = vunpack.c.l.b16 %v304
    %v1478 = vunpack.c.h.b16 %v304
    %v1479 = vunpack.c.l.b16 %v305
    %v1480 = vunpack.c.h.b16 %v305
    %v1481 = vunpack.c.l.b16 %v306
    %v1482 = vunpack.c.h.b16 %v306
    %v1483 = vunpack.c.l.b16 %v307
    %v1484 = vunpack.c.h.b16 %v307
    %v1485 = vunpack.c.l.b16 %v308
    %v1486 = vunpack.c.h.b16 %v308
    %v1487 = vunpack.c.l.b16 %v309
    %v1488 = vunpack.c.h.b16 %v309
    %v1489 = vunpack.c.l.b16 %v310
    %v1490 = vunpack.c.h.b16 %v310
    %v1491 = vunpack.c.l.b16 %v311
    %v1492 = vunpack.c.h.b16 %v311
    %v1493 = vunpack.c.l.b16 %v312
    %v1494 = vunpack.c.h.b16 %v312
    %v1495 = vunpack.c.l.b16 %v313
    %v1496 = vunpack.c.h.b16 %v313
    %v1497 = vunpack.c.l.b16 %v314
    %v1498 = vunpack.c.h.b16 %v314
    %v1499 = vunpack.c.l.b16 %v315
    %v1500 = vunpack.c.h.b16 %v315
    %v1501 = vunpack.c.l.b16 %v316
    %v1502 = vunpack.c.h.b16 %v316
    %v1503 = vunpack.c.l.b16 %v317
    %v1504 = vunpack.c.h.b16 %v317
    %v1505 = vunpack.c.l.b16 %v318
    %v1506 = vunpack.c.h.b16 %v318
    %v1507 = vunpack.c.l.b16 %v319
    %v1508 = vunpack.c.h.b16 %v319
    %v1509 = vunpack.c.l.b16 %v320
    %v1510 = vunpack.c.h.b16 %v320
    %v1511 = vunpack.c.l.b16 %v321
    %v1512 = vunpack.c.h.b16 %v321
    %v1513 = vunpack.c.l.b16 %v322
    %v1514 = vunpack.c.h.b16 %v322
    %v1515 = vunpack.c.l.b16 %v323
    %v1516 = vunpack.c.h.b16 %v323
    %v1517 = vunpack.c.l.b16 %v324
    %v1518 = vunpack.c.h.b16 %v324
    %v1519 = vunpack.c.l.b16 %v325
    %v1520 = vunpack.c.h.b16 %v325
    %v1521 = vunpack.c.l.b16 %v326
    %v1522 = vunpack.c.h.b16 %v326
    %v1523 = vunpack.c.l.b16 %v327
    %v1524 = vunpack.c.h.b16 %v327
    %v1525 = vunpack.c.l.b16 %v328
    %v1526 = vunpack.c.h.b16 %v328
    %v1527 = vunpack.c.l.b16 %v329
    %v1528 = vunpack.c.h.b16 %v329
    %v1529 = vunpack.c.l.b16 %v330
    %v1530 = vunpack.c.h.b16 %v330
    %v1531 = vunpack.c.l.b16 %v331
    %v1532 = vunpack.c.h.b16 %v331
    %v1533 = vunpack.c.l.b16 %v332
    %v1534 = vunpack.c.h.b16 %v332
    %v1535 = vunpack.c.l.b16 %v333
    %v1536 = vunpack.c.h.b16 %v333
    %v1537 = vunpack.c.l.b16 %v334
    %v1538 = vunpack.c.h.b16 %v334
    %v1539 = vunpack.c.l.b16 %v335
    %v1540 = vunpack.c.h.b16 %v335
    %v1541 = vunpack.c.l.b16 %v336
    %v1542 = vunpack.c.h.b16 %v336
    %v1543 = vunpack.c.l.b16 %v337
    %v1544 = vunpack.c.h.b16 %v337
    %v1545 = vunpack.c.l.b16 %v338
    %v1546 = vunpack.c.h.b16 %v338
    %v1547 = vunpack.c.l.b16 %v339
    %v1548 = vunpack.c.h.b16 %v339
    %v1549 = vunpack.c.l.b16 %v340
    %v1550 = vunpack.c.h.b16 %v340
    %v1551 = vunpack.c.l.b16 %v341
    %v1552 = vunpack.c.h.b16 %v341
    %v1553 = vunpack.c.l.b16 %v342
    %v1554 = vunpack.c.h.b16 %v342
    %v1555 = vunpack.c.l.b16 %v343
    %v1556 = vunpack.c.h.b16 %v343
    %v1557 = vunpack.c.l.b16 %v344
    %v1558 = vunpack.c.h.b16 %v344
    %v1559 = vunpack.c.l.b16 %v345
    %v1560 = vunpack.c.h.b16 %v345
    %v1561 = vunpack.c.l.b16 %v346
    %v1562 = vunpack.c.h.b16 %v346
    %v1563 = vunpack.c.l.b16 %v347
    %v1564 = vunpack.c.h.b16 %v347
    %v1565 = vunpack.c.l.b16 %v348
    %v1566 = vunpack.c.h.b16 %v348
    %v1567 = vunpack.c.l.b16 %v349
    %v1568 = vunpack.c.h.b16 %v349
    %v1569 = vunpack.c.l.b16 %v350
    %v1570 = vunpack.c.h.b16 %v350
    %v1571 = vunpack.c.l.b16 %v351
    %v1572 = vunpack.c.h.b16 %v351
    %v1573 = vunpack.c.l.b16 %v352
    %v1574 = vunpack.c.h.b16 %v352
    %v1575 = vunpack.c.l.b16 %v353
    %v1576 = vunpack.c.h.b16 %v353
    %v1577 = vunpack.c.l.b16 %v354
    %v1578 = vunpack.c.h.b16 %v354
    %v1579 = vunpack.c.l.b16 %v355
    %v1580 = vunpack.c.h.b16 %v355
    %v1581 = vunpack.c.l.b16 %v356
    %v1582 = vunpack.c.h.b16 %v356
    %v1583 = vunpack.c.l.b16 %v357
    %v1584 = vunpack.c.h.b16 %v357
    %v1585 = vunpack.c.l.b16 %v358
    %v1586 = vunpack.c.h.b16 %v358
    %v1587 = vunpack.c.l.b16 %v359
    %v1588 = vunpack.c.h.b16 %v359
    %v1589 = vunpack.c.l.b16 %v360
    %v1590 = vunpack.c.h.b16 %v360
    %v1591 = vunpack.c.l.b16 %v361
    %v1592 = vunpack.c.h.b16 %v361
    %v1593 = vunpack.c.l.b16 %v362
    %v1594 = vunpack.c.h.b16 %v362
    %v1595 = vunpack.c.l.b16 %v363
    %v1596 = vunpack.c.h.b16 %v363
    %v1597 = vunpack.c.l.b16 %v364
    %v1598 = vunpack.c.h.b16 %v364
    %v1599 = vunpack.c.l.b16 %v365
    %v1600 = vunpack.c.h.b16 %v365
    %v1601 = vunpack.c.l.b16 %v366
    %v1602 = vunpack.c.h.b16 %v366
    %v1603 = vunpack.c.l.b16 %v367
    %v1604 = vunpack.c.h.b16 %v367
    %v1605 = vunpack.c.l.b16 %v368
    %v1606 = vunpack.c.h.b16 %v368
    %v1607 = vunpack.c.l.b16 %v369
    %v1608 = vunpack.c.h.b16 %v369
    %v1609 = vunpack.c.l.b16 %v370
    %v1610 = vunpack.c.h.b16 %v370
    %v1611 = vunpack.c.l.b16 %v371
    %v1612 = vunpack.c.h.b16 %v371
    %v1613 = vunpack.c.l.b16 %v372
    %v1614 = vunpack.c.h.b16 %v372
    %v1615 = vunpack.c.l.b16 %v373
    %v1616 = vunpack.c.h.b16 %v373
    %v1617 = vunpack.c.l.b16 %v374
    %v1618 = vunpack.c.h.b16 %v374
    %v1619 = vunpack.c.l.b16 %v375
    %v1620 = vunpack.c.h.b16 %v375
    %v1621 = vunpack.c.l.b16 %v376
    %v1622 = vunpack.c.h.b16 %v376
    %v1623 = vunpack.c.l.b16 %v377
    %v1624 = vunpack.c.h.b16 %v377
    %v1625 = vunpack.c.l.b16 %v378
    %v1626 = vunpack.c.h.b16 %v378
    %v1627 = vunpack.c.l.b16 %v379
    %v1628 = vunpack.c.h.b16 %v379
    %v1629 = vunpack.c.l.b16 %v380
    %v1630 = vunpack.c.h.b16 %v380
    %v1631 = vunpack.c.l.b16 %v381
    %v1632 = vunpack.c.h.b16 %v381
    %v1633 = vunpack.c.l.b16 %v382
    %v1634 = vunpack.c.h.b16 %v382
    %v1635 = vunpack.c.l.b16 %v383
    %v1636 = vunpack.c.h.b16 %v383
    %v1637 = vunpack.c.l.b16 %v384
    %v1638 = vunpack.c.h.b16 %v384
    %v1639 = vunpack.c.l.b16 %v385
    %v1640 = vunpack.c.h.b16 %v385
    %v1641 = vunpack.c.l.b16 %v386
    %v1642 = vunpack.c.h.b16 %v386
    %v1643 = vunpack.c.l.b16 %v387
    %v1644 = vunpack.c.h.b16 %v387
    %v1645 = vunpack.c.l.b16 %v388
    %v1646 = vunpack.c.h.b16 %v388
    %v1647 = vunpack.c.l.b16 %v389
    %v1648 = vunpack.c.h.b16 %v389
    %v1649 = vunpack.c.l.b16 %v390
    %v1650 = vunpack.c.h.b16 %v390
    %v1651 = vunpack.c.l.b16 %v391
    %v1652 = vunpack.c.h.b16 %v391
    %v1653 = vunpack.c.l.b16 %v392
    %v1654 = vunpack.c.h.b16 %v392
    %v1655 = vunpack.c.l.b16 %v393
    %v1656 = vunpack.c.h.b16 %v393
    %v1657 = vunpack.c.l.b16 %v394
    %v1658 = vunpack.c.h.b16 %v394
    %v1659 = vunpack.c.l.b16 %v395
    %v1660 = vunpack.c.h.b16 %v395
    %v1661 = vunpack.c.l.b16 %v396
    %v1662 = vunpack.c.h.b16 %v396
    %v1663 = vunpack.c.l.b16 %v397
    %v1664 = vunpack.c.h.b16 %v397
    %v1665 = vunpack.c.l.b16 %v398
    %v1666 = vunpack.c.h.b16 %v398
    %v1667 = vunpack.c.l.b16 %v399
    %v1668 = vunpack.c.h.b16 %v399
    %v1669 = vunpack.c.l.b16 %v400
    %v1670 = vunpack.c.h.b16 %v400
    %v1671 = vunpack.c.l.b16 %v401
    %v1672 = vunpack.c.h.b16 %v401
    %v1673 = vunpack.c.l.b16 %v402
    %v1674 = vunpack.c.h.b16 %v402
    %v1675 = vunpack.c.l.b16 %v403
    %v1676 = vunpack.c.h.b16 %v403
    %v1677 = vunpack.c.l.b16 %v404
    %v1678 = vunpack.c.h.b16 %v404
    %v1679 = vunpack.c.l.b16 %v405
    %v1680 = vunpack.c.h.b16 %v405
    %v1681 = vunpack.c.l.b16 %v406
    %v1682 = vunpack.c.h.b16 %v406
    %v1683 = vunpack.c.l.b16 %v407
    %v1684 = vunpack.c.h.b16 %v407
    %v1685 = vpack.c.b16 %v933, %v929
    %v1686 = vpack.c.b16 %v934, %v930
    %v1687 = vpack.c.b16 %v935, %v931
    %v1688 = vpack.c.b16 %v936, %v932
    %v1689 = vpack.c.b16 %v941, %v937
    %v1690 = vpack.c.b16 %v942, %v938
    %v1691 = vpack.c.b16 %v943, %v939
    %v1692 = vpack.c.b16 %v944, %v940
    %v1693 = vpack.c.b16 %v949, %v945
    %v1694 = vpack.c.b16 %v950, %v946
    %v1695 = vpack.c.b16 %v951, %v947
    %v1696 = vpack.c.b16 %v952, %v948
    %v1697 = vpack.c.b16 %v957, %v953
    %v1698 = vpack.c.b16 %v958, %v954
    %v1699 = vpack.c.b16 %v959, %v955
    %v1700 = vpack.c.b16 %v960, %v956
    %v1701 = vpack.c.b16 %v965, %v961
    %v1702 = vpack.c.b16 %v966, %v962
    %v1703 = vpack.c.b16 %v967, %v963
    %v1704 = vpack.c.b16 %v968, %v964
    %v1705 = vpack.c.b16 %v973, %v969
    %v1706 = vpack.c.b16 %v974, %v970
    %v1707 = vpack.c.b16 %v975, %v971
    %v1708 = vpack.c.b16 %v976, %v972
    %v1709 = vpack.c.b16 %v981, %v977
    %v1710 = vpack.c.b16 %v982, %v978
    %v1711 = vpack.c.b16 %v983, %v979
    %v1712 = vpack.c.b16 %v984, %v980
    %v1713 = vpack.c.b16 %v989, %v985
    %v1714 = vpack.c.b16 %v990, %v986
    %v1715 = vpack.c.b16 %v991, %v987
    %v1716 = vpack.c.b16 %v992, %v988
    %v1717 = vpack.c.b16 %v997, %v993
    %v1718 = vpack.c.b16 %v998, %v994
    %v1719 = vpack.c.b16 %v999, %v995
    %v1720 = vpack.c.b16 %v1000, %v996
    %v1721 = vpack.c.b16 %v1005, %v1001
    %v1722 = vpack.c.b16 %v1006, %v1002
    %v1723 = vpack.c.b16 %v1007, %v1003
    %v1724 = vpack.c.b16 %v1008, %v1004
    %v1725 = vpack.c.b16 %v1013, %v1009
    %v1726 = vpack.c.b16 %v1014, %v1010
    %v1727 = vpack.c.b16 %v1015, %v1011
    %v1728 = vpack.c.b16 %v1016, %v1012
    %v1729 = vpack.c.b16 %v1021, %v1017
    %v1730 = vpack.c.b16 %v1022, %v1018
    %v1731 = vpack.c.b16 %v1023, %v1019
    %v1732 = vpack.c.b16 %v1024, %v1020
    %v1733 = vpack.c.b16 %v1029, %v1025
    %v1734 = vpack.c.b16 %v1030, %v1026
    %v1735 = vpack.c.b16 %v1031, %v1027
    %v1736 = vpack.c.b16 %v1032, %v1028
    %v1737 = vpack.c.b16 %v1037, %v1033
    %v1738 = vpack.c.b16 %v1038, %v1034
    %v1739 = vpack.c.b16 %v1039, %v1035
    %v1740 = vpack.c.b16 %v1040, %v1036
    %v1741 = vpack.c.b16 %v1045, %v1041
    %v1742 = vpack.c.b16 %v1046, %v1042
    %v1743 = vpack.c.b16 %v1047, %v1043
    %v1744 = vpack.c.b16 %v1048, %v1044
    %v1745 = vpack.c.b16 %v1053, %v1049
    %v1746 = vpack.c.b16 %v1054, %v1050
    %v1747 = vpack.c.b16 %v1055, %v1051
    %v1748 = vpack.c.b16 %v1056, %v1052
    %v1749 = vpack.c.b16 %v1061, %v1057
    %v1750 = vpack.c.b16 %v1062, %v1058
    %v1751 = vpack.c.b16 %v1063, %v1059
    %v1752 = vpack.c.b16 %v1064, %v1060
    %v1753 = vpack.c.b16 %v1069, %v1065
    %v1754 = vpack.c.b16 %v1070, %v1066
    %v1755 = vpack.c.b16 %v1071, %v1067
    %v1756 = vpack.c.b16 %v1072, %v1068
    %v1757 = vpack.c.b16 %v1077, %v1073
    %v1758 = vpack.c.b16 %v1078, %v1074
    %v1759 = vpack.c.b16 %v1079, %v1075
    %v1760 = vpack.c.b16 %v1080, %v1076
    %v1761 = vpack.c.b16 %v1085, %v1081
    %v1762 = vpack.c.b16 %v1086, %v1082
    %v1763 = vpack.c.b16 %v1087, %v1083
    %v1764 = vpack.c.b16 %v1088, %v1084
    %v1765 = vpack.c.b16 %v1093, %v1089
    %v1766 = vpack.c.b16 %v1094, %v1090
    %v1767 = vpack.c.b16 %v1095, %v1091
    %v1768 = vpack.c.b16 %v1096, %v1092
    %v1769 = vpack.c.b16 %v1101, %v1097
    %v1770 = vpack.c.b16 %v1102, %v1098
    %v1771 = vpack.c.b16 %v1103, %v1099
    %v1772 = vpack.c.b16 %v1104, %v1100
    %v1773 = vpack.c.b16 %v1109, %v1105
    %v1774 = vpack.c.b16 %v1110, %v1106
    %v1775 = vpack.c.b16 %v1111, %v1107
    %v1776 = vpack.c.b16 %v1112, %v1108
    %v1777 = vpack.c.b16 %v1117, %v1113
    %v1778 = vpack.c.b16 %v1118, %v1114
    %v1779 = vpack.c.b16 %v1119, %v1115
    %v1780 = vpack.c.b16 %v1120, %v1116
    %v1781 = vpack.c.b16 %v1125, %v1121
    %v1782 = vpack.c.b16 %v1126, %v1122
    %v1783 = vpack.c.b16 %v1127, %v1123
    %v1784 = vpack.c.b16 %v1128, %v1124
    %v1785 = vpack.c.b16 %v1133, %v1129
    %v1786 = vpack.c.b16 %v1134, %v1130
    %v1787 = vpack.c.b16 %v1135, %v1131
    %v1788 = vpack.c.b16 %v1136, %v1132
    %v1789 = vpack.c.b16 %v1141, %v1137
    %v1790 = vpack.c.b16 %v1142, %v1138
    %v1791 = vpack.c.b16 %v1143, %v1139
    %v1792 = vpack.c.b16 %v1144, %v1140
    %v1793 = vpack.c.b16 %v1149, %v1145
    %v1794 = vpack.c.b16 %v1150, %v1146
    %v1795 = vpack.c.b16 %v1151, %v1147
    %v1796 = vpack.c.b16 %v1152, %v1148
    %v1797 = vpack.c.b16 %v1157, %v1153
    %v1798 = vpack.c.b16 %v1158, %v1154
    %v1799 = vpack.c.b16 %v1159, %v1155
    %v1800 = vpack.c.b16 %v1160, %v1156
    %v1801 = vpack.c.b16 %v1165, %v1161
    %v1802 = vpack.c.b16 %v1166, %v1162
    %v1803 = vpack.c.b16 %v1167, %v1163
    %v1804 = vpack.c.b16 %v1168, %v1164
    %v1805 = vpack.c.b16 %v1173, %v1169
    %v1806 = vpack.c.b16 %v1174, %v1170
    %v1807 = vpack.c.b16 %v1175, %v1171
    %v1808 = vpack.c.b16 %v1176, %v1172
    %v1809 = vpack.c.b16 %v1181, %v1177
    %v1810 = vpack.c.b16 %v1182, %v1178
    %v1811 = vpack.c.b16 %v1183, %v1179
    %v1812 = vpack.c.b16 %v1184, %v1180
    %v1813 = vpack.c.b16 %v1189, %v1185
    %v1814 = vpack.c.b16 %v1190, %v1186
    %v1815 = vpack.c.b16 %v1191, %v1187
    %v1816 = vpack.c.b16 %v1192, %v1188
    %v1817 = vpack.c.b16 %v1197, %v1193
    %v1818 = vpack.c.b16 %v1198, %v1194
    %v1819 = vpack.c.b16 %v1199, %v1195
    %v1820 = vpack.c.b16 %v1200, %v1196
    %v1821 = vpack.c.b16 %v1205, %v1201
    %v1822 = vpack.c.b16 %v1206, %v1202
    %v1823 = vpack.c.b16 %v1207, %v1203
    %v1824 = vpack.c.b16 %v1208, %v1204
    %v1825 = vpack.c.b16 %v1213, %v1209
    %v1826 = vpack.c.b16 %v1214, %v1210
    %v1827 = vpack.c.b16 %v1215, %v1211
    %v1828 = vpack.c.b16 %v1216, %v1212
    %v1829 = vpack.c.b16 %v1221, %v1217
    %v1830 = vpack.c.b16 %v1222, %v1218
    %v1831 = vpack.c.b16 %v1223, %v1219
    %v1832 = vpack.c.b16 %v1224, %v1220
    %v1833 = vpack.c.b16 %v1229, %v1225
    %v1834 = vpack.c.b16 %v1230, %v1226
    %v1835 = vpack.c.b16 %v1231, %v1227
    %v1836 = vpack.c.b16 %v1232, %v1228
    %v1837 = vpack.c.b16 %v1237, %v1233
    %v1838 = vpack.c.b16 %v1238, %v1234
    %v1839 = vpack.c.b16 %v1239, %v1235
    %v1840 = vpack.c.b16 %v1240, %v1236
    %v1841 = vpack.c.b16 %v1245, %v1241
    %v1842 = vpack.c.b16 %v1246, %v1242
    %v1843 = vpack.c.b16 %v1247, %v1243
    %v1844 = vpack.c.b16 %v1248, %v1244
    %v1845 = vpack.c.b16 %v1253, %v1249
    %v1846 = vpack.c.b16 %v1254, %v1250
    %v1847 = vpack.c.b16 %v1255, %v1251
    %v1848 = vpack.c.b16 %v1256, %v1252
    %v1849 = vpack.c.b16 %v1261, %v1257
    %v1850 = vpack.c.b16 %v1262, %v1258
    %v1851 = vpack.c.b16 %v1263, %v1259
    %v1852 = vpack.c.b16 %v1264, %v1260
    %v1853 = vpack.c.b16 %v1269, %v1265
    %v1854 = vpack.c.b16 %v1270, %v1266
    %v1855 = vpack.c.b16 %v1271, %v1267
    %v1856 = vpack.c.b16 %v1272, %v1268
    %v1857 = vpack.c.b16 %v1277, %v1273
    %v1858 = vpack.c.b16 %v1278, %v1274
    %v1859 = vpack.c.b16 %v1279, %v1275
    %v1860 = vpack.c.b16 %v1280, %v1276
    %v1861 = vpack.c.b16 %v1285, %v1281
    %v1862 = vpack.c.b16 %v1286, %v1282
    %v1863 = vpack.c.b16 %v1287, %v1283
    %v1864 = vpack.c.b16 %v1288, %v1284
    %v1865 = vpack.c.b16 %v1293, %v1289
    %v1866 = vpack.c.b16 %v1294, %v1290
    %v1867 = vpack.c.b16 %v1295, %v1291
    %v1868 = vpack.c.b16 %v1296, %v1292
    %v1869 = vpack.c.b16 %v1301, %v1297
    %v1870 = vpack.c.b16 %v1302, %v1298
    %v1871 = vpack.c.b16 %v1303, %v1299
    %v1872 = vpack.c.b16 %v1304, %v1300
    %v1873 = vpack.c.b16 %v1309, %v1305
    %v1874 = vpack.c.b16 %v1310, %v1306
    %v1875 = vpack.c.b16 %v1311, %v1307
    %v1876 = vpack.c.b16 %v1312, %v1308
    %v1877 = vpack.c.b16 %v1317, %v1313
    %v1878 = vpack.c.b16 %v1318, %v1314
    %v1879 = vpack.c.b16 %v1319, %v1315
    %v1880 = vpack.c.b16 %v1320, %v1316
    %v1881 = vpack.c.b16 %v1325, %v1321
    %v1882 = vpack.c.b16 %v1326, %v1322
    %v1883 = vpack.c.b16 %v1327, %v1323
    %v1884 = vpack.c.b16 %v1328, %v1324
    %v1885 = vpack.c.b16 %v1333, %v1329
    %v1886 = vpack.c.b16 %v1334, %v1330
    %v1887 = vpack.c.b16 %v1335, %v1331
    %v1888 = vpack.c.b16 %v1336, %v1332
    %v1889 = vpack.c.b16 %v1341, %v1337
    %v1890 = vpack.c.b16 %v1342, %v1338
    %v1891 = vpack.c.b16 %v1343, %v1339
    %v1892 = vpack.c.b16 %v1344, %v1340
    %v1893 = vpack.c.b16 %v1349, %v1345
    %v1894 = vpack.c.b16 %v1350, %v1346
    %v1895 = vpack.c.b16 %v1351, %v1347
    %v1896 = vpack.c.b16 %v1352, %v1348
    %v1897 = vpack.c.b16 %v1357, %v1353
    %v1898 = vpack.c.b16 %v1358, %v1354
    %v1899 = vpack.c.b16 %v1359, %v1355
    %v1900 = vpack.c.b16 %v1360, %v1356
    %v1901 = vpack.c.b16 %v1365, %v1361
    %v1902 = vpack.c.b16 %v1366, %v1362
    %v1903 = vpack.c.b16 %v1367, %v1363
    %v1904 = vpack.c.b16 %v1368, %v1364
    %v1905 = vpack.c.b16 %v1373, %v1369
    %v1906 = vpack.c.b16 %v1374, %v1370
    %v1907 = vpack.c.b16 %v1375, %v1371
    %v1908 = vpack.c.b16 %v1376, %v1372
    %v1909 = vpack.c.b16 %v1381, %v1377
    %v1910 = vpack.c.b16 %v1382, %v1378
    %v1911 = vpack.c.b16 %v1383, %v1379
    %v1912 = vpack.c.b16 %v1384, %v1380
    %v1913 = vpack.c.b16 %v1389, %v1385
    %v1914 = vpack.c.b16 %v1390, %v1386
    %v1915 = vpack.c.b16 %v1391, %v1387
    %v1916 = vpack.c.b16 %v1392, %v1388
    %v1917 = vpack.c.b16 %v1397, %v1393
    %v1918 = vpack.c.b16 %v1398, %v1394
    %v1919 = vpack.c.b16 %v1399, %v1395
    %v1920 = vpack.c.b16 %v1400, %v1396
    %v1921 = vpack.c.b16 %v1405, %v1401
    %v1922 = vpack.c.b16 %v1406, %v1402
    %v1923 = vpack.c.b16 %v1407, %v1403
    %v1924 = vpack.c.b16 %v1408, %v1404
    %v1925 = vpack.c.b16 %v1413, %v1409
    %v1926 = vpack.c.b16 %v1414, %v1410
    %v1927 = vpack.c.b16 %v1415, %v1411
    %v1928 = vpack.c.b16 %v1416, %v1412
    %v1929 = vpack.c.b16 %v1421, %v1417
    %v1930 = vpack.c.b16 %v1422, %v1418
    %v1931 = vpack.c.b16 %v1423, %v1419
    %v1932 = vpack.c.b16 %v1424, %v1420
    %v1933 = vpack.c.b16 %v1429, %v1425
    %v1934 = vpack.c.b16 %v1430, %v1426
    %v1935 = vpack.c.b16 %v1431, %v1427
    %v1936 = vpack.c.b16 %v1432, %v1428
    %v1937 = vpack.c.b16 %v1437, %v1433
    %v1938 = vpack.c.b16 %v1438, %v1434
    %v1939 = vpack.c.b16 %v1439, %v1435
    %v1940 = vpack.c.b16 %v1440, %v1436
    %v1941 = vpack.c.b16 %v1445, %v1441
    %v1942 = vpack.c.b16 %v1446, %v1442
    %v1943 = vpack.c.b16 %v1447, %v1443
    %v1944 = vpack.c.b16 %v1448, %v1444
    %v1945 = vpack.c.b16 %v1453, %v1449
    %v1946 = vpack.c.b16 %v1454, %v1450
    %v1947 = vpack.c.b16 %v1455, %v1451
    %v1948 = vpack.c.b16 %v1456, %v1452
    %v1949 = vpack.c.b16 %v1461, %v1457
    %v1950 = vpack.c.b16 %v1462, %v1458
    %v1951 = vpack.c.b16 %v1463, %v1459
    %v1952 = vpack.c.b16 %v1464, %v1460
    %v1953 = vpack.c.b16 %v1469, %v1465
    %v1954 = vpack.c.b16 %v1470, %v1466
    %v1955 = vpack.c.b16 %v1471, %v1467
    %v1956 = vpack.c.b16 %v1472, %v1468
    %v1957 = vpack.c.b16 %v1477, %v1473
    %v1958 = vpack.c.b16 %v1478, %v1474
    %v1959 = vpack.c.b16 %v1479, %v1475
    %v1960 = vpack.c.b16 %v1480, %v1476
    %v1961 = vpack.c.b16 %v1485, %v1481
    %v1962 = vpack.c.b16 %v1486, %v1482
    %v1963 = vpack.c.b16 %v1487, %v1483
    %v1964 = vpack.c.b16 %v1488, %v1484
    %v1965 = vpack.c.b16 %v1493, %v1489
    %v1966 = vpack.c.b16 %v1494, %v1490
    %v1967 = vpack.c.b16 %v1495, %v1491
    %v1968 = vpack.c.b16 %v1496, %v1492
    %v1969 = vpack.c.b16 %v1501, %v1497
    %v1970 = vpack.c.b16 %v1502, %v1498
    %v1971 = vpack.c.b16 %v1503, %v1499
    %v1972 = vpack.c.b16 %v1504, %v1500
    %v1973 = vpack.c.b16 %v1509, %v1505
    %v1974 = vpack.c.b16 %v1510, %v1506
    %v1975 = vpack.c.b16 %v1511, %v1507
    %v1976 = vpack.c.b16 %v1512, %v1508
    %v1977 = vpack.c.b16 %v1517, %v1513
    %v1978 = vpack.c.b16 %v1518, %v1514
    %v1979 = vpack.c.b16 %v1519, %v1515
    %v1980 = vpack.c.b16 %v1520, %v1516
    %v1981 = vpack.c.b16 %v1525, %v1521
    %v1982 = vpack.c.b16 %v1526, %v1522
    %v1983 = vpack.c.b16 %v1527, %v1523
    %v1984 = vpack.c.b16 %v1528, %v1524
    %v1985 = vpack.c.b16 %v1533, %v1529
    %v1986 = vpack.c.b16 %v1534, %v1530
    %v1987 = vpack.c.b16 %v1535, %v1531
    %v1988 = vpack.c.b16 %v1536, %v1532
    %v1989 = vpack.c.b16 %v1541, %v1537
    %v1990 = vpack.c.b16 %v1542, %v1538
    %v1991 = vpack.c.b16 %v1543, %v1539
    %v1992 = vpack.c.b16 %v1544, %v1540
    %v1993 = vpack.c.b16 %v1549, %v1545
    %v1994 = vpack.c.b16 %v1550, %v1546
    %v1995 = vpack.c.b16 %v1551, %v1547
    %v1996 = vpack.c.b16 %v1552, %v1548
    %v1997 = vpack.c.b16 %v1557, %v1553
    %v1998 = vpack.c.b16 %v1558, %v1554
    %v1999 = vpack.c.b16 %v1559, %v1555
    %v2000 = vpack.c.b16 %v1560, %v1556
    %v2001 = vpack.c.b16 %v1565, %v1561
    %v2002 = vpack.c.b16 %v1566, %v1562
    %v2003 = vpack.c.b16 %v1567, %v1563
    %v2004 = vpack.c.b16 %v1568, %v1564
    %v2005 = vpack.c.b16 %v1573, %v1569
    %v2006 = vpack.c.b16 %v1574, %v1570
    %v2007 = vpack.c.b16 %v1575, %v1571
    %v2008 = vpack.c.b16 %v1576, %v1572
    %v2009 = vpack.c.b16 %v1581, %v1577
    %v2010 = vpack.c.b16 %v1582, %v1578
    %v2011 = vpack.c.b16 %v1583, %v1579
    %v2012 = vpack.c.b16 %v1584, %v1580
    %v2013 = vpack.c.b16 %v1589, %v1585
    %v2014 = vpack.c.b16 %v1590, %v1586
    %v2015 = vpack.c.b16 %v1591, %v1587
    %v2016 = vpack.c.b16 %v1592, %v1588
    %v2017 = vpack.c.b16 %v1597, %v1593
    %v2018 = vpack.c.b16 %v1598, %v1594
    %v2019 = vpack.c.b16 %v1599, %v1595
    %v2020 = vpack.c.b16 %v1600, %v1596
    %v2021 = vpack.c.b16 %v1605, %v1601
    %v2022 = vpack.c.b16 %v1606, %v1602
    %v2023 = vpack.c.b16 %v1607, %v1603
    %v2024 = vpack.c.b16 %v1608, %v1604
    %v2025 = vpack.c.b16 %v1613, %v1609
    %v2026 = vpack.c.b16 %v1614, %v1610
    %v2027 = vpack.c.b16 %v1615, %v1611
    %v2028 = vpack.c.b16 %v1616, %v1612
    %v2029 = vpack.c.b16 %v1621, %v1617
    %v2030 = vpack.c.b16 %v1622, %v1618
    %v2031 = vpack.c.b16 %v1623, %v1619
    %v2032 = vpack.c.b16 %v1624, %v1620
    %v2033 = vpack.c.b16 %v1629, %v1625
    %v2034 = vpack.c.b16 %v1630, %v1626
    %v2035 = vpack.c.b16 %v1631, %v1627
    %v2036 = vpack.c.b16 %v1632, %v1628
    %v2037 = vpack.c.b16 %v1637, %v1633
    %v2038 = vpack.c.b16 %v1638, %v1634
    %v2039 = vpack.c.b16 %v1639, %v1635
    %v2040 = vpack.c.b16 %v1640, %v1636
    %v2041 = vpack.c.b16 %v1645, %v1641
    %v2042 = vpack.c.b16 %v1646, %v1642
    %v2043 = vpack.c.b16 %v1647, %v1643
    %v2044 = vpack.c.b16 %v1648, %v1644
    %v2045 = vpack.c.b16 %v1653, %v1649
    %v2046 = vpack.c.b16 %v1654, %v1650
    %v2047 = vpack.c.b16 %v1655, %v1651
    %v2048 = vpack.c.b16 %v1656, %v1652
    %v2049 = vpack.c.b16 %v1661, %v1657
    %v2050 = vpack.c.b16 %v1662, %v1658
    %v2051 = vpack.c.b16 %v1663, %v1659
    %v2052 = vpack.c.b16 %v1664, %v1660
    %v2053 = vpack.c.b16 %v1669, %v1665
    %v2054 = vpack.c.b16 %v1670, %v1666
    %v2055 = vpack.c.b16 %v1671, %v1667
    %v2056 = vpack.c.b16 %v1672, %v1668
    %v2057 = vpack.c.b16 %v1677, %v1673
    %v2058 = vpack.c.b16 %v1678, %v1674
    %v2059 = vpack.c.b16 %v1679, %v1675
    %v2060 = vpack.c.b16 %v1680, %v1676
    %v2061 = vpack.c.b16 %v1681, %v1681
    %v2062 = vpack.c.b16 %v1682, %v1682
    %v2063 = vpack.c.b16 %v1683, %v1683
    %v2064 = vpack.c.b16 %v1684, %v1684
    %vm2441 = vcmask 850944
    %v2443 = vsel %vm2441, %v539, 0
    %vm2445 = vcmask 1043456
    %v2447 = vsel %vm2445, %v2061, 0
    %v2450 = vsel %vm2445, %v2062, 0
    %v2453 = vsel %vm2445, %v2063, 0
    %v2456 = vsel %vm2445, %v2064, 0
    %2458 = vmatprep.subr.bf16.mxu0 %v1686
    %2459 = vmatpush1.bf16.msra.mxu0 %v1685
    %2460 = vmatprep.subr.bf16.mxu0 %v1690
    %2461 = vmatpush1.bf16.msra.mxu0 %v1689
    %2462 = vmatprep.subr.bf16.mxu0 %v1694
    %2463 = vmatpush1.bf16.msra.mxu0 %v1693
    %2464 = vmatprep.subr.bf16.mxu0 %v1698
    %2465 = vmatpush1.bf16.msra.mxu0 %v1697
    %2466 = vmatprep.subr.bf16.mxu0 %v1702
    %2467 = vmatpush1.bf16.msra.mxu0 %v1701
    %2468 = vmatprep.subr.bf16.mxu0 %v1706
    %2469 = vmatpush1.bf16.msra.mxu0 %v1705
    %2470 = vmatprep.subr.bf16.mxu0 %v1710
    %2471 = vmatpush1.bf16.msra.mxu0 %v1709
    %2472 = vmatprep.subr.bf16.mxu0 %v1714
    %2473 = vmatpush1.bf16.msra.mxu0 %v1713
    %2474 = vmatprep.subr.bf16.mxu0 %v1718
    %2475 = vmatpush1.bf16.msra.mxu0 %v1717
    %2476 = vmatprep.subr.bf16.mxu0 %v1722
    %2477 = vmatpush1.bf16.msra.mxu0 %v1721
    %2478 = vmatprep.subr.bf16.mxu0 %v1726
    %2479 = vmatpush1.bf16.msra.mxu0 %v1725
    %2480 = vmatprep.subr.bf16.mxu0 %v1730
    %2481 = vmatpush1.bf16.msra.mxu0 %v1729
    %2482 = vmatprep.subr.bf16.mxu0 %v1734
    %2483 = vmatpush1.bf16.msra.mxu0 %v1733
    %2484 = vmatprep.subr.bf16.mxu0 %v1738
    %2485 = vmatpush1.bf16.msra.mxu0 %v1737
    %2486 = vmatprep.subr.bf16.mxu0 %v1742
    %2487 = vmatpush1.bf16.msra.mxu0 %v1741
    %2488 = vmatprep.subr.bf16.mxu0 %v1746
    %2489 = vmatpush1.bf16.msra.mxu0 %v1745
    %2490 = vmatprep.mubr.bf16.mxu0 %v494
    %2491 = vmatmul.mubr.bf16.gmra.mrb[0].mxu0 %v480
    %v2492 = vpop.f32.mrb[0].mxu0
    %v2493 = vadd.f32 %v413, %v2492
    %v2494 = vpop.f32.mrb[0].mxu0
    %v2495 = vadd.f32 %v417, %v2494
    %v2496 = vpop.f32.mrb[0].mxu0
    %v2497 = vpop.f32.mrb[0].mxu0
    %2498 = vdwg.mxu0
    %2499 = vmatprep.subr.bf16.mxu0 %v1750
    %2500 = vmatpush1.bf16.msra.mxu0 %v1749
    %2501 = vmatprep.subr.bf16.mxu0 %v1754
    %2502 = vmatpush1.bf16.msra.mxu0 %v1753
    %2503 = vmatprep.subr.bf16.mxu0 %v1758
    %2504 = vmatpush1.bf16.msra.mxu0 %v1757
    %2505 = vmatprep.subr.bf16.mxu0 %v1762
    %2506 = vmatpush1.bf16.msra.mxu0 %v1761
    %2507 = vmatprep.subr.bf16.mxu0 %v1766
    %2508 = vmatpush1.bf16.msra.mxu0 %v1765
    %2509 = vmatprep.subr.bf16.mxu0 %v1770
    %2510 = vmatpush1.bf16.msra.mxu0 %v1769
    %2511 = vmatprep.subr.bf16.mxu0 %v1774
    %2512 = vmatpush1.bf16.msra.mxu0 %v1773
    %2513 = vmatprep.subr.bf16.mxu0 %v1778
    %2514 = vmatpush1.bf16.msra.mxu0 %v1777
    %2515 = vmatprep.subr.bf16.mxu0 %v1782
    %2516 = vmatpush1.bf16.msra.mxu0 %v1781
    %2517 = vmatprep.subr.bf16.mxu0 %v1786
    %2518 = vmatpush1.bf16.msra.mxu0 %v1785
    %2519 = vmatprep.subr.bf16.mxu0 %v1790
    %2520 = vmatpush1.bf16.msra.mxu0 %v1789
    %2521 = vmatprep.subr.bf16.mxu0 %v1794
    %2522 = vmatpush1.bf16.msra.mxu0 %v1793
    %2523 = vmatprep.subr.bf16.mxu0 %v1798
    %2524 = vmatpush1.bf16.msra.mxu0 %v1797
    %2525 = vmatprep.subr.bf16.mxu0 %v1802
    %2526 = vmatpush1.bf16.msra.mxu0 %v1801
    %2527 = vmatprep.subr.bf16.mxu0 %v1806
    %2528 = vmatpush1.bf16.msra.mxu0 %v1805
    %2529 = vmatprep.subr.bf16.mxu0 %v1810
    %2530 = vmatpush1.bf16.msra.mxu0 %v1809
    %2531 = vmatprep.mubr.bf16.mxu0 %v504
    %2532 = vmatmul.mubr.bf16.gmra.mrb[0].mxu0 %v502
    %v2533 = vpop.f32.mrb[0].mxu0
    %v2534 = vadd.f32 %v2493, %v2533
    %v2535 = vpop.f32.mrb[0].mxu0
    %v2536 = vadd.f32 %v2495, %v2535
    %v2537 = vpop.f32.mrb[0].mxu0
    %v2538 = vpop.f32.mrb[0].mxu0
    %2539 = vdwg.mxu0
    %2540 = vmatprep.subr.bf16.mxu0 %v1814
    %2541 = vmatpush1.bf16.msra.mxu0 %v1813
    %2542 = vmatprep.subr.bf16.mxu0 %v1818
    %2543 = vmatpush1.bf16.msra.mxu0 %v1817
    %2544 = vmatprep.subr.bf16.mxu0 %v1822
    %2545 = vmatpush1.bf16.msra.mxu0 %v1821
    %2546 = vmatprep.subr.bf16.mxu0 %v1826
    %2547 = vmatpush1.bf16.msra.mxu0 %v1825
    %2548 = vmatprep.subr.bf16.mxu0 %v1830
    %2549 = vmatpush1.bf16.msra.mxu0 %v1829
    %2550 = vmatprep.subr.bf16.mxu0 %v1834
    %2551 = vmatpush1.bf16.msra.mxu0 %v1833
    %2552 = vmatprep.subr.bf16.mxu0 %v1838
    %2553 = vmatpush1.bf16.msra.mxu0 %v1837
    %2554 = vmatprep.subr.bf16.mxu0 %v1842
    %2555 = vmatpush1.bf16.msra.mxu0 %v1841
    %2556 = vmatprep.subr.bf16.mxu0 %v1846
    %2557 = vmatpush1.bf16.msra.mxu0 %v1845
    %2558 = vmatprep.subr.bf16.mxu0 %v1850
    %2559 = vmatpush1.bf16.msra.mxu0 %v1849
    %2560 = vmatprep.subr.bf16.mxu0 %v1854
    %2561 = vmatpush1.bf16.msra.mxu0 %v1853
    %2562 = vmatprep.subr.bf16.mxu0 %v1858
    %2563 = vmatpush1.bf16.msra.mxu0 %v1857
    %2564 = vmatprep.subr.bf16.mxu0 %v1862
    %2565 = vmatpush1.bf16.msra.mxu0 %v1861
    %2566 = vmatprep.subr.bf16.mxu0 %v1866
    %2567 = vmatpush1.bf16.msra.mxu0 %v1865
    %2568 = vmatprep.subr.bf16.mxu0 %v1870
    %2569 = vmatpush1.bf16.msra.mxu0 %v1869
    %2570 = vmatprep.subr.bf16.mxu0 %v1874
    %2571 = vmatpush1.bf16.msra.mxu0 %v1873
    %2572 = vmatprep.mubr.bf16.mxu0 %v501
    %2573 = vmatmul.mubr.bf16.gmra.mrb[0].mxu0 %v487
    %v2574 = vpop.f32.mrb[0].mxu0
    %v2575 = vadd.f32 %v2534, %v2574
    %v2576 = vpop.f32.mrb[0].mxu0
    %v2577 = vadd.f32 %v2536, %v2576
    %v2578 = vpop.f32.mrb[0].mxu0
    %v2579 = vpop.f32.mrb[0].mxu0
    %2580 = vdwg.mxu0
    %2581 = vmatprep.subr.bf16.mxu0 %v1878
    %2582 = vmatpush1.bf16.msra.mxu0 %v1877
    %2583 = vmatprep.subr.bf16.mxu0 %v1882
    %2584 = vmatpush1.bf16.msra.mxu0 %v1881
    %2585 = vmatprep.subr.bf16.mxu0 %v1886
    %2586 = vmatpush1.bf16.msra.mxu0 %v1885
    %2587 = vmatprep.subr.bf16.mxu0 %v1890
    %2588 = vmatpush1.bf16.msra.mxu0 %v1889
    %2589 = vmatprep.subr.bf16.mxu0 %v1894
    %2590 = vmatpush1.bf16.msra.mxu0 %v1893
    %2591 = vmatprep.subr.bf16.mxu0 %v1898
    %2592 = vmatpush1.bf16.msra.mxu0 %v1897
    %2593 = vmatprep.subr.bf16.mxu0 %v1902
    %2594 = vmatpush1.bf16.msra.mxu0 %v1901
    %2595 = vmatprep.subr.bf16.mxu0 %v1906
    %2596 = vmatpush1.bf16.msra.mxu0 %v1905
    %2597 = vmatprep.subr.bf16.mxu0 %v1910
    %2598 = vmatpush1.bf16.msra.mxu0 %v1909
    %2599 = vmatprep.subr.bf16.mxu0 %v1914
    %2600 = vmatpush1.bf16.msra.mxu0 %v1913
    %2601 = vmatprep.subr.bf16.mxu0 %v1918
    %2602 = vmatpush1.bf16.msra.mxu0 %v1917
    %2603 = vmatprep.subr.bf16.mxu0 %v1922
    %2604 = vmatpush1.bf16.msra.mxu0 %v1921
    %2605 = vmatprep.subr.bf16.mxu0 %v1926
    %2606 = vmatpush1.bf16.msra.mxu0 %v1925
    %2607 = vmatprep.subr.bf16.mxu0 %v1930
    %2608 = vmatpush1.bf16.msra.mxu0 %v1929
    %2609 = vmatprep.subr.bf16.mxu0 %v1934
    %2610 = vmatpush1.bf16.msra.mxu0 %v1933
    %2611 = vmatprep.subr.bf16.mxu0 %v1938
    %2612 = vmatpush1.bf16.msra.mxu0 %v1937
    %2613 = vmatprep.mubr.bf16.mxu0 %v505
    %2614 = vmatmul.mubr.bf16.gmra.mrb[0].mxu0 %v503
    %v2615 = vpop.f32.mrb[0].mxu0
    %v2616 = vadd.f32 %v2575, %v2615
    %v2617 = vpop.f32.mrb[0].mxu0
    %v2618 = vadd.f32 %v2577, %v2617
    %v2619 = vpop.f32.mrb[0].mxu0
    %v2620 = vpop.f32.mrb[0].mxu0
    %2621 = vdwg.mxu0
    %2622 = vmatprep.subr.bf16.mxu0 %v1942
    %2623 = vmatpush1.bf16.msra.mxu0 %v1941
    %2624 = vmatprep.subr.bf16.mxu0 %v1946
    %2625 = vmatpush1.bf16.msra.mxu0 %v1945
    %2626 = vmatprep.subr.bf16.mxu0 %v1950
    %2627 = vmatpush1.bf16.msra.mxu0 %v1949
    %2628 = vmatprep.subr.bf16.mxu0 %v1954
    %2629 = vmatpush1.bf16.msra.mxu0 %v1953
    %2630 = vmatprep.subr.bf16.mxu0 %v1958
    %2631 = vmatpush1.bf16.msra.mxu0 %v1957
    %2632 = vmatprep.subr.bf16.mxu0 %v1962
    %2633 = vmatpush1.bf16.msra.mxu0 %v1961
    %2634 = vmatprep.subr.bf16.mxu0 %v1966
    %2635 = vmatpush1.bf16.msra.mxu0 %v1965
    %2636 = vmatprep.subr.bf16.mxu0 %v1970
    %2637 = vmatpush1.bf16.msra.mxu0 %v1969
    %2638 = vmatprep.subr.bf16.mxu0 %v1974
    %2639 = vmatpush1.bf16.msra.mxu0 %v1973
    %2640 = vmatprep.subr.bf16.mxu0 %v1978
    %2641 = vmatpush1.bf16.msra.mxu0 %v1977
    %2642 = vmatprep.subr.bf16.mxu0 %v1982
    %2643 = vmatpush1.bf16.msra.mxu0 %v1981
    %2644 = vmatprep.subr.bf16.mxu0 %v1986
    %2645 = vmatpush1.bf16.msra.mxu0 %v1985
    %2646 = vmatprep.subr.bf16.mxu0 %v1990
    %2647 = vmatpush1.bf16.msra.mxu0 %v1989
    %2648 = vmatprep.subr.bf16.mxu0 %v1994
    %2649 = vmatpush1.bf16.msra.mxu0 %v1993
    %2650 = vmatprep.subr.bf16.mxu0 %v1998
    %2651 = vmatpush1.bf16.msra.mxu0 %v1997
    %2652 = vmatprep.subr.bf16.mxu0 %v2002
    %2653 = vmatpush1.bf16.msra.mxu0 %v2001
    %2654 = vmatprep.mubr.bf16.mxu0 %v537
    %2655 = vmatmul.mubr.bf16.gmra.mrb[0].mxu0 %v530
    %v2656 = vpop.f32.mrb[0].mxu0
    %v2657 = vadd.f32 %v2616, %v2656
    %v2658 = vpop.f32.mrb[0].mxu0
    %v2659 = vadd.f32 %v2618, %v2658
    %v2660 = vpop.f32.mrb[0].mxu0
    %v2661 = vpop.f32.mrb[0].mxu0
    %2662 = vdwg.mxu0
    %2663 = vmatprep.subr.bf16.mxu0 %v2006
    %2664 = vmatpush1.bf16.msra.mxu0 %v2005
    %2665 = vmatprep.subr.bf16.mxu0 %v2010
    %2666 = vmatpush1.bf16.msra.mxu0 %v2009
    %2667 = vmatprep.subr.bf16.mxu0 %v2014
    %2668 = vmatpush1.bf16.msra.mxu0 %v2013
    %2669 = vmatprep.subr.bf16.mxu0 %v2018
    %2670 = vmatpush1.bf16.msra.mxu0 %v2017
    %2671 = vmatprep.subr.bf16.mxu0 %v2022
    %2672 = vmatpush1.bf16.msra.mxu0 %v2021
    %2673 = vmatprep.subr.bf16.mxu0 %v2026
    %2674 = vmatpush1.bf16.msra.mxu0 %v2025
    %2675 = vmatprep.subr.bf16.mxu0 %v2030
    %2676 = vmatpush1.bf16.msra.mxu0 %v2029
    %2677 = vmatprep.subr.bf16.mxu0 %v2034
    %2678 = vmatpush1.bf16.msra.mxu0 %v2033
    %2679 = vmatprep.subr.bf16.mxu0 %v2038
    %2680 = vmatpush1.bf16.msra.mxu0 %v2037
    %2681 = vmatprep.subr.bf16.mxu0 %v2042
    %2682 = vmatpush1.bf16.msra.mxu0 %v2041
    %2683 = vmatprep.subr.bf16.mxu0 %v2046
    %2684 = vmatpush1.bf16.msra.mxu0 %v2045
    %2685 = vmatprep.subr.bf16.mxu0 %v2050
    %2686 = vmatpush1.bf16.msra.mxu0 %v2049
    %2687 = vmatprep.subr.bf16.mxu0 %v2054
    %2688 = vmatpush1.bf16.msra.mxu0 %v2053
    %2689 = vmatprep.subr.bf16.mxu0 %v2058
    %2690 = vmatpush1.bf16.msra.mxu0 %v2057
    %2691 = vmatprep.subr.bf16.mxu0 %v2450
    %2692 = vmatpush1.bf16.msra.mxu0 %v2447
    %2693 = vmatprep.subr.bf16.mxu0 0
    %2694 = vmatpush1.bf16.msra.mxu0 0
    %2695 = vmatprep.mubr.bf16.mxu0 %v2443
    %2696 = vmatmul.mubr.bf16.gmra.mrb[0].mxu0 %v538
    %v2697 = vpop.f32.mrb[0].mxu0
    %v2698 = vadd.f32 %v2657, %v2697
    %v2699 = vpop.f32.mrb[0].mxu0
    %v2700 = vadd.f32 %v2659, %v2699
    %v2701 = vpop.f32.mrb[0].mxu0
    %v2702 = vpop.f32.mrb[0].mxu0
    %2703 = vdwg.mxu0
    %2704 = vmatprep.subr.bf16.mxu0 %v1688
    %2705 = vmatpush1.bf16.msra.mxu0 %v1687
    %2706 = vmatprep.subr.bf16.mxu0 %v1692
    %2707 = vmatpush1.bf16.msra.mxu0 %v1691
    %2708 = vmatprep.subr.bf16.mxu0 %v1696
    %2709 = vmatpush1.bf16.msra.mxu0 %v1695
    %2710 = vmatprep.subr.bf16.mxu0 %v1700
    %2711 = vmatpush1.bf16.msra.mxu0 %v1699
    %2712 = vmatprep.subr.bf16.mxu0 %v1704
    %2713 = vmatpush1.bf16.msra.mxu0 %v1703
    %2714 = vmatprep.subr.bf16.mxu0 %v1708
    %2715 = vmatpush1.bf16.msra.mxu0 %v1707
    %2716 = vmatprep.subr.bf16.mxu0 %v1712
    %2717 = vmatpush1.bf16.msra.mxu0 %v1711
    %2718 = vmatprep.subr.bf16.mxu0 %v1716
    %2719 = vmatpush1.bf16.msra.mxu0 %v1715
    %2720 = vmatprep.subr.bf16.mxu0 %v1720
    %2721 = vmatpush1.bf16.msra.mxu0 %v1719
    %2722 = vmatprep.subr.bf16.mxu0 %v1724
    %2723 = vmatpush1.bf16.msra.mxu0 %v1723
    %2724 = vmatprep.subr.bf16.mxu0 %v1728
    %2725 = vmatpush1.bf16.msra.mxu0 %v1727
    %2726 = vmatprep.subr.bf16.mxu0 %v1732
    %2727 = vmatpush1.bf16.msra.mxu0 %v1731
    %2728 = vmatprep.subr.bf16.mxu0 %v1736
    %2729 = vmatpush1.bf16.msra.mxu0 %v1735
    %2730 = vmatprep.subr.bf16.mxu0 %v1740
    %2731 = vmatpush1.bf16.msra.mxu0 %v1739
    %2732 = vmatprep.subr.bf16.mxu0 %v1744
    %2733 = vmatpush1.bf16.msra.mxu0 %v1743
    %2734 = vmatprep.subr.bf16.mxu0 %v1748
    %2735 = vmatpush1.bf16.msra.mxu0 %v1747
    %2736 = vmatprep.mubr.bf16.mxu0 %v494
    %2737 = vmatmul.mubr.bf16.gmra.mrb[0].mxu0 %v480
    %v2738 = vpop.f32.mrb[0].mxu0
    %v2739 = vadd.f32 %v421, %v2738
    %v2740 = vpop.f32.mrb[0].mxu0
    %v2741 = vadd.f32 %v425, %v2740
    %v2742 = vpop.f32.mrb[0].mxu0
    %v2743 = vpop.f32.mrb[0].mxu0
    %2744 = vdwg.mxu0
    %2745 = vmatprep.subr.bf16.mxu0 %v1752
    %2746 = vmatpush1.bf16.msra.mxu0 %v1751
    %2747 = vmatprep.subr.bf16.mxu0 %v1756
    %2748 = vmatpush1.bf16.msra.mxu0 %v1755
    %2749 = vmatprep.subr.bf16.mxu0 %v1760
    %2750 = vmatpush1.bf16.msra.mxu0 %v1759
    %2751 = vmatprep.subr.bf16.mxu0 %v1764
    %2752 = vmatpush1.bf16.msra.mxu0 %v1763
    %2753 = vmatprep.subr.bf16.mxu0 %v1768
    %2754 = vmatpush1.bf16.msra.mxu0 %v1767
    %2755 = vmatprep.subr.bf16.mxu0 %v1772
    %2756 = vmatpush1.bf16.msra.mxu0 %v1771
    %2757 = vmatprep.subr.bf16.mxu0 %v1776
    %2758 = vmatpush1.bf16.msra.mxu0 %v1775
    %2759 = vmatprep.subr.bf16.mxu0 %v1780
    %2760 = vmatpush1.bf16.msra.mxu0 %v1779
    %2761 = vmatprep.subr.bf16.mxu0 %v1784
    %2762 = vmatpush1.bf16.msra.mxu0 %v1783
    %2763 = vmatprep.subr.bf16.mxu0 %v1788
    %2764 = vmatpush1.bf16.msra.mxu0 %v1787
    %2765 = vmatprep.subr.bf16.mxu0 %v1792
    %2766 = vmatpush1.bf16.msra.mxu0 %v1791
    %2767 = vmatprep.subr.bf16.mxu0 %v1796
    %2768 = vmatpush1.bf16.msra.mxu0 %v1795
    %2769 = vmatprep.subr.bf16.mxu0 %v1800
    %2770 = vmatpush1.bf16.msra.mxu0 %v1799
    %2771 = vmatprep.subr.bf16.mxu0 %v1804
    %2772 = vmatpush1.bf16.msra.mxu0 %v1803
    %2773 = vmatprep.subr.bf16.mxu0 %v1808
    %2774 = vmatpush1.bf16.msra.mxu0 %v1807
    %2775 = vmatprep.subr.bf16.mxu0 %v1812
    %2776 = vmatpush1.bf16.msra.mxu0 %v1811
    %2777 = vmatprep.mubr.bf16.mxu0 %v504
    %2778 = vmatmul.mubr.bf16.gmra.mrb[0].mxu0 %v502
    %v2779 = vpop.f32.mrb[0].mxu0
    %v2780 = vadd.f32 %v2739, %v2779
    %v2781 = vpop.f32.mrb[0].mxu0
    %v2782 = vadd.f32 %v2741, %v2781
    %v2783 = vpop.f32.mrb[0].mxu0
    %v2784 = vpop.f32.mrb[0].mxu0
    %2785 = vdwg.mxu0
    %2786 = vmatprep.subr.bf16.mxu0 %v1816
    %2787 = vmatpush1.bf16.msra.mxu0 %v1815
    %2788 = vmatprep.subr.bf16.mxu0 %v1820
    %2789 = vmatpush1.bf16.msra.mxu0 %v1819
    %2790 = vmatprep.subr.bf16.mxu0 %v1824
    %2791 = vmatpush1.bf16.msra.mxu0 %v1823
    %2792 = vmatprep.subr.bf16.mxu0 %v1828
    %2793 = vmatpush1.bf16.msra.mxu0 %v1827
    %2794 = vmatprep.subr.bf16.mxu0 %v1832
    %2795 = vmatpush1.bf16.msra.mxu0 %v1831
    %2796 = vmatprep.subr.bf16.mxu0 %v1836
    %2797 = vmatpush1.bf16.msra.mxu0 %v1835
    %2798 = vmatprep.subr.bf16.mxu0 %v1840
    %2799 = vmatpush1.bf16.msra.mxu0 %v1839
    %2800 = vmatprep.subr.bf16.mxu0 %v1844
    %2801 = vmatpush1.bf16.msra.mxu0 %v1843
    %2802 = vmatprep.subr.bf16.mxu0 %v1848
    %2803 = vmatpush1.bf16.msra.mxu0 %v1847
    %2804 = vmatprep.subr.bf16.mxu0 %v1852
    %2805 = vmatpush1.bf16.msra.mxu0 %v1851
    %2806 = vmatprep.subr.bf16.mxu0 %v1856
    %2807 = vmatpush1.bf16.msra.mxu0 %v1855
    %2808 = vmatprep.subr.bf16.mxu0 %v1860
    %2809 = vmatpush1.bf16.msra.mxu0 %v1859
    %2810 = vmatprep.subr.bf16.mxu0 %v1864
    %2811 = vmatpush1.bf16.msra.mxu0 %v1863
    %2812 = vmatprep.subr.bf16.mxu0 %v1868
    %2813 = vmatpush1.bf16.msra.mxu0 %v1867
    %2814 = vmatprep.subr.bf16.mxu0 %v1872
    %2815 = vmatpush1.bf16.msra.mxu0 %v1871
    %2816 = vmatprep.subr.bf16.mxu0 %v1876
    %2817 = vmatpush1.bf16.msra.mxu0 %v1875
    %2818 = vmatprep.mubr.bf16.mxu0 %v501
    %2819 = vmatmul.mubr.bf16.gmra.mrb[0].mxu0 %v487
    %v2820 = vpop.f32.mrb[0].mxu0
    %v2821 = vadd.f32 %v2780, %v2820
    %v2822 = vpop.f32.mrb[0].mxu0
    %v2823 = vadd.f32 %v2782, %v2822
    %v2824 = vpop.f32.mrb[0].mxu0
    %v2825 = vpop.f32.mrb[0].mxu0
    %2826 = vdwg.mxu0
    %2827 = vmatprep.subr.bf16.mxu0 %v1880
    %2828 = vmatpush1.bf16.msra.mxu0 %v1879
    %2829 = vmatprep.subr.bf16.mxu0 %v1884
    %2830 = vmatpush1.bf16.msra.mxu0 %v1883
    %2831 = vmatprep.subr.bf16.mxu0 %v1888
    %2832 = vmatpush1.bf16.msra.mxu0 %v1887
    %2833 = vmatprep.subr.bf16.mxu0 %v1892
    %2834 = vmatpush1.bf16.msra.mxu0 %v1891
    %2835 = vmatprep.subr.bf16.mxu0 %v1896
    %2836 = vmatpush1.bf16.msra.mxu0 %v1895
    %2837 = vmatprep.subr.bf16.mxu0 %v1900
    %2838 = vmatpush1.bf16.msra.mxu0 %v1899
    %2839 = vmatprep.subr.bf16.mxu0 %v1904
    %2840 = vmatpush1.bf16.msra.mxu0 %v1903
    %2841 = vmatprep.subr.bf16.mxu0 %v1908
    %2842 = vmatpush1.bf16.msra.mxu0 %v1907
    %2843 = vmatprep.subr.bf16.mxu0 %v1912
    %2844 = vmatpush1.bf16.msra.mxu0 %v1911
    %2845 = vmatprep.subr.bf16.mxu0 %v1916
    %2846 = vmatpush1.bf16.msra.mxu0 %v1915
    %2847 = vmatprep.subr.bf16.mxu0 %v1920
    %2848 = vmatpush1.bf16.msra.mxu0 %v1919
    %2849 = vmatprep.subr.bf16.mxu0 %v1924
    %2850 = vmatpush1.bf16.msra.mxu0 %v1923
    %2851 = vmatprep.subr.bf16.mxu0 %v1928
    %2852 = vmatpush1.bf16.msra.mxu0 %v1927
    %2853 = vmatprep.subr.bf16.mxu0 %v1932
    %2854 = vmatpush1.bf16.msra.mxu0 %v1931
    %2855 = vmatprep.subr.bf16.mxu0 %v1936
    %2856 = vmatpush1.bf16.msra.mxu0 %v1935
    %2857 = vmatprep.subr.bf16.mxu0 %v1940
    %2858 = vmatpush1.bf16.msra.mxu0 %v1939
    %2859 = vmatprep.mubr.bf16.mxu0 %v505
    %2860 = vmatmul.mubr.bf16.gmra.mrb[0].mxu0 %v503
    %v2861 = vpop.f32.mrb[0].mxu0
    %v2862 = vadd.f32 %v2821, %v2861
    %v2863 = vpop.f32.mrb[0].mxu0
    %v2864 = vadd.f32 %v2823, %v2863
    %v2865 = vpop.f32.mrb[0].mxu0
    %v2866 = vpop.f32.mrb[0].mxu0
    %2867 = vdwg.mxu0
    %2868 = vmatprep.subr.bf16.mxu0 %v1944
    %2869 = vmatpush1.bf16.msra.mxu0 %v1943
    %2870 = vmatprep.subr.bf16.mxu0 %v1948
    %2871 = vmatpush1.bf16.msra.mxu0 %v1947
    %2872 = vmatprep.subr.bf16.mxu0 %v1952
    %2873 = vmatpush1.bf16.msra.mxu0 %v1951
    %2874 = vmatprep.subr.bf16.mxu0 %v1956
    %2875 = vmatpush1.bf16.msra.mxu0 %v1955
    %2876 = vmatprep.subr.bf16.mxu0 %v1960
    %2877 = vmatpush1.bf16.msra.mxu0 %v1959
    %2878 = vmatprep.subr.bf16.mxu0 %v1964
    %2879 = vmatpush1.bf16.msra.mxu0 %v1963
    %2880 = vmatprep.subr.bf16.mxu0 %v1968
    %2881 = vmatpush1.bf16.msra.mxu0 %v1967
    %2882 = vmatprep.subr.bf16.mxu0 %v1972
    %2883 = vmatpush1.bf16.msra.mxu0 %v1971
    %2884 = vmatprep.subr.bf16.mxu0 %v1976
    %2885 = vmatpush1.bf16.msra.mxu0 %v1975
    %2886 = vmatprep.subr.bf16.mxu0 %v1980
    %2887 = vmatpush1.bf16.msra.mxu0 %v1979
    %2888 = vmatprep.subr.bf16.mxu0 %v1984
    %2889 = vmatpush1.bf16.msra.mxu0 %v1983
    %2890 = vmatprep.subr.bf16.mxu0 %v1988
    %2891 = vmatpush1.bf16.msra.mxu0 %v1987
    %2892 = vmatprep.subr.bf16.mxu0 %v1992
    %2893 = vmatpush1.bf16.msra.mxu0 %v1991
    %2894 = vmatprep.subr.bf16.mxu0 %v1996
    %2895 = vmatpush1.bf16.msra.mxu0 %v1995
    %2896 = vmatprep.subr.bf16.mxu0 %v2000
    %2897 = vmatpush1.bf16.msra.mxu0 %v1999
    %2898 = vmatprep.subr.bf16.mxu0 %v2004
    %2899 = vmatpush1.bf16.msra.mxu0 %v2003
    %2900 = vmatprep.mubr.bf16.mxu0 %v537
    %2901 = vmatmul.mubr.bf16.gmra.mrb[0].mxu0 %v530
    %v2902 = vpop.f32.mrb[0].mxu0
    %v2903 = vadd.f32 %v2862, %v2902
    %v2904 = vpop.f32.mrb[0].mxu0
    %v2905 = vadd.f32 %v2864, %v2904
    %v2906 = vpop.f32.mrb[0].mxu0
    %v2907 = vpop.f32.mrb[0].mxu0
    %2908 = vdwg.mxu0
    %2909 = vmatprep.subr.bf16.mxu0 %v2008
    %2910 = vmatpush1.bf16.msra.mxu0 %v2007
    %2911 = vmatprep.subr.bf16.mxu0 %v2012
    %2912 = vmatpush1.bf16.msra.mxu0 %v2011
    %2913 = vmatprep.subr.bf16.mxu0 %v2016
    %2914 = vmatpush1.bf16.msra.mxu0 %v2015
    %2915 = vmatprep.subr.bf16.mxu0 %v2020
    %2916 = vmatpush1.bf16.msra.mxu0 %v2019
    %2917 = vmatprep.subr.bf16.mxu0 %v2024
    %2918 = vmatpush1.bf16.msra.mxu0 %v2023
    %2919 = vmatprep.subr.bf16.mxu0 %v2028
    %2920 = vmatpush1.bf16.msra.mxu0 %v2027
    %2921 = vmatprep.subr.bf16.mxu0 %v2032
    %2922 = vmatpush1.bf16.msra.mxu0 %v2031
    %2923 = vmatprep.subr.bf16.mxu0 %v2036
    %2924 = vmatpush1.bf16.msra.mxu0 %v2035
    %2925 = vmatprep.subr.bf16.mxu0 %v2040
    %2926 = vmatpush1.bf16.msra.mxu0 %v2039
    %2927 = vmatprep.subr.bf16.mxu0 %v2044
    %2928 = vmatpush1.bf16.msra.mxu0 %v2043
    %2929 = vmatprep.subr.bf16.mxu0 %v2048
    %2930 = vmatpush1.bf16.msra.mxu0 %v2047
    %2931 = vmatprep.subr.bf16.mxu0 %v2052
    %2932 = vmatpush1.bf16.msra.mxu0 %v2051
    %2933 = vmatprep.subr.bf16.mxu0 %v2056
    %2934 = vmatpush1.bf16.msra.mxu0 %v2055
    %2935 = vmatprep.subr.bf16.mxu0 %v2060
    %2936 = vmatpush1.bf16.msra.mxu0 %v2059
    %2937 = vmatprep.subr.bf16.mxu0 %v2456
    %2938 = vmatpush1.bf16.msra.mxu0 %v2453
    %2939 = vmatprep.subr.bf16.mxu0 0
    %2940 = vmatpush1.bf16.msra.mxu0 0
    %2941 = vmatprep.mubr.bf16.mxu0 %v2443
    %2942 = vmatmul.mubr.bf16.gmra.mrb[0].mxu0 %v538
    %v2943 = vpop.f32.mrb[0].mxu0
    %v2944 = vadd.f32 %v2903, %v2943
    %v2945 = vpop.f32.mrb[0].mxu0
    %v2946 = vadd.f32 %v2905, %v2945
    %v2947 = vpop.f32.mrb[0].mxu0
    %v2948 = vpop.f32.mrb[0].mxu0
    %2949 = vdwg.mxu0
    %v2950 = vmax.f32 %v2698, 0.0
    %v2951 = vmax.f32 %v2700, 0.0
    %v2952 = vmax.f32 %v2944, 0.0
    %v2953 = vmax.f32 %v2946, 0.0
    %v2954 = vpack.c.bf16 %v2950, %v2950
    %v2955 = vpack.c.bf16 %v2951, %v2951
    %v2956 = vpack.c.bf16 %v2952, %v2952
    %v2957 = vpack.c.bf16 %v2953, %v2953
    %v2958 = vld [vmem:[%s3] sm:$0xf]
    %v2959 = vld [vmem:[%s3 + $0x4] sm:$0xf]
    %v2960 = vld [vmem:[%s3 + $0x8] sm:$0xf]
    %v2961 = vld [vmem:[%s3 + $0xc] sm:$0xf]
    %v2962 = vld [vmem:[%s3 + $0x10] sm:$0xf]
    %v2963 = vld [vmem:[%s3 + $0x14] sm:$0xf]
    %v2964 = vld [vmem:[%s3 + $0x18] sm:$0xf]
    %v2965 = vld [vmem:[%s3 + $0x1c] sm:$0xf]
    %v2966 = vld [vmem:[%s3 + $0x20] sm:$0xf]
    %v2967 = vld [vmem:[%s3 + $0x24] sm:$0xf]
    %v2968 = vld [vmem:[%s3 + $0x28] sm:$0xf]
    %v2969 = vld [vmem:[%s3 + $0x2c] sm:$0xf]
    %v2970 = vld [vmem:[%s3 + $0x30] sm:$0xf]
    %v2971 = vld [vmem:[%s3 + $0x34] sm:$0xf]
    %v2972 = vld [vmem:[%s3 + $0x38] sm:$0xf]
    %v2973 = vld [vmem:[%s3 + $0x3c] sm:$0xf]
    %v2974 = vld [vmem:[%s3 + $0x40] sm:$0xf]
    %v2975 = vld [vmem:[%s3 + $0x44] sm:$0xf]
    %v2976 = vld [vmem:[%s3 + $0x48] sm:$0xf]
    %v2977 = vld [vmem:[%s3 + $0x4c] sm:$0xf]
    %v2978 = vld [vmem:[%s3 + $0x50] sm:$0xf]
    %v2979 = vld [vmem:[%s3 + $0x54] sm:$0xf]
    %v2980 = vld [vmem:[%s3 + $0x58] sm:$0xf]
    %v2981 = vld [vmem:[%s3 + $0x5c] sm:$0xf]
    %v2982 = vld [vmem:[%s3 + $0x60] sm:$0xf]
    %v2983 = vld [vmem:[%s3 + $0x64] sm:$0xf]
    %v2984 = vld [vmem:[%s3 + $0x68] sm:$0xf]
    %v2985 = vld [vmem:[%s3 + $0x6c] sm:$0xf]
    %v2986 = vld [vmem:[%s3 + $0x70] sm:$0xf]
    %v2987 = vld [vmem:[%s3 + $0x74] sm:$0xf]
    %v2988 = vld [vmem:[%s3 + $0x78] sm:$0xf]
    %v2989 = vld [vmem:[%s3 + $0x7c] sm:$0xf]
    %v2990 = vld [vmem:[%s3 + $0x80] sm:$0xf]
    %v2991 = vld [vmem:[%s3 + $0x84] sm:$0xf]
    %v2992 = vld [vmem:[%s3 + $0x88] sm:$0xf]
    %v2993 = vld [vmem:[%s3 + $0x8c] sm:$0xf]
    %v2994 = vld [vmem:[%s3 + $0x90] sm:$0xf]
    %v2995 = vld [vmem:[%s3 + $0x94] sm:$0xf]
    %v2996 = vld [vmem:[%s3 + $0x98] sm:$0xf]
    %v2997 = vld [vmem:[%s3 + $0x9c] sm:$0xf]
    %v2998 = vld [vmem:[%s3 + $0xa0] sm:$0xf]
    %v2999 = vld [vmem:[%s3 + $0xa4] sm:$0xf]
    %v3000 = vld [vmem:[%s3 + $0xa8] sm:$0xf]
    %v3001 = vld [vmem:[%s3 + $0xac] sm:$0xf]
    %v3002 = vld [vmem:[%s3 + $0xb0] sm:$0xf]
    %v3003 = vld [vmem:[%s3 + $0xb4] sm:$0xf]
    %v3004 = vld [vmem:[%s3 + $0xb8] sm:$0xf]
    %v3005 = vld [vmem:[%s3 + $0xbc] sm:$0xf]
    %v3006 = vld [vmem:[%s3 + $0xc0] sm:$0xf]
    %v3007 = vld [vmem:[%s3 + $0xc4] sm:$0xf]
    %v3008 = vld [vmem:[%s3 + $0xc8] sm:$0xf]
    %v3009 = vld [vmem:[%s3 + $0xcc] sm:$0xf]
    %v3010 = vld [vmem:[%s3 + $0xd0] sm:$0xf]
    %v3011 = vld [vmem:[%s3 + $0xd4] sm:$0xf]
    %v3012 = vld [vmem:[%s3 + $0xd8] sm:$0xf]
    %v3013 = vld [vmem:[%s3 + $0xdc] sm:$0xf]
    %v3014 = vld [vmem:[%s3 + $0xe0] sm:$0xf]
    %v3015 = vld [vmem:[%s3 + $0xe4] sm:$0xf]
    %v3016 = vld [vmem:[%s3 + $0xe8] sm:$0xf]
    %v3017 = vld [vmem:[%s3 + $0xec] sm:$0xf]
    %v3018 = vld [vmem:[%s3 + $0xf0] sm:$0xf]
    %v3019 = vld [vmem:[%s3 + $0xf4] sm:$0xf]
    %v3020 = vld [vmem:[%s3 + $0xf8] sm:$0xf]
    %v3021 = vld [vmem:[%s3 + $0xfc] sm:$0xf]
    %v3022 = vld [vmem:[%s4] sm:$0x1]
    %v3024 = vlaneseq
    %v3025 = vshrl.u32 %v3024, 7
    %v3026 = vsub.s32 0, %v3025
    %v3027 = vrot.slane %v3022, %v3026
    %v3093 = vunpack.c.l.b16 %v2958
    %v3094 = vunpack.c.l.b16 %v2959
    %v3095 = vunpack.c.l.b16 %v2960
    %v3096 = vunpack.c.l.b16 %v2961
    %v3097 = vunpack.c.l.b16 %v2962
    %v3098 = vunpack.c.l.b16 %v2963
    %v3099 = vunpack.c.l.b16 %v2964
    %v3100 = vunpack.c.l.b16 %v2965
    %v3101 = vunpack.c.l.b16 %v2966
    %v3102 = vunpack.c.l.b16 %v2967
    %v3103 = vunpack.c.l.b16 %v2968
    %v3104 = vunpack.c.l.b16 %v2969
    %v3105 = vunpack.c.l.b16 %v2970
    %v3106 = vunpack.c.l.b16 %v2971
    %v3107 = vunpack.c.l.b16 %v2972
    %v3108 = vunpack.c.l.b16 %v2973
    %v3109 = vunpack.c.l.b16 %v2974
    %v3110 = vunpack.c.l.b16 %v2975
    %v3111 = vunpack.c.l.b16 %v2976
    %v3112 = vunpack.c.l.b16 %v2977
    %v3113 = vunpack.c.l.b16 %v2978
    %v3114 = vunpack.c.l.b16 %v2979
    %v3115 = vunpack.c.l.b16 %v2980
    %v3116 = vunpack.c.l.b16 %v2981
    %v3117 = vunpack.c.l.b16 %v2982
    %v3118 = vunpack.c.l.b16 %v2983
    %v3119 = vunpack.c.l.b16 %v2984
    %v3120 = vunpack.c.l.b16 %v2985
    %v3121 = vunpack.c.l.b16 %v2986
    %v3122 = vunpack.c.l.b16 %v2987
    %v3123 = vunpack.c.l.b16 %v2988
    %v3124 = vunpack.c.l.b16 %v2989
    %v3125 = vunpack.c.l.b16 %v2990
    %v3126 = vunpack.c.l.b16 %v2991
    %v3127 = vunpack.c.l.b16 %v2992
    %v3128 = vunpack.c.l.b16 %v2993
    %v3129 = vunpack.c.l.b16 %v2994
    %v3130 = vunpack.c.l.b16 %v2995
    %v3131 = vunpack.c.l.b16 %v2996
    %v3132 = vunpack.c.l.b16 %v2997
    %v3133 = vunpack.c.l.b16 %v2998
    %v3134 = vunpack.c.l.b16 %v2999
    %v3135 = vunpack.c.l.b16 %v3000
    %v3136 = vunpack.c.l.b16 %v3001
    %v3137 = vunpack.c.l.b16 %v3002
    %v3138 = vunpack.c.l.b16 %v3003
    %v3139 = vunpack.c.l.b16 %v3004
    %v3140 = vunpack.c.l.b16 %v3005
    %v3141 = vunpack.c.l.b16 %v3006
    %v3142 = vunpack.c.l.b16 %v3007
    %v3143 = vunpack.c.l.b16 %v3008
    %v3144 = vunpack.c.l.b16 %v3009
    %v3145 = vunpack.c.l.b16 %v3010
    %v3146 = vunpack.c.l.b16 %v3011
    %v3147 = vunpack.c.l.b16 %v3012
    %v3148 = vunpack.c.l.b16 %v3013
    %v3149 = vunpack.c.l.b16 %v3014
    %v3150 = vunpack.c.l.b16 %v3015
    %v3151 = vunpack.c.l.b16 %v3016
    %v3152 = vunpack.c.l.b16 %v3017
    %v3153 = vunpack.c.l.b16 %v3018
    %v3154 = vunpack.c.l.b16 %v3019
    %v3155 = vunpack.c.l.b16 %v3020
    %v3156 = vunpack.c.l.b16 %v3021
    %v3157 = vpack.c.b16 %v3094, %v3093
    %v3158 = vpack.c.b16 %v3096, %v3095
    %v3159 = vpack.c.b16 %v3098, %v3097
    %v3160 = vpack.c.b16 %v3100, %v3099
    %v3161 = vpack.c.b16 %v3102, %v3101
    %v3162 = vpack.c.b16 %v3104, %v3103
    %v3163 = vpack.c.b16 %v3106, %v3105
    %v3164 = vpack.c.b16 %v3108, %v3107
    %v3165 = vpack.c.b16 %v3110, %v3109
    %v3166 = vpack.c.b16 %v3112, %v3111
    %v3167 = vpack.c.b16 %v3114, %v3113
    %v3168 = vpack.c.b16 %v3116, %v3115
    %v3169 = vpack.c.b16 %v3118, %v3117
    %v3170 = vpack.c.b16 %v3120, %v3119
    %v3171 = vpack.c.b16 %v3122, %v3121
    %v3172 = vpack.c.b16 %v3124, %v3123
    %v3173 = vpack.c.b16 %v3126, %v3125
    %v3174 = vpack.c.b16 %v3128, %v3127
    %v3175 = vpack.c.b16 %v3130, %v3129
    %v3176 = vpack.c.b16 %v3132, %v3131
    %v3177 = vpack.c.b16 %v3134, %v3133
    %v3178 = vpack.c.b16 %v3136, %v3135
    %v3179 = vpack.c.b16 %v3138, %v3137
    %v3180 = vpack.c.b16 %v3140, %v3139
    %v3181 = vpack.c.b16 %v3142, %v3141
    %v3182 = vpack.c.b16 %v3144, %v3143
    %v3183 = vpack.c.b16 %v3146, %v3145
    %v3184 = vpack.c.b16 %v3148, %v3147
    %v3185 = vpack.c.b16 %v3150, %v3149
    %v3186 = vpack.c.b16 %v3152, %v3151
    %v3187 = vpack.c.b16 %v3154, %v3153
    %v3188 = vpack.c.b16 %v3156, %v3155
    %3221 = vmatprep.subr.bf16.mxu0 0
    %3222 = vmatpush1.bf16.msra.mxu0 %v3157
    %3223 = vmatprep.subr.bf16.mxu0 0
    %3224 = vmatpush1.bf16.msra.mxu0 %v3158
    %3225 = vmatprep.subr.bf16.mxu0 0
    %3226 = vmatpush1.bf16.msra.mxu0 %v3159
    %3227 = vmatprep.subr.bf16.mxu0 0
    %3228 = vmatpush1.bf16.msra.mxu0 %v3160
    %3229 = vmatprep.subr.bf16.mxu0 0
    %3230 = vmatpush1.bf16.msra.mxu0 %v3161
    %3231 = vmatprep.subr.bf16.mxu0 0
    %3232 = vmatpush1.bf16.msra.mxu0 %v3162
    %3233 = vmatprep.subr.bf16.mxu0 0
    %3234 = vmatpush1.bf16.msra.mxu0 %v3163
    %3235 = vmatprep.subr.bf16.mxu0 0
    %3236 = vmatpush1.bf16.msra.mxu0 %v3164
    %3237 = vmatprep.subr.bf16.mxu0 0
    %3238 = vmatpush1.bf16.msra.mxu0 %v3165
    %3239 = vmatprep.subr.bf16.mxu0 0
    %3240 = vmatpush1.bf16.msra.mxu0 %v3166
    %3241 = vmatprep.subr.bf16.mxu0 0
    %3242 = vmatpush1.bf16.msra.mxu0 %v3167
    %3243 = vmatprep.subr.bf16.mxu0 0
    %3244 = vmatpush1.bf16.msra.mxu0 %v3168
    %3245 = vmatprep.subr.bf16.mxu0 0
    %3246 = vmatpush1.bf16.msra.mxu0 %v3169
    %3247 = vmatprep.subr.bf16.mxu0 0
    %3248 = vmatpush1.bf16.msra.mxu0 %v3170
    %3249 = vmatprep.subr.bf16.mxu0 0
    %3250 = vmatpush1.bf16.msra.mxu0 %v3171
    %3251 = vmatprep.subr.bf16.mxu0 0
    %3252 = vmatpush1.bf16.msra.mxu0 %v3172
    %3253 = vmatprep.mubr.bf16.mxu0 %v2955
    %3254 = vmatmul.mubr.bf16.gmra.mrb[0].mxu0 %v2954
    %v3255 = vpop.f32.mrb[0].mxu0
    %v3256 = vadd.f32 %v3027, %v3255
    %v3257 = vpop.f32.mrb[0].mxu0
    %v3258 = vpop.f32.mrb[0].mxu0
    %v3259 = vpop.f32.mrb[0].mxu0
    %3260 = vdwg.mxu0
    %3261 = vmatprep.subr.bf16.mxu0 0
    %3262 = vmatpush1.bf16.msra.mxu0 %v3173
    %3263 = vmatprep.subr.bf16.mxu0 0
    %3264 = vmatpush1.bf16.msra.mxu0 %v3174
    %3265 = vmatprep.subr.bf16.mxu0 0
    %3266 = vmatpush1.bf16.msra.mxu0 %v3175
    %3267 = vmatprep.subr.bf16.mxu0 0
    %3268 = vmatpush1.bf16.msra.mxu0 %v3176
    %3269 = vmatprep.subr.bf16.mxu0 0
    %3270 = vmatpush1.bf16.msra.mxu0 %v3177
    %3271 = vmatprep.subr.bf16.mxu0 0
    %3272 = vmatpush1.bf16.msra.mxu0 %v3178
    %3273 = vmatprep.subr.bf16.mxu0 0
    %3274 = vmatpush1.bf16.msra.mxu0 %v3179
    %3275 = vmatprep.subr.bf16.mxu0 0
    %3276 = vmatpush1.bf16.msra.mxu0 %v3180
    %3277 = vmatprep.subr.bf16.mxu0 0
    %3278 = vmatpush1.bf16.msra.mxu0 %v3181
    %3279 = vmatprep.subr.bf16.mxu0 0
    %3280 = vmatpush1.bf16.msra.mxu0 %v3182
    %3281 = vmatprep.subr.bf16.mxu0 0
    %3282 = vmatpush1.bf16.msra.mxu0 %v3183
    %3283 = vmatprep.subr.bf16.mxu0 0
    %3284 = vmatpush1.bf16.msra.mxu0 %v3184
    %3285 = vmatprep.subr.bf16.mxu0 0
    %3286 = vmatpush1.bf16.msra.mxu0 %v3185
    %3287 = vmatprep.subr.bf16.mxu0 0
    %3288 = vmatpush1.bf16.msra.mxu0 %v3186
    %3289 = vmatprep.subr.bf16.mxu0 0
    %3290 = vmatpush1.bf16.msra.mxu0 %v3187
    %3291 = vmatprep.subr.bf16.mxu0 0
    %3292 = vmatpush1.bf16.msra.mxu0 %v3188
    %3293 = vmatprep.mubr.bf16.mxu0 %v2957
    %3294 = vmatmul.mubr.bf16.gmra.mrb[0].mxu0 %v2956
    %v3295 = vpop.f32.mrb[0].mxu0
    %v3296 = vadd.f32 %v3256, %v3295
    %v3297 = vpop.f32.mrb[0].mxu0
    %v3298 = vpop.f32.mrb[0].mxu0
    %v3299 = vpop.f32.mrb[0].mxu0
    %3300 = vdwg.mxu0
    %v3301 = vmul.f32 %v3296, 0.05
    %vm3302 = vcmask 80896
    %v3303 = vsel %vm3302, %v3301, -inf
    %3304 = vmax.xlane.f32.xlu0 %v3303
    %v3305 = vpop.xlane.xlu0 %3304
    %v3306 = vsub.f32 %v3301, %v3305
    %v3307 = vmul.f32 %v3306, 1.442695
    %v3308 = vpow.pop %v3307
    %v3309 = vsel %vm3302, %v3308, 0.0
    %3310 = vadd.xlane.f32.xlu0 %v3309
    %v3311 = vpop.xlane.xlu0 %3310
    %v3312 = vlog2.pop %v3311
    %v3313 = vmul.f32 %v3312, 0.6931472
    %v3314 = vsub.f32 %v3306, %v3313
    %3315 = vst.msk [vmem:[#allocation2] sm:$0xff] %vm3302, %v3314
    // Predicated region
    $region22: #{net_distillation_forward.5} parent=1 // pred_check
      _
    $region23: #{net_distillation_forward.5} parent=1 // pred_check_branch
      %3317 = sbr.rel (0) target = $region25
    $region24: #{net_distillation_forward.5} parent=1 // pred_region
      %s3319 = ssub.s32 128, 32
      %3320 = vsyncadd [#allocation3], %s3319
      %s3321 = sshll.u32 [#allocation2], 4
      %s3322 = int_to_ptr.vmem [resolvable:$true] %s3321
      %3327 = dma.vmem_to_hbm [thread:$0]  %s3322, 32, %s5, [#allocation3], 32, 32, 2
    $region25: #{net_distillation_forward.5} parent=1 // pred_fallthru
      _
    // Predicated region
    $region26: #{net_distillation_forward.5} parent=1 // pred_check
      _
    $region27: #{net_distillation_forward.5} parent=1 // pred_check_branch
      %3329 = sbr.rel (0) target = $region29
    $region28: #{net_distillation_forward.5} parent=1 // pred_region
      %3330 = dma.done [#allocation3], 128
    $region29: #{net_distillation_forward.5} parent=1 // pred_fallthru
      _
    %3331 = vsyncpa [#allocation3], 1

</llo_original>
